<compile_context>
chip_gen: v5e
topology: v5e:2x2
jax: 0.10.0
libtpu: 0.0.40
codegen_flags: <defaults>
</compile_context>

<pallas_src>
import math
import functools

import jax
import jax.numpy as jnp
from jax.experimental import pallas as pl
from jax.experimental.pallas import tpu as pltpu

LANE = 128


def _pad128(n):
    return ((n + LANE - 1) // LANE) * LANE


def _layernorm(v, w, b, eps=1e-5):
    # fused statistics: sum(x) and sum(x^2) in one pass, var = E[x^2]-E[x]^2
    mu = jnp.mean(v, axis=-1, keepdims=True)
    ms = jnp.mean(v * v, axis=-1, keepdims=True)
    var = jnp.maximum(ms - mu * mu, 0.0)
    return (v - mu) * jax.lax.rsqrt(var + eps) * w + b


def strip_offsets(E, HE):
    # layout of the packed per-layer (1, K) f32 strip of small tensors
    return {
        "ln1_w": (0 * E, E), "ln1_b": (1 * E, E),
        "ln2_w": (2 * E, E), "ln2_b": (3 * E, E),
        "lv_b":  (4 * E, E), "ff2_b": (5 * E, E),
        "qkv_b": (6 * E, 3 * HE),
        "ff1_b": (6 * E + 3 * HE, 4 * E),
        "_total": 10 * E + 3 * HE,
    }


# ----------------------------------------------------------------------------
# Kernel 1: folded (conv ∘ patchEmb) matmul + positional embedding
# ----------------------------------------------------------------------------
def _patch_embed_kernel(p_ref, w_ref, b_ref, pos_ref, out_ref):
    h = jnp.dot(p_ref[...], w_ref[...], preferred_element_type=jnp.float32)
    B, S, E = out_ref.shape
    out_ref[...] = h.reshape(B, S, E) + b_ref[...] + pos_ref[...]


def patch_embed(patches_pad, w_emb, b_emb, pos, *, B, S, E):
    return pl.pallas_call(
        _patch_embed_kernel,
        out_shape=jax.ShapeDtypeStruct((B, S, E), jnp.float32),
    )(patches_pad, w_emb, b_emb, pos)


# ----------------------------------------------------------------------------
# Kernel 2: L x DiTBlock + final LayerNorm + l2p   (grid = (batch_tiles, L))
# ----------------------------------------------------------------------------
def make_dit_blocks_kernel(bt, S, E, H, L, OUTP):
    HE = H * E
    rows = bt * S
    off = strip_offsets(E, HE)
    scale = 1.0 / math.sqrt(float(S))     # matches the reference repo (seq-len scale)
    bf16 = jnp.bfloat16

    def kernel(h0_ref, mods_ref, strip_ref, qkv_w_ref, lv_w_ref,
               ff1_w_ref, ff2_w_ref, lnf_ref, l2p_w_ref, l2p_b_ref,
               out_ref, act_ref):
        l = pl.program_id(1)

        def sl(name):                      # (1, n) slice of the packed bias strip
            o, n = off[name]
            return strip_ref[0, :, o:o + n]

        @pl.when(l == 0)
        def _():
            act_ref[...] = h0_ref[...]                            # (bt, S, E) f32

        x = act_ref[...]                                          # (bt, S, E) f32

        # hoisted adaLN modulations for this (layer, batch-tile)
        mods = mods_ref[...].reshape(bt, 6, E)                    # f32
        g1 = mods[:, 0][:, None, :]
        b1 = mods[:, 1][:, None, :]
        a1 = mods[:, 2][:, None, :]
        g2 = mods[:, 3][:, None, :]
        b2 = mods[:, 4][:, None, :]
        a2 = mods[:, 5][:, None, :]

        # ---- attention branch ------------------------------------------------
        y = _layernorm(x, sl("ln1_w"), sl("ln1_b"))
        y = y * (1.0 + g1) + b1
        qkv = jnp.dot(y.reshape(rows, E).astype(bf16), qkv_w_ref[0],
                      preferred_element_type=jnp.float32)
        qkv = qkv + sl("qkv_b")                                   # (rows, 3HE) f32

        attn = jnp.zeros((rows, E), jnp.float32)
        for h in range(H):   # static unroll; per-head result is consumed immediately
            qh = qkv[:, h * E:(h + 1) * E].reshape(bt, S, E).astype(bf16)
            kh = qkv[:, HE + h * E:HE + (h + 1) * E].reshape(bt, S, E).astype(bf16)
            vh = qkv[:, 2 * HE + h * E:2 * HE + (h + 1) * E].reshape(bt, S, E).astype(bf16)
            s = jnp.einsum('bqe,bke->bqk', qh, kh,
                           preferred_element_type=jnp.float32) * scale
            s = s - jnp.max(s, axis=-1, keepdims=True)
            p = jnp.exp(s)
            p = p * pl.reciprocal(jnp.sum(p, axis=-1, keepdims=True), approx=True)
            oh = jnp.einsum('bqk,bke->bqe', p.astype(bf16), vh,
                            preferred_element_type=jnp.float32)   # (bt, S, E)
            # accumulating output projection -> only `attn` stays live
            attn = attn + jnp.dot(oh.reshape(rows, E).astype(bf16),
                                  lv_w_ref[0, h * E:(h + 1) * E, :],
                                  preferred_element_type=jnp.float32)
        attn = attn + sl("lv_b")
        x = x + attn.reshape(bt, S, E) * a1

        # ---- feed-forward branch ----------------------------------------------
        z = _layernorm(x, sl("ln2_w"), sl("ln2_b"))
        z = z * (1.0 + g2) + b2
        z = jnp.dot(z.reshape(rows, E).astype(bf16), ff1_w_ref[0],
                    preferred_element_type=jnp.float32) + sl("ff1_b")
        z = jnp.maximum(z, 0.0)
        z = jnp.dot(z.astype(bf16), ff2_w_ref[0],
                    preferred_element_type=jnp.float32) + sl("ff2_b")
        act_ref[...] = x + z.reshape(bt, S, E) * a2

        # ---- last layer: final LayerNorm + l2p (lane-padded output) -----------
        @pl.when(l == L - 1)
        def _():
            xf = act_ref[...]
            yf = _layernorm(xf, lnf_ref[0:1, :], lnf_ref[1:2, :])
            outp = jnp.dot(yf.reshape(rows, E).astype(bf16), l2p_w_ref[...],
                           preferred_element_type=jnp.float32)
            out_ref[...] = (outp + l2p_b_ref[...]).reshape(bt, S, OUTP)

    return kernel


def dit_blocks_call(h0, mods, fp, *, B, S, E, H, L, OUTP, batch_tiles=1):
    assert B % batch_tiles == 0
    bt = B // batch_tiles
    HE = H * E
    K = fp["strip"].shape[-1]

    in_specs = [
        pl.BlockSpec((bt, S, E), lambda b, l: (b, 0, 0)),            # h0
        pl.BlockSpec((1, bt, 6, E), lambda b, l: (l, b, 0, 0)),      # mods (hoisted)
        pl.BlockSpec((1, 1, K), lambda b, l: (l, 0, 0)),             # packed bias strip
        pl.BlockSpec((1, E, 3 * HE), lambda b, l: (l, 0, 0)),        # qkv_w
        pl.BlockSpec((1, HE, E), lambda b, l: (l, 0, 0)),            # lv_w
        pl.BlockSpec((1, E, 4 * E), lambda b, l: (l, 0, 0)),         # ff1_w
        pl.BlockSpec((1, 4 * E, E), lambda b, l: (l, 0, 0)),         # ff2_w
        pl.BlockSpec((2, E), lambda b, l: (0, 0)),                   # final LN (w;b)
        pl.BlockSpec((E, OUTP), lambda b, l: (0, 0)),                # l2p_w
        pl.BlockSpec((1, OUTP), lambda b, l: (0, 0)),                # l2p_b
    ]
    out_spec = pl.BlockSpec((bt, S, OUTP), lambda b, l: (b, 0, 0))

    def nbytes(shape, dtype):
        return math.prod(shape) * jnp.dtype(dtype).itemsize

    streamed = (nbytes((E, 3 * HE), jnp.bfloat16) + nbytes((HE, E), jnp.bfloat16)
                + nbytes((E, 4 * E), jnp.bfloat16) + nbytes((4 * E, E), jnp.bfloat16)
                + nbytes((1, K), jnp.float32) + nbytes((bt, 6, E), jnp.float32))
    resident = (3 * nbytes((bt, S, E), jnp.float32)
                + nbytes((bt, S, OUTP), jnp.float32)
                + nbytes((2, E), jnp.float32) + nbytes((E, OUTP), jnp.bfloat16)
                + nbytes((1, OUTP), jnp.float32)
                + 2 * nbytes((bt * S, 4 * E), jnp.float32))          # qkv/FFN temps
    vmem_limit = int(min(64 * 2 ** 20, max(32 * 2 ** 20, 2 * (2 * streamed + resident))))

    flops_layer = (2 * B * S * (E * 3 * HE + HE * E + E * 4 * E + 4 * E * E)
                   + 4 * B * H * S * S * E)
    cost = pl.CostEstimate(
        flops=int(L * flops_layer + 2 * B * S * E * OUTP),
        transcendentals=int(L * B * H * S * S),
        bytes_accessed=int(batch_tiles * L * streamed
                           + nbytes((B, S, E), jnp.float32)
                           + nbytes((B, S, OUTP), jnp.float32)
                           + nbytes((E, OUTP), jnp.bfloat16)))

    return pl.pallas_call(
        make_dit_blocks_kernel(bt, S, E, H, L, OUTP),
        out_shape=jax.ShapeDtypeStruct((B, S, OUTP), jnp.float32),
        grid=(batch_tiles, L),
        in_specs=in_specs,
        out_specs=out_spec,
        scratch_shapes=[pltpu.VMEM((bt, S, E), jnp.float32)],
        compiler_params=pltpu.CompilerParams(
            dimension_semantics=("parallel", "arbitrary"),
            vmem_limit_bytes=vmem_limit),
        cost_estimate=cost,
    )(h0, mods, fp["strip"], fp["qkv_w"], fp["lv_w"], fp["ff1_w"], fp["ff2_w"],
      fp["lnf"], fp["l2p_w"], fp["l2p_b"])


# ----------------------------------------------------------------------------
# Glue: patch extraction / un-patchify / conditioning path (tiny, plain JAX)
# ----------------------------------------------------------------------------
def extract_patches(x, P):
    # x: (B, C, H, W) NCHW -> (B, pn*pn, C*P*P), patch flattened as (c, kh, kw)
    B, C, Himg, Wimg = x.shape
    pn = Himg // P
    x = x.reshape(B, C, pn, P, pn, P)
    x = x.transpose(0, 2, 4, 1, 3, 5)
    return x.reshape(B, pn * pn, C * P * P)


def unpatchify(x_seq, pn, C, P):
    # mirrors the view/permute/permute/reshape chain at the end of DiT.forward
    B = x_seq.shape[0]
    x = x_seq.reshape(B, pn, pn, C, P, P)
    x = x.transpose(0, 3, 1, 2, 4, 5)
    x = x.transpose(0, 1, 2, 4, 3, 5)
    return x.reshape(B, C, pn * P, pn * P)


def cond_embedding(t, y, params, E):
    half = E // 2
    freqs = jnp.exp(jnp.arange(half, dtype=jnp.float32)
                    * (-math.log(10000.0) / (half - 1)))
    th = t.astype(jnp.float32)[:, None] * freqs[None, :]
    temb = jnp.concatenate([jnp.sin(th), jnp.cos(th)], axis=-1)      # (B, E)
    h = temb @ params["tw1"] + params["tb1"]
    h = jax.nn.gelu(h, approximate=False)                            # nn.GELU() exact
    temb = h @ params["tw2"] + params["tb2"]
    yemb = params["label_tbl"][y]                                    # (B, E)
    return yemb + temb


# ----------------------------------------------------------------------------
# Parameter preparation: fold conv∘patchEmb, pad to 128 lanes, stack layers,
# pack per-layer small tensors into one strip, bf16 matmul weights.
# ----------------------------------------------------------------------------
def prepare_fused_params(params, *, E, H, L, Cp2):
    bf16 = jnp.bfloat16
    HE = H * E
    assert E % LANE == 0, "bias-strip packing assumes E is a multiple of 128"
    Cp2_pad = _pad128(Cp2)

    w_fold = params["conv_w"] @ params["patch_w"]                         # (Cp2, E)
    b_fold = params["conv_b"] @ params["patch_w"] + params["patch_b"]     # (1, E)
    w_emb = jnp.zeros((Cp2_pad, E), jnp.float32).at[:Cp2].set(w_fold)

    l2p_w = jnp.zeros((E, Cp2_pad), jnp.float32).at[:, :Cp2].set(params["l2p_w"])
    l2p_b = jnp.zeros((1, Cp2_pad), jnp.float32).at[:, :Cp2].set(params["l2p_b"])

    def stack(name):
        return jnp.stack([blk[name] for blk in params["blocks"]], axis=0)

    off = strip_offsets(E, HE)
    K = _pad128(off["_total"])
    strips = []
    for blk in params["blocks"]:
        s = jnp.concatenate([blk["ln1_w"], blk["ln1_b"], blk["ln2_w"], blk["ln2_b"],
                             blk["lv_b"], blk["ff2_b"], blk["qkv_b"], blk["ff1_b"]],
                            axis=-1)
        strips.append(jnp.pad(s, ((0, 0), (0, K - s.shape[-1]))))
    strip = jnp.stack(strips, axis=0)                                     # (L, 1, K)

    return {
        "w_emb": w_emb.astype(bf16),
        "b_emb": b_fold,
        "pos": params["pos"],                                             # (S, E)
        "mod_w": stack("mod_w"),                                          # (L, E, 6E) f32
        "mod_b": stack("mod_b"),                                          # (L, 1, 6E) f32
        "strip": strip,                                                   # (L, 1, K)  f32
        "qkv_w": stack("qkv_w").astype(bf16),
        "lv_w": stack("lv_w").astype(bf16),
        "ff1_w": stack("ff1_w").astype(bf16),
        "ff2_w": stack("ff2_w").astype(bf16),
        "lnf": jnp.concatenate([params["ln_w"], params["ln_b"]], axis=0),  # (2, E)
        "l2p_w": l2p_w.astype(bf16),
        "l2p_b": l2p_b,
    }


# ----------------------------------------------------------------------------
# Full forward (Pallas)
# ----------------------------------------------------------------------------
def dit_forward(x, t, y, params, fp, *, P, C, E, H, L, batch_tiles=1):
    B = x.shape[0]
    pn = x.shape[2] // P
    S = pn * pn
    Cp2 = C * P * P
    Cp2_pad = fp["w_emb"].shape[0]

    cond = cond_embedding(t, y, params, E)                                # (B, E) f32
    # adaLN modulation hoisted out of the kernel (tiny, full f32)
    mods = jnp.einsum('be,leo->lbo', cond, fp["mod_w"]) + fp["mod_b"]     # (L, B, 6E)
    mods = mods.reshape(L, B, 6, E)

    patches = extract_patches(x, P).reshape(B * S, Cp2)
    patches_pad = jnp.pad(patches, ((0, 0), (0, Cp2_pad - Cp2))).astype(jnp.bfloat16)

    h0 = patch_embed(patches_pad, fp["w_emb"], fp["b_emb"], fp["pos"],
                     B=B, S=S, E=E)                                       # (B, S, E)
    out = dit_blocks_call(h0, mods, fp, B=B, S=S, E=E, H=H, L=L,
                          OUTP=Cp2_pad, batch_tiles=batch_tiles)          # (B, S, 128)
    return unpatchify(out[:, :, :Cp2], pn, C, P)


# ----------------------------------------------------------------------------
# Pure-JAX reference (f32 math on the same prepared params)
# ----------------------------------------------------------------------------
def dit_forward_ref(x, t, y, params, fp, *, P, C, E, H, L):
    B = x.shape[0]
    pn = x.shape[2] // P
    S = pn * pn
    Cp2 = C * P * P
    HE = H * E
    Cp2_pad = fp["w_emb"].shape[0]
    f32 = lambda a: a.astype(jnp.float32)
    off = strip_offsets(E, HE)
    scale = 1.0 / math.sqrt(float(S))

    def sl(l, name):
        o, n = off[name]
        return fp["strip"][l, :, o:o + n]

    cond = cond_embedding(t, y, params, E)
    mods_all = jnp.einsum('be,leo->lbo', cond, fp["mod_w"]) + fp["mod_b"]

    patches = extract_patches(x, P).reshape(B * S, Cp2)
    patches_pad = jnp.pad(patches, ((0, 0), (0, Cp2_pad - Cp2))).astype(jnp.bfloat16)
    h = f32(patches_pad) @ f32(fp["w_emb"]) + fp["b_emb"]
    h = (h.reshape(B, S, E) + fp["pos"]).reshape(B * S, E)

    for l in range(L):
        g1, b1, a1, g2, b2, a2 = jnp.split(mods_all[l], 6, axis=-1)
        y3 = _layernorm(h.reshape(B, S, E), sl(l, "ln1_w"), sl(l, "ln1_b"))
        y3 = y3 * (1 + g1[:, None, :]) + b1[:, None, :]
        qkv = y3.reshape(B * S, E) @ f32(fp["qkv_w"][l]) + sl(l, "qkv_b")
        q, k, v = jnp.split(qkv, 3, axis=-1)
        qh = q.reshape(B, S, H, E).transpose(0, 2, 1, 3)
        kh = k.reshape(B, S, H, E).transpose(0, 2, 1, 3)
        vh = v.reshape(B, S, H, E).transpose(0, 2, 1, 3)
        att = jnp.einsum("bhqe,bhke->bhqk", qh, kh) * scale
        att = jax.nn.softmax(att, axis=-1)
        o = jnp.einsum("bhqk,bhke->bhqe", att, vh).transpose(0, 2, 1, 3)
        o = o.reshape(B * S, HE) @ f32(fp["lv_w"][l]) + sl(l, "lv_b")
        o = (o.reshape(B, S, E) * a1[:, None, :]).reshape(B * S, E)
        h = h + o
        z3 = _layernorm(h.reshape(B, S, E), sl(l, "ln2_w"), sl(l, "ln2_b"))
        z3 = z3 * (1 + g2[:, None, :]) + b2[:, None, :]
        z = jnp.maximum(z3.reshape(B * S, E) @ f32(fp["ff1_w"][l]) + sl(l, "ff1_b"), 0.0)
        z = z @ f32(fp["ff2_w"][l]) + sl(l, "ff2_b")
        z = (z.reshape(B, S, E) * a2[:, None, :]).reshape(B * S, E)
        h = h + z

    hn = _layernorm(h, fp["lnf"][0:1], fp["lnf"][1:2])
    out = hn @ f32(fp["l2p_w"]) + fp["l2p_b"]
    return unpatchify(out[:, :Cp2].reshape(B, S, Cp2), pn, C, P)


# ----------------------------------------------------------------------------
# Deterministic parameter init (f32 "model weights")
# ----------------------------------------------------------------------------
def init_params(key, *, img, P, C, E, labels, dit_num, H):
    pn = img // P
    S = pn * pn
    Cp2 = C * P * P
    HE = H * E
    keys = iter(jax.random.split(key, 256))

    def nrm(shape, scale=0.02):
        return scale * jax.random.normal(next(keys), shape, jnp.float32)

    # Conv2d(C, C*P*P, k=P, s=P): weight (O, C, P, P) -> matmul form (C*P*P, O)
    conv_w4 = nrm((Cp2, C, P, P), 0.05)
    params = {
        "conv_w": conv_w4.reshape(Cp2, Cp2).T,
        "conv_b": nrm((1, Cp2)),
        "patch_w": nrm((Cp2, E), 0.05),
        "patch_b": nrm((1, E)),
        "pos": jax.random.uniform(next(keys), (S, E), jnp.float32),      # torch.rand
        "tw1": nrm((E, E), 0.05), "tb1": nrm((E,)),
        "tw2": nrm((E, E), 0.05), "tb2": nrm((E,)),
        "label_tbl": nrm((labels, E), 1.0),
        "ln_w": jnp.ones((1, E), jnp.float32),
        "ln_b": jnp.zeros((1, E), jnp.float32),
        "l2p_w": nrm((E, Cp2), 0.05),
        "l2p_b": nrm((1, Cp2)),
        "blocks": [],
    }
    for _ in range(dit_num):
        params["blocks"].append({
            "mod_w": nrm((E, 6 * E), 0.05), "mod_b": nrm((1, 6 * E)),
            "ln1_w": jnp.ones((1, E), jnp.float32), "ln1_b": jnp.zeros((1, E), jnp.float32),
            "qkv_w": nrm((E, 3 * HE), 0.05), "qkv_b": nrm((1, 3 * HE)),
            "lv_w": nrm((HE, E), 0.02), "lv_b": nrm((1, E)),
            "ln2_w": jnp.ones((1, E), jnp.float32), "ln2_b": jnp.zeros((1, E), jnp.float32),
            "ff1_w": nrm((E, 4 * E), 0.05), "ff1_b": nrm((1, 4 * E)),
            "ff2_w": nrm((4 * E, E), 0.02), "ff2_b": nrm((1, E)),
        })
    return params


# ----------------------------------------------------------------------------
if __name__ == "__main__":
    IMG, PATCH, CH, EMB, LABELS, DITN, HEADS = 16, 4, 4, 128, 10, 2, 4
    B = 2
    BATCH_TILES = 2   # "parallel" grid axis (sharded across TCs on megacore parts)

    key = jax.random.PRNGKey(0)
    kp, kx, kt, ky = jax.random.split(key, 4)
    params = init_params(kp, img=IMG, P=PATCH, C=CH, E=EMB,
                         labels=LABELS, dit_num=DITN, H=HEADS)

    Cp2 = CH * PATCH * PATCH
    fp = prepare_fused_params(params, E=EMB, H=HEADS, L=DITN, Cp2=Cp2)

    x = jax.random.normal(kx, (B, CH, IMG, IMG), jnp.float32)   # NCHW like PyTorch
    t = jnp.array([37.0, 512.0], dtype=jnp.float32)             # diffusion timesteps
    y = jnp.array([1, 7], dtype=jnp.int32)                      # class labels

    fwd = jax.jit(functools.partial(dit_forward, P=PATCH, C=CH, E=EMB,
                                    H=HEADS, L=DITN, batch_tiles=BATCH_TILES))
    out = jax.block_until_ready(fwd(x, t, y, params, fp))
    assert out.shape == (B, CH, IMG, IMG), out.shape

    ref = dit_forward_ref(x, t, y, params, fp,
                          P=PATCH, C=CH, E=EMB, H=HEADS, L=DITN)
    err = float(jnp.max(jnp.abs(out - ref)))
    ref_scale = float(jnp.max(jnp.abs(ref))) + 1e-6
    assert err / ref_scale < 5e-2, f"relative error vs f32 reference: {err / ref_scale}"

    print("KERNEL_OK")
</pallas_src>

<mosaic_0001>
module attributes {stable_mosaic.version = 11 : i64} {
  func.func @_patch_embed_kernel(%arg0: memref<32x128xbf16, #tpu.memory_space<vmem>>, %arg1: memref<128x128xbf16, #tpu.memory_space<vmem>>, %arg2: memref<1x128xf32, #tpu.memory_space<vmem>>, %arg3: memref<16x128xf32, #tpu.memory_space<vmem>>, %arg4: memref<2x16x128xf32, #tpu.memory_space<vmem>>) attributes {dimension_semantics = [], scalar_prefetch = 0 : i64, scratch_operands = 0 : i64, tpu.core_type = #tpu.core_type<tc>} {
    %c0 = arith.constant 0 : index
    %c0_0 = arith.constant 0 : index
    %0 = vector.load %arg0[%c0, %c0_0] : memref<32x128xbf16, #tpu.memory_space<vmem>>, vector<32x128xbf16>
    %c0_1 = arith.constant 0 : index
    %c0_2 = arith.constant 0 : index
    %1 = vector.load %arg1[%c0_1, %c0_2] : memref<128x128xbf16, #tpu.memory_space<vmem>>, vector<128x128xbf16>
    %cst = arith.constant dense<0.000000e+00> : vector<32x128xf32>
    %2 = tpu.matmul %0, %1, %cst {dimension_numbers = #tpu.dot_dimension_numbers<[1], [0], [0], [1], [0, 0, 1, 1], [], []>} : vector<32x128xbf16>, vector<128x128xbf16>, vector<32x128xf32> -> vector<32x128xf32>
    %3 = vector.shape_cast %2 : vector<32x128xf32> to vector<2x16x128xf32>
    %c0_3 = arith.constant 0 : index
    %c0_4 = arith.constant 0 : index
    %4 = vector.load %arg2[%c0_3, %c0_4] : memref<1x128xf32, #tpu.memory_space<vmem>>, vector<1x128xf32>
    %5 = vector.shape_cast %4 : vector<1x128xf32> to vector<1x1x128xf32>
    %6 = vector.broadcast %5 : vector<1x1x128xf32> to vector<2x16x128xf32>
    %7 = arith.addf %3, %6 : vector<2x16x128xf32>
    %c0_5 = arith.constant 0 : index
    %c0_6 = arith.constant 0 : index
    %8 = vector.load %arg3[%c0_5, %c0_6] : memref<16x128xf32, #tpu.memory_space<vmem>>, vector<16x128xf32>
    %9 = vector.shape_cast %8 : vector<16x128xf32> to vector<1x16x128xf32>
    %10 = vector.broadcast %9 : vector<1x16x128xf32> to vector<2x16x128xf32>
    %11 = arith.addf %7, %10 : vector<2x16x128xf32>
    %c0_7 = arith.constant 0 : index
    %c0_8 = arith.constant 0 : index
    %c0_9 = arith.constant 0 : index
    %12 = vector.load %arg4[%c0_7, %c0_8, %c0_9] : memref<2x16x128xf32, #tpu.memory_space<vmem>>, vector<2x16x128xf32>
    tpu.vector_store %arg4[%c0_7, %c0_8, %c0_9], %11 {strides = array<i32>} : memref<2x16x128xf32, #tpu.memory_space<vmem>>, vector<2x16x128xf32>,
    return
  }
}

module attributes {stable_mosaic.version = 11 : i64} {
  func.func @kernel(%arg0: i32, %arg1: i32, %arg2: memref<1x16x128xf32, #tpu.memory_space<vmem>>, %arg3: memref<1x1x6x128xf32, #tpu.memory_space<vmem>>, %arg4: memref<1x1x2816xf32, #tpu.memory_space<vmem>>, %arg5: memref<1x128x1536xbf16, #tpu.memory_space<vmem>>, %arg6: memref<1x512x128xbf16, #tpu.memory_space<vmem>>, %arg7: memref<1x128x512xbf16, #tpu.memory_space<vmem>>, %arg8: memref<1x512x128xbf16, #tpu.memory_space<vmem>>, %arg9: memref<2x128xf32, #tpu.memory_space<vmem>>, %arg10: memref<128x128xbf16, #tpu.memory_space<vmem>>, %arg11: memref<1x128xf32, #tpu.memory_space<vmem>>, %arg12: memref<1x16x128xf32, #tpu.memory_space<vmem>>, %arg13: memref<1x16x128xf32, #tpu.memory_space<vmem>>) attributes {dimension_semantics = [#tpu.dimension_semantics<parallel>, #tpu.dimension_semantics<arbitrary>], iteration_bounds = array<i64: 2, 2>, scalar_prefetch = 0 : i64, scratch_operands = 1 : i64, tpu.core_type = #tpu.core_type<tc>, window_params = [{transform_indices = @transform_0, window_bounds = array<i64: 1, 16, 128>}, {transform_indices = @transform_1, window_bounds = array<i64: 1, 1, 6, 128>}, {transform_indices = @transform_2, window_bounds = array<i64: 1, 1, 2816>}, {transform_indices = @transform_3, window_bounds = array<i64: 1, 128, 1536>}, {transform_indices = @transform_4, window_bounds = array<i64: 1, 512, 128>}, {transform_indices = @transform_5, window_bounds = array<i64: 1, 128, 512>}, {transform_indices = @transform_6, window_bounds = array<i64: 1, 512, 128>}, {pipeline_mode = #tpu.pipeline_mode<synchronous>, transform_indices = @transform_7, window_bounds = array<i64: 2, 128>}, {pipeline_mode = #tpu.pipeline_mode<synchronous>, transform_indices = @transform_8, window_bounds = array<i64: 128, 128>}, {pipeline_mode = #tpu.pipeline_mode<synchronous>, transform_indices = @transform_9, window_bounds = array<i64: 1, 128>}, {transform_indices = @transform_10, window_bounds = array<i64: 1, 16, 128>}]} {
    %c0_i32 = arith.constant 0 : i32
    %0 = arith.cmpi eq, %arg1, %c0_i32 : i32
    %1 = arith.extui %0 : i1 to i32
    %c0_i32_0 = arith.constant 0 : i32
    %2 = arith.cmpi ne, %1, %c0_i32_0 : i32
    scf.if %2 {
      %c0_91 = arith.constant 0 : index
      %c0_92 = arith.constant 0 : index
      %c0_93 = arith.constant 0 : index
      %261 = vector.load %arg2[%c0_91, %c0_92, %c0_93] : memref<1x16x128xf32, #tpu.memory_space<vmem>>, vector<1x16x128xf32>
      %c0_94 = arith.constant 0 : index
      %c0_95 = arith.constant 0 : index
      %c0_96 = arith.constant 0 : index
      %262 = vector.load %arg13[%c0_94, %c0_95, %c0_96] : memref<1x16x128xf32, #tpu.memory_space<vmem>>, vector<1x16x128xf32>
      tpu.vector_store %arg13[%c0_94, %c0_95, %c0_96], %261 {strides = array<i32>} : memref<1x16x128xf32, #tpu.memory_space<vmem>>, vector<1x16x128xf32>,
    } else {
    }
    %c0 = arith.constant 0 : index
    %c0_1 = arith.constant 0 : index
    %c0_2 = arith.constant 0 : index
    %3 = vector.load %arg13[%c0, %c0_1, %c0_2] : memref<1x16x128xf32, #tpu.memory_space<vmem>>, vector<1x16x128xf32>
    %c0_3 = arith.constant 0 : index
    %c0_4 = arith.constant 0 : index
    %c0_5 = arith.constant 0 : index
    %c0_6 = arith.constant 0 : index
    %4 = vector.load %arg3[%c0_3, %c0_4, %c0_5, %c0_6] : memref<1x1x6x128xf32, #tpu.memory_space<vmem>>, vector<1x1x6x128xf32>
    %5 = vector.shape_cast %4 : vector<1x1x6x128xf32> to vector<1x6x128xf32>
    %6 = vector.extract_strided_slice %5 {offsets = [0, 0, 0], sizes = [1, 1, 128], strides = [1, 1, 1]} : vector<1x6x128xf32> to vector<1x1x128xf32>
    %7 = vector.shape_cast %6 : vector<1x1x128xf32> to vector<1x128xf32>
    %8 = vector.shape_cast %7 : vector<1x128xf32> to vector<1x1x128xf32>
    %9 = vector.extract_strided_slice %5 {offsets = [0, 1, 0], sizes = [1, 1, 128], strides = [1, 1, 1]} : vector<1x6x128xf32> to vector<1x1x128xf32>
    %10 = vector.shape_cast %9 : vector<1x1x128xf32> to vector<1x128xf32>
    %11 = vector.shape_cast %10 : vector<1x128xf32> to vector<1x1x128xf32>
    %12 = vector.extract_strided_slice %5 {offsets = [0, 2, 0], sizes = [1, 1, 128], strides = [1, 1, 1]} : vector<1x6x128xf32> to vector<1x1x128xf32>
    %13 = vector.shape_cast %12 : vector<1x1x128xf32> to vector<1x128xf32>
    %14 = vector.shape_cast %13 : vector<1x128xf32> to vector<1x1x128xf32>
    %15 = vector.extract_strided_slice %5 {offsets = [0, 3, 0], sizes = [1, 1, 128], strides = [1, 1, 1]} : vector<1x6x128xf32> to vector<1x1x128xf32>
    %16 = vector.shape_cast %15 : vector<1x1x128xf32> to vector<1x128xf32>
    %17 = vector.shape_cast %16 : vector<1x128xf32> to vector<1x1x128xf32>
    %18 = vector.extract_strided_slice %5 {offsets = [0, 4, 0], sizes = [1, 1, 128], strides = [1, 1, 1]} : vector<1x6x128xf32> to vector<1x1x128xf32>
    %19 = vector.shape_cast %18 : vector<1x1x128xf32> to vector<1x128xf32>
    %20 = vector.shape_cast %19 : vector<1x128xf32> to vector<1x1x128xf32>
    %21 = vector.extract_strided_slice %5 {offsets = [0, 5, 0], sizes = [1, 1, 128], strides = [1, 1, 1]} : vector<1x6x128xf32> to vector<1x1x128xf32>
    %22 = vector.shape_cast %21 : vector<1x1x128xf32> to vector<1x128xf32>
    %23 = vector.shape_cast %22 : vector<1x128xf32> to vector<1x1x128xf32>
    %c0_7 = arith.constant 0 : index
    %c0_8 = arith.constant 0 : index
    %c0_9 = arith.constant 0 : index
    %24 = vector.load %arg4[%c0_7, %c0_8, %c0_9] : memref<1x1x2816xf32, #tpu.memory_space<vmem>>, vector<1x1x128xf32>
    %25 = vector.shape_cast %24 : vector<1x1x128xf32> to vector<1x128xf32>
    %c0_10 = arith.constant 0 : index
    %c0_11 = arith.constant 0 : index
    %c128 = arith.constant 128 : index
    %26 = vector.load %arg4[%c0_10, %c0_11, %c128] : memref<1x1x2816xf32, #tpu.memory_space<vmem>>, vector<1x1x128xf32>
    %27 = vector.shape_cast %26 : vector<1x1x128xf32> to vector<1x128xf32>
    %cst = arith.constant dense<0.000000e+00> : vector<1x16xf32>
    %28 = vector.multi_reduction <add>, %3, %cst [2] : vector<1x16x128xf32> to vector<1x16xf32>
    %29 = vector.shape_cast %28 : vector<1x16xf32> to vector<1x16x1xf32>
    %cst_12 = arith.constant 1.280000e+02 : f32
    %30 = vector.broadcast %cst_12 : f32 to vector<1x16x1xf32>
    %31 = arith.divf %29, %30 : vector<1x16x1xf32>
    %32 = arith.mulf %3, %3 : vector<1x16x128xf32>
    %cst_13 = arith.constant dense<0.000000e+00> : vector<1x16xf32>
    %33 = vector.multi_reduction <add>, %32, %cst_13 [2] : vector<1x16x128xf32> to vector<1x16xf32>
    %34 = vector.shape_cast %33 : vector<1x16xf32> to vector<1x16x1xf32>
    %cst_14 = arith.constant 1.280000e+02 : f32
    %35 = vector.broadcast %cst_14 : f32 to vector<1x16x1xf32>
    %36 = arith.divf %34, %35 : vector<1x16x1xf32>
    %37 = arith.mulf %31, %31 : vector<1x16x1xf32>
    %38 = arith.subf %36, %37 : vector<1x16x1xf32>
    %cst_15 = arith.constant 0.000000e+00 : f32
    %39 = vector.broadcast %cst_15 : f32 to vector<1x16x1xf32>
    %40 = arith.maximumf %38, %39 : vector<1x16x1xf32>
    %41 = vector.broadcast %31 : vector<1x16x1xf32> to vector<1x16x128xf32>
    %42 = arith.subf %3, %41 : vector<1x16x128xf32>
    %cst_16 = arith.constant 9.99999974E-6 : f32
    %43 = vector.broadcast %cst_16 : f32 to vector<1x16x1xf32>
    %44 = arith.addf %40, %43 : vector<1x16x1xf32>
    %45 = math.rsqrt %44 : vector<1x16x1xf32>
    %46 = vector.broadcast %45 : vector<1x16x1xf32> to vector<1x16x128xf32>
    %47 = arith.mulf %42, %46 : vector<1x16x128xf32>
    %48 = vector.shape_cast %25 : vector<1x128xf32> to vector<1x1x128xf32>
    %49 = vector.broadcast %48 : vector<1x1x128xf32> to vector<1x16x128xf32>
    %50 = arith.mulf %47, %49 : vector<1x16x128xf32>
    %51 = vector.shape_cast %27 : vector<1x128xf32> to vector<1x1x128xf32>
    %52 = vector.broadcast %51 : vector<1x1x128xf32> to vector<1x16x128xf32>
    %53 = arith.addf %50, %52 : vector<1x16x128xf32>
    %cst_17 = arith.constant 1.000000e+00 : f32
    %54 = vector.broadcast %cst_17 : f32 to vector<1x1x128xf32>
    %55 = arith.addf %54, %8 : vector<1x1x128xf32>
    %56 = vector.broadcast %55 : vector<1x1x128xf32> to vector<1x16x128xf32>
    %57 = arith.mulf %53, %56 : vector<1x16x128xf32>
    %58 = vector.broadcast %11 : vector<1x1x128xf32> to vector<1x16x128xf32>
    %59 = arith.addf %57, %58 : vector<1x16x128xf32>
    %60 = vector.shape_cast %59 : vector<1x16x128xf32> to vector<16x128xf32>
    %61 = arith.truncf %60 : vector<16x128xf32> to vector<16x128xbf16>
    %c0_18 = arith.constant 0 : index
    %c0_19 = arith.constant 0 : index
    %c0_20 = arith.constant 0 : index
    %62 = vector.load %arg5[%c0_18, %c0_19, %c0_20] : memref<1x128x1536xbf16, #tpu.memory_space<vmem>>, vector<1x128x1536xbf16>
    %63 = vector.shape_cast %62 : vector<1x128x1536xbf16> to vector<128x1536xbf16>
    %cst_21 = arith.constant dense<0.000000e+00> : vector<16x1536xf32>
    %64 = tpu.matmul %61, %63, %cst_21 {dimension_numbers = #tpu.dot_dimension_numbers<[1], [0], [0], [1], [0, 0, 1, 1], [], []>} : vector<16x128xbf16>, vector<128x1536xbf16>, vector<16x1536xf32> -> vector<16x1536xf32>
    %c0_22 = arith.constant 0 : index
    %c0_23 = arith.constant 0 : index
    %c768 = arith.constant 768 : index
    %65 = vector.load %arg4[%c0_22, %c0_23, %c768] : memref<1x1x2816xf32, #tpu.memory_space<vmem>>, vector<1x1x1536xf32>
    %66 = vector.shape_cast %65 : vector<1x1x1536xf32> to vector<1x1536xf32>
    %67 = vector.broadcast %66 : vector<1x1536xf32> to vector<16x1536xf32>
    %68 = arith.addf %64, %67 : vector<16x1536xf32>
    %cst_24 = arith.constant 0.000000e+00 : f32
    %69 = vector.broadcast %cst_24 : f32 to vector<16x128xf32>
    %70 = vector.extract_strided_slice %68 {offsets = [0, 0], sizes = [16, 128], strides = [1, 1]} : vector<16x1536xf32> to vector<16x128xf32>
    %71 = vector.shape_cast %70 : vector<16x128xf32> to vector<1x16x128xf32>
    %72 = arith.truncf %71 : vector<1x16x128xf32> to vector<1x16x128xbf16>
    %73 = vector.extract_strided_slice %68 {offsets = [0, 512], sizes = [16, 128], strides = [1, 1]} : vector<16x1536xf32> to vector<16x128xf32>
    %74 = vector.shape_cast %73 : vector<16x128xf32> to vector<1x16x128xf32>
    %75 = arith.truncf %74 : vector<1x16x128xf32> to vector<1x16x128xbf16>
    %76 = vector.extract_strided_slice %68 {offsets = [0, 1024], sizes = [16, 128], strides = [1, 1]} : vector<16x1536xf32> to vector<16x128xf32>
    %77 = vector.shape_cast %76 : vector<16x128xf32> to vector<1x16x128xf32>
    %78 = arith.truncf %77 : vector<1x16x128xf32> to vector<1x16x128xbf16>
    "tpu.trace_start"() <{level = 10 : i32, message = "bqe,bke->bqk"}> : () -> ()
    %cst_25 = arith.constant dense<0.000000e+00> : vector<1x16x16xf32>
    %79 = tpu.matmul %72, %75, %cst_25 {dimension_numbers = #tpu.dot_dimension_numbers<[2], [2], [1], [1], [0, 0, 0, 1, 1, 1], [0], [0]>} : vector<1x16x128xbf16>, vector<1x16x128xbf16>, vector<1x16x16xf32> -> vector<1x16x16xf32>
    "tpu.trace_stop"() : () -> ()
    %cst_26 = arith.constant 2.500000e-01 : f32
    %80 = vector.broadcast %cst_26 : f32 to vector<1x16x16xf32>
    %81 = arith.mulf %79, %80 : vector<1x16x16xf32>
    %cst_27 = arith.constant dense<0xFF800000> : vector<1x16xf32>
    %82 = vector.multi_reduction <maximumf>, %81, %cst_27 [2] : vector<1x16x16xf32> to vector<1x16xf32>
    %83 = vector.shape_cast %82 : vector<1x16xf32> to vector<1x16x1xf32>
    %84 = vector.broadcast %83 : vector<1x16x1xf32> to vector<1x16x16xf32>
    %85 = arith.subf %81, %84 : vector<1x16x16xf32>
    %86 = math.exp %85 : vector<1x16x16xf32>
    %cst_28 = arith.constant dense<0.000000e+00> : vector<1x16xf32>
    %87 = vector.multi_reduction <add>, %86, %cst_28 [2] : vector<1x16x16xf32> to vector<1x16xf32>
    %88 = vector.shape_cast %87 : vector<1x16xf32> to vector<1x16x1xf32>
    %89 = tpu.reciprocal %88 {approx = true} : vector<1x16x1xf32> -> vector<1x16x1xf32>
    %90 = vector.broadcast %89 : vector<1x16x1xf32> to vector<1x16x16xf32>
    %91 = arith.mulf %86, %90 : vector<1x16x16xf32>
    %92 = arith.truncf %91 : vector<1x16x16xf32> to vector<1x16x16xbf16>
    "tpu.trace_start"() <{level = 10 : i32, message = "bqk,bke->bqe"}> : () -> ()
    %cst_29 = arith.constant dense<0.000000e+00> : vector<1x16x128xf32>
    %93 = tpu.matmul %92, %78, %cst_29 {dimension_numbers = #tpu.dot_dimension_numbers<[2], [1], [1], [2], [0, 0, 0, 1, 1, 2], [0], [0]>} : vector<1x16x16xbf16>, vector<1x16x128xbf16>, vector<1x16x128xf32> -> vector<1x16x128xf32>
    "tpu.trace_stop"() : () -> ()
    %94 = vector.shape_cast %93 : vector<1x16x128xf32> to vector<16x128xf32>
    %95 = arith.truncf %94 : vector<16x128xf32> to vector<16x128xbf16>
    %c0_30 = arith.constant 0 : index
    %c0_31 = arith.constant 0 : index
    %c0_32 = arith.constant 0 : index
    %96 = vector.load %arg6[%c0_30, %c0_31, %c0_32] : memref<1x512x128xbf16, #tpu.memory_space<vmem>>, vector<1x128x128xbf16>
    %97 = vector.shape_cast %96 : vector<1x128x128xbf16> to vector<128x128xbf16>
    %cst_33 = arith.constant dense<0.000000e+00> : vector<16x128xf32>
    %98 = tpu.matmul %95, %97, %cst_33 {dimension_numbers = #tpu.dot_dimension_numbers<[1], [0], [0], [1], [0, 0, 1, 1], [], []>} : vector<16x128xbf16>, vector<128x128xbf16>, vector<16x128xf32> -> vector<16x128xf32>
    %99 = arith.addf %69, %98 : vector<16x128xf32>
    %100 = vector.extract_strided_slice %68 {offsets = [0, 128], sizes = [16, 128], strides = [1, 1]} : vector<16x1536xf32> to vector<16x128xf32>
    %101 = vector.shape_cast %100 : vector<16x128xf32> to vector<1x16x128xf32>
    %102 = arith.truncf %101 : vector<1x16x128xf32> to vector<1x16x128xbf16>
    %103 = vector.extract_strided_slice %68 {offsets = [0, 640], sizes = [16, 128], strides = [1, 1]} : vector<16x1536xf32> to vector<16x128xf32>
    %104 = vector.shape_cast %103 : vector<16x128xf32> to vector<1x16x128xf32>
    %105 = arith.truncf %104 : vector<1x16x128xf32> to vector<1x16x128xbf16>
    %106 = vector.extract_strided_slice %68 {offsets = [0, 1152], sizes = [16, 128], strides = [1, 1]} : vector<16x1536xf32> to vector<16x128xf32>
    %107 = vector.shape_cast %106 : vector<16x128xf32> to vector<1x16x128xf32>
    %108 = arith.truncf %107 : vector<1x16x128xf32> to vector<1x16x128xbf16>
    "tpu.trace_start"() <{level = 10 : i32, message = "bqe,bke->bqk"}> : () -> ()
    %cst_34 = arith.constant dense<0.000000e+00> : vector<1x16x16xf32>
    %109 = tpu.matmul %102, %105, %cst_34 {dimension_numbers = #tpu.dot_dimension_numbers<[2], [2], [1], [1], [0, 0, 0, 1, 1, 1], [0], [0]>} : vector<1x16x128xbf16>, vector<1x16x128xbf16>, vector<1x16x16xf32> -> vector<1x16x16xf32>
    "tpu.trace_stop"() : () -> ()
    %cst_35 = arith.constant 2.500000e-01 : f32
    %110 = vector.broadcast %cst_35 : f32 to vector<1x16x16xf32>
    %111 = arith.mulf %109, %110 : vector<1x16x16xf32>
    %cst_36 = arith.constant dense<0xFF800000> : vector<1x16xf32>
    %112 = vector.multi_reduction <maximumf>, %111, %cst_36 [2] : vector<1x16x16xf32> to vector<1x16xf32>
    %113 = vector.shape_cast %112 : vector<1x16xf32> to vector<1x16x1xf32>
    %114 = vector.broadcast %113 : vector<1x16x1xf32> to vector<1x16x16xf32>
    %115 = arith.subf %111, %114 : vector<1x16x16xf32>
    %116 = math.exp %115 : vector<1x16x16xf32>
    %cst_37 = arith.constant dense<0.000000e+00> : vector<1x16xf32>
    %117 = vector.multi_reduction <add>, %116, %cst_37 [2] : vector<1x16x16xf32> to vector<1x16xf32>
    %118 = vector.shape_cast %117 : vector<1x16xf32> to vector<1x16x1xf32>
    %119 = tpu.reciprocal %118 {approx = true} : vector<1x16x1xf32> -> vector<1x16x1xf32>
    %120 = vector.broadcast %119 : vector<1x16x1xf32> to vector<1x16x16xf32>
    %121 = arith.mulf %116, %120 : vector<1x16x16xf32>
    %122 = arith.truncf %121 : vector<1x16x16xf32> to vector<1x16x16xbf16>
    "tpu.trace_start"() <{level = 10 : i32, message = "bqk,bke->bqe"}> : () -> ()
    %cst_38 = arith.constant dense<0.000000e+00> : vector<1x16x128xf32>
    %123 = tpu.matmul %122, %108, %cst_38 {dimension_numbers = #tpu.dot_dimension_numbers<[2], [1], [1], [2], [0, 0, 0, 1, 1, 2], [0], [0]>} : vector<1x16x16xbf16>, vector<1x16x128xbf16>, vector<1x16x128xf32> -> vector<1x16x128xf32>
    "tpu.trace_stop"() : () -> ()
    %124 = vector.shape_cast %123 : vector<1x16x128xf32> to vector<16x128xf32>
    %125 = arith.truncf %124 : vector<16x128xf32> to vector<16x128xbf16>
    %c0_39 = arith.constant 0 : index
    %c128_40 = arith.constant 128 : index
    %c0_41 = arith.constant 0 : index
    %126 = vector.load %arg6[%c0_39, %c128_40, %c0_41] : memref<1x512x128xbf16, #tpu.memory_space<vmem>>, vector<1x128x128xbf16>
    %127 = vector.shape_cast %126 : vector<1x128x128xbf16> to vector<128x128xbf16>
    %cst_42 = arith.constant dense<0.000000e+00> : vector<16x128xf32>
    %128 = tpu.matmul %125, %127, %cst_42 {dimension_numbers = #tpu.dot_dimension_numbers<[1], [0], [0], [1], [0, 0, 1, 1], [], []>} : vector<16x128xbf16>, vector<128x128xbf16>, vector<16x128xf32> -> vector<16x128xf32>
    %129 = arith.addf %99, %128 : vector<16x128xf32>
    %130 = vector.extract_strided_slice %68 {offsets = [0, 256], sizes = [16, 128], strides = [1, 1]} : vector<16x1536xf32> to vector<16x128xf32>
    %131 = vector.shape_cast %130 : vector<16x128xf32> to vector<1x16x128xf32>
    %132 = arith.truncf %131 : vector<1x16x128xf32> to vector<1x16x128xbf16>
    %133 = vector.extract_strided_slice %68 {offsets = [0, 768], sizes = [16, 128], strides = [1, 1]} : vector<16x1536xf32> to vector<16x128xf32>
    %134 = vector.shape_cast %133 : vector<16x128xf32> to vector<1x16x128xf32>
    %135 = arith.truncf %134 : vector<1x16x128xf32> to vector<1x16x128xbf16>
    %136 = vector.extract_strided_slice %68 {offsets = [0, 1280], sizes = [16, 128], strides = [1, 1]} : vector<16x1536xf32> to vector<16x128xf32>
    %137 = vector.shape_cast %136 : vector<16x128xf32> to vector<1x16x128xf32>
    %138 = arith.truncf %137 : vector<1x16x128xf32> to vector<1x16x128xbf16>
    "tpu.trace_start"() <{level = 10 : i32, message = "bqe,bke->bqk"}> : () -> ()
    %cst_43 = arith.constant dense<0.000000e+00> : vector<1x16x16xf32>
    %139 = tpu.matmul %132, %135, %cst_43 {dimension_numbers = #tpu.dot_dimension_numbers<[2], [2], [1], [1], [0, 0, 0, 1, 1, 1], [0], [0]>} : vector<1x16x128xbf16>, vector<1x16x128xbf16>, vector<1x16x16xf32> -> vector<1x16x16xf32>
    "tpu.trace_stop"() : () -> ()
    %cst_44 = arith.constant 2.500000e-01 : f32
    %140 = vector.broadcast %cst_44 : f32 to vector<1x16x16xf32>
    %141 = arith.mulf %139, %140 : vector<1x16x16xf32>
    %cst_45 = arith.constant dense<0xFF800000> : vector<1x16xf32>
    %142 = vector.multi_reduction <maximumf>, %141, %cst_45 [2] : vector<1x16x16xf32> to vector<1x16xf32>
    %143 = vector.shape_cast %142 : vector<1x16xf32> to vector<1x16x1xf32>
    %144 = vector.broadcast %143 : vector<1x16x1xf32> to vector<1x16x16xf32>
    %145 = arith.subf %141, %144 : vector<1x16x16xf32>
    %146 = math.exp %145 : vector<1x16x16xf32>
    %cst_46 = arith.constant dense<0.000000e+00> : vector<1x16xf32>
    %147 = vector.multi_reduction <add>, %146, %cst_46 [2] : vector<1x16x16xf32> to vector<1x16xf32>
    %148 = vector.shape_cast %147 : vector<1x16xf32> to vector<1x16x1xf32>
    %149 = tpu.reciprocal %148 {approx = true} : vector<1x16x1xf32> -> vector<1x16x1xf32>
    %150 = vector.broadcast %149 : vector<1x16x1xf32> to vector<1x16x16xf32>
    %151 = arith.mulf %146, %150 : vector<1x16x16xf32>
    %152 = arith.truncf %151 : vector<1x16x16xf32> to vector<1x16x16xbf16>
    "tpu.trace_start"() <{level = 10 : i32, message = "bqk,bke->bqe"}> : () -> ()
    %cst_47 = arith.constant dense<0.000000e+00> : vector<1x16x128xf32>
    %153 = tpu.matmul %152, %138, %cst_47 {dimension_numbers = #tpu.dot_dimension_numbers<[2], [1], [1], [2], [0, 0, 0, 1, 1, 2], [0], [0]>} : vector<1x16x16xbf16>, vector<1x16x128xbf16>, vector<1x16x128xf32> -> vector<1x16x128xf32>
    "tpu.trace_stop"() : () -> ()
    %154 = vector.shape_cast %153 : vector<1x16x128xf32> to vector<16x128xf32>
    %155 = arith.truncf %154 : vector<16x128xf32> to vector<16x128xbf16>
    %c0_48 = arith.constant 0 : index
    %c256 = arith.constant 256 : index
    %c0_49 = arith.constant 0 : index
    %156 = vector.load %arg6[%c0_48, %c256, %c0_49] : memref<1x512x128xbf16, #tpu.memory_space<vmem>>, vector<1x128x128xbf16>
    %157 = vector.shape_cast %156 : vector<1x128x128xbf16> to vector<128x128xbf16>
    %cst_50 = arith.constant dense<0.000000e+00> : vector<16x128xf32>
    %158 = tpu.matmul %155, %157, %cst_50 {dimension_numbers = #tpu.dot_dimension_numbers<[1], [0], [0], [1], [0, 0, 1, 1], [], []>} : vector<16x128xbf16>, vector<128x128xbf16>, vector<16x128xf32> -> vector<16x128xf32>
    %159 = arith.addf %129, %158 : vector<16x128xf32>
    %160 = vector.extract_strided_slice %68 {offsets = [0, 384], sizes = [16, 128], strides = [1, 1]} : vector<16x1536xf32> to vector<16x128xf32>
    %161 = vector.shape_cast %160 : vector<16x128xf32> to vector<1x16x128xf32>
    %162 = arith.truncf %161 : vector<1x16x128xf32> to vector<1x16x128xbf16>
    %163 = vector.extract_strided_slice %68 {offsets = [0, 896], sizes = [16, 128], strides = [1, 1]} : vector<16x1536xf32> to vector<16x128xf32>
    %164 = vector.shape_cast %163 : vector<16x128xf32> to vector<1x16x128xf32>
    %165 = arith.truncf %164 : vector<1x16x128xf32> to vector<1x16x128xbf16>
    %166 = vector.extract_strided_slice %68 {offsets = [0, 1408], sizes = [16, 128], strides = [1, 1]} : vector<16x1536xf32> to vector<16x128xf32>
    %167 = vector.shape_cast %166 : vector<16x128xf32> to vector<1x16x128xf32>
    %168 = arith.truncf %167 : vector<1x16x128xf32> to vector<1x16x128xbf16>
    "tpu.trace_start"() <{level = 10 : i32, message = "bqe,bke->bqk"}> : () -> ()
    %cst_51 = arith.constant dense<0.000000e+00> : vector<1x16x16xf32>
    %169 = tpu.matmul %162, %165, %cst_51 {dimension_numbers = #tpu.dot_dimension_numbers<[2], [2], [1], [1], [0, 0, 0, 1, 1, 1], [0], [0]>} : vector<1x16x128xbf16>, vector<1x16x128xbf16>, vector<1x16x16xf32> -> vector<1x16x16xf32>
    "tpu.trace_stop"() : () -> ()
    %cst_52 = arith.constant 2.500000e-01 : f32
    %170 = vector.broadcast %cst_52 : f32 to vector<1x16x16xf32>
    %171 = arith.mulf %169, %170 : vector<1x16x16xf32>
    %cst_53 = arith.constant dense<0xFF800000> : vector<1x16xf32>
    %172 = vector.multi_reduction <maximumf>, %171, %cst_53 [2] : vector<1x16x16xf32> to vector<1x16xf32>
    %173 = vector.shape_cast %172 : vector<1x16xf32> to vector<1x16x1xf32>
    %174 = vector.broadcast %173 : vector<1x16x1xf32> to vector<1x16x16xf32>
    %175 = arith.subf %171, %174 : vector<1x16x16xf32>
    %176 = math.exp %175 : vector<1x16x16xf32>
    %cst_54 = arith.constant dense<0.000000e+00> : vector<1x16xf32>
    %177 = vector.multi_reduction <add>, %176, %cst_54 [2] : vector<1x16x16xf32> to vector<1x16xf32>
    %178 = vector.shape_cast %177 : vector<1x16xf32> to vector<1x16x1xf32>
    %179 = tpu.reciprocal %178 {approx = true} : vector<1x16x1xf32> -> vector<1x16x1xf32>
    %180 = vector.broadcast %179 : vector<1x16x1xf32> to vector<1x16x16xf32>
    %181 = arith.mulf %176, %180 : vector<1x16x16xf32>
    %182 = arith.truncf %181 : vector<1x16x16xf32> to vector<1x16x16xbf16>
    "tpu.trace_start"() <{level = 10 : i32, message = "bqk,bke->bqe"}> : () -> ()
    %cst_55 = arith.constant dense<0.000000e+00> : vector<1x16x128xf32>
    %183 = tpu.matmul %182, %168, %cst_55 {dimension_numbers = #tpu.dot_dimension_numbers<[2], [1], [1], [2], [0, 0, 0, 1, 1, 2], [0], [0]>} : vector<1x16x16xbf16>, vector<1x16x128xbf16>, vector<1x16x128xf32> -> vector<1x16x128xf32>
    "tpu.trace_stop"() : () -> ()
    %184 = vector.shape_cast %183 : vector<1x16x128xf32> to vector<16x128xf32>
    %185 = arith.truncf %184 : vector<16x128xf32> to vector<16x128xbf16>
    %c0_56 = arith.constant 0 : index
    %c384 = arith.constant 384 : index
    %c0_57 = arith.constant 0 : index
    %186 = vector.load %arg6[%c0_56, %c384, %c0_57] : memref<1x512x128xbf16, #tpu.memory_space<vmem>>, vector<1x128x128xbf16>
    %187 = vector.shape_cast %186 : vector<1x128x128xbf16> to vector<128x128xbf16>
    %cst_58 = arith.constant dense<0.000000e+00> : vector<16x128xf32>
    %188 = tpu.matmul %185, %187, %cst_58 {dimension_numbers = #tpu.dot_dimension_numbers<[1], [0], [0], [1], [0, 0, 1, 1], [], []>} : vector<16x128xbf16>, vector<128x128xbf16>, vector<16x128xf32> -> vector<16x128xf32>
    %189 = arith.addf %159, %188 : vector<16x128xf32>
    %c0_59 = arith.constant 0 : index
    %c0_60 = arith.constant 0 : index
    %c512 = arith.constant 512 : index
    %190 = vector.load %arg4[%c0_59, %c0_60, %c512] : memref<1x1x2816xf32, #tpu.memory_space<vmem>>, vector<1x1x128xf32>
    %191 = vector.shape_cast %190 : vector<1x1x128xf32> to vector<1x128xf32>
    %192 = vector.broadcast %191 : vector<1x128xf32> to vector<16x128xf32>
    %193 = arith.addf %189, %192 : vector<16x128xf32>
    %194 = vector.shape_cast %193 : vector<16x128xf32> to vector<1x16x128xf32>
    %195 = vector.broadcast %14 : vector<1x1x128xf32> to vector<1x16x128xf32>
    %196 = arith.mulf %194, %195 : vector<1x16x128xf32>
    %197 = arith.addf %3, %196 : vector<1x16x128xf32>
    %c0_61 = arith.constant 0 : index
    %c0_62 = arith.constant 0 : index
    %c256_63 = arith.constant 256 : index
    %198 = vector.load %arg4[%c0_61, %c0_62, %c256_63] : memref<1x1x2816xf32, #tpu.memory_space<vmem>>, vector<1x1x128xf32>
    %199 = vector.shape_cast %198 : vector<1x1x128xf32> to vector<1x128xf32>
    %c0_64 = arith.constant 0 : index
    %c0_65 = arith.constant 0 : index
    %c384_66 = arith.constant 384 : index
    %200 = vector.load %arg4[%c0_64, %c0_65, %c384_66] : memref<1x1x2816xf32, #tpu.memory_space<vmem>>, vector<1x1x128xf32>
    %201 = vector.shape_cast %200 : vector<1x1x128xf32> to vector<1x128xf32>
    %cst_67 = arith.constant dense<0.000000e+00> : vector<1x16xf32>
    %202 = vector.multi_reduction <add>, %197, %cst_67 [2] : vector<1x16x128xf32> to vector<1x16xf32>
    %203 = vector.shape_cast %202 : vector<1x16xf32> to vector<1x16x1xf32>
    %cst_68 = arith.constant 1.280000e+02 : f32
    %204 = vector.broadcast %cst_68 : f32 to vector<1x16x1xf32>
    %205 = arith.divf %203, %204 : vector<1x16x1xf32>
    %206 = arith.mulf %197, %197 : vector<1x16x128xf32>
    %cst_69 = arith.constant dense<0.000000e+00> : vector<1x16xf32>
    %207 = vector.multi_reduction <add>, %206, %cst_69 [2] : vector<1x16x128xf32> to vector<1x16xf32>
    %208 = vector.shape_cast %207 : vector<1x16xf32> to vector<1x16x1xf32>
    %cst_70 = arith.constant 1.280000e+02 : f32
    %209 = vector.broadcast %cst_70 : f32 to vector<1x16x1xf32>
    %210 = arith.divf %208, %209 : vector<1x16x1xf32>
    %211 = arith.mulf %205, %205 : vector<1x16x1xf32>
    %212 = arith.subf %210, %211 : vector<1x16x1xf32>
    %cst_71 = arith.constant 0.000000e+00 : f32
    %213 = vector.broadcast %cst_71 : f32 to vector<1x16x1xf32>
    %214 = arith.maximumf %212, %213 : vector<1x16x1xf32>
    %215 = vector.broadcast %205 : vector<1x16x1xf32> to vector<1x16x128xf32>
    %216 = arith.subf %197, %215 : vector<1x16x128xf32>
    %cst_72 = arith.constant 9.99999974E-6 : f32
    %217 = vector.broadcast %cst_72 : f32 to vector<1x16x1xf32>
    %218 = arith.addf %214, %217 : vector<1x16x1xf32>
    %219 = math.rsqrt %218 : vector<1x16x1xf32>
    %220 = vector.broadcast %219 : vector<1x16x1xf32> to vector<1x16x128xf32>
    %221 = arith.mulf %216, %220 : vector<1x16x128xf32>
    %222 = vector.shape_cast %199 : vector<1x128xf32> to vector<1x1x128xf32>
    %223 = vector.broadcast %222 : vector<1x1x128xf32> to vector<1x16x128xf32>
    %224 = arith.mulf %221, %223 : vector<1x16x128xf32>
    %225 = vector.shape_cast %201 : vector<1x128xf32> to vector<1x1x128xf32>
    %226 = vector.broadcast %225 : vector<1x1x128xf32> to vector<1x16x128xf32>
    %227 = arith.addf %224, %226 : vector<1x16x128xf32>
    %cst_73 = arith.constant 1.000000e+00 : f32
    %228 = vector.broadcast %cst_73 : f32 to vector<1x1x128xf32>
    %229 = arith.addf %228, %17 : vector<1x1x128xf32>
    %230 = vector.broadcast %229 : vector<1x1x128xf32> to vector<1x16x128xf32>
    %231 = arith.mulf %227, %230 : vector<1x16x128xf32>
    %232 = vector.broadcast %20 : vector<1x1x128xf32> to vector<1x16x128xf32>
    %233 = arith.addf %231, %232 : vector<1x16x128xf32>
    %234 = vector.shape_cast %233 : vector<1x16x128xf32> to vector<16x128xf32>
    %235 = arith.truncf %234 : vector<16x128xf32> to vector<16x128xbf16>
    %c0_74 = arith.constant 0 : index
    %c0_75 = arith.constant 0 : index
    %c0_76 = arith.constant 0 : index
    %236 = vector.load %arg7[%c0_74, %c0_75, %c0_76] : memref<1x128x512xbf16, #tpu.memory_space<vmem>>, vector<1x128x512xbf16>
    %237 = vector.shape_cast %236 : vector<1x128x512xbf16> to vector<128x512xbf16>
    %cst_77 = arith.constant dense<0.000000e+00> : vector<16x512xf32>
    %238 = tpu.matmul %235, %237, %cst_77 {dimension_numbers = #tpu.dot_dimension_numbers<[1], [0], [0], [1], [0, 0, 1, 1], [], []>} : vector<16x128xbf16>, vector<128x512xbf16>, vector<16x512xf32> -> vector<16x512xf32>
    %c0_78 = arith.constant 0 : index
    %c0_79 = arith.constant 0 : index
    %c2304 = arith.constant 2304 : index
    %239 = vector.load %arg4[%c0_78, %c0_79, %c2304] : memref<1x1x2816xf32, #tpu.memory_space<vmem>>, vector<1x1x512xf32>
    %240 = vector.shape_cast %239 : vector<1x1x512xf32> to vector<1x512xf32>
    %241 = vector.broadcast %240 : vector<1x512xf32> to vector<16x512xf32>
    %242 = arith.addf %238, %241 : vector<16x512xf32>
    %cst_80 = arith.constant 0.000000e+00 : f32
    %243 = vector.broadcast %cst_80 : f32 to vector<16x512xf32>
    %244 = arith.maximumf %242, %243 : vector<16x512xf32>
    %245 = arith.truncf %244 : vector<16x512xf32> to vector<16x512xbf16>
    %c0_81 = arith.constant 0 : index
    %c0_82 = arith.constant 0 : index
    %c0_83 = arith.constant 0 : index
    %246 = vector.load %arg8[%c0_81, %c0_82, %c0_83] : memref<1x512x128xbf16, #tpu.memory_space<vmem>>, vector<1x512x128xbf16>
    %247 = vector.shape_cast %246 : vector<1x512x128xbf16> to vector<512x128xbf16>
    %cst_84 = arith.constant dense<0.000000e+00> : vector<16x128xf32>
    %248 = tpu.matmul %245, %247, %cst_84 {dimension_numbers = #tpu.dot_dimension_numbers<[1], [0], [0], [1], [0, 0, 1, 1], [], []>} : vector<16x512xbf16>, vector<512x128xbf16>, vector<16x128xf32> -> vector<16x128xf32>
    %c0_85 = arith.constant 0 : index
    %c0_86 = arith.constant 0 : index
    %c640 = arith.constant 640 : index
    %249 = vector.load %arg4[%c0_85, %c0_86, %c640] : memref<1x1x2816xf32, #tpu.memory_space<vmem>>, vector<1x1x128xf32>
    %250 = vector.shape_cast %249 : vector<1x1x128xf32> to vector<1x128xf32>
    %251 = vector.broadcast %250 : vector<1x128xf32> to vector<16x128xf32>
    %252 = arith.addf %248, %251 : vector<16x128xf32>
    %253 = vector.shape_cast %252 : vector<16x128xf32> to vector<1x16x128xf32>
    %254 = vector.broadcast %23 : vector<1x1x128xf32> to vector<1x16x128xf32>
    %255 = arith.mulf %253, %254 : vector<1x16x128xf32>
    %256 = arith.addf %197, %255 : vector<1x16x128xf32>
    %c0_87 = arith.constant 0 : index
    %c0_88 = arith.constant 0 : index
    %c0_89 = arith.constant 0 : index
    %257 = vector.load %arg13[%c0_87, %c0_88, %c0_89] : memref<1x16x128xf32, #tpu.memory_space<vmem>>, vector<1x16x128xf32>
    tpu.vector_store %arg13[%c0_87, %c0_88, %c0_89], %256 {strides = array<i32>} : memref<1x16x128xf32, #tpu.memory_space<vmem>>, vector<1x16x128xf32>,
    %c1_i32 = arith.constant 1 : i32
    %258 = arith.cmpi eq, %arg1, %c1_i32 : i32
    %259 = arith.extui %258 : i1 to i32
    %c0_i32_90 = arith.constant 0 : i32
    %260 = arith.cmpi ne, %259, %c0_i32_90 : i32
    scf.if %260 {
      %c0_91 = arith.constant 0 : index
      %c0_92 = arith.constant 0 : index
      %c0_93 = arith.constant 0 : index
      %261 = vector.load %arg13[%c0_91, %c0_92, %c0_93] : memref<1x16x128xf32, #tpu.memory_space<vmem>>, vector<1x16x128xf32>
      %c0_94 = arith.constant 0 : index
      %c0_95 = arith.constant 0 : index
      %262 = vector.load %arg9[%c0_94, %c0_95] : memref<2x128xf32, #tpu.memory_space<vmem>>, vector<1x128xf32>
      %c1 = arith.constant 1 : index
      %c0_96 = arith.constant 0 : index
      %263 = vector.load %arg9[%c1, %c0_96] : memref<2x128xf32, #tpu.memory_space<vmem>>, vector<1x128xf32>
      %cst_97 = arith.constant dense<0.000000e+00> : vector<1x16xf32>
      %264 = vector.multi_reduction <add>, %261, %cst_97 [2] : vector<1x16x128xf32> to vector<1x16xf32>
      %265 = vector.shape_cast %264 : vector<1x16xf32> to vector<1x16x1xf32>
      %cst_98 = arith.constant 1.280000e+02 : f32
      %266 = vector.broadcast %cst_98 : f32 to vector<1x16x1xf32>
      %267 = arith.divf %265, %266 : vector<1x16x1xf32>
      %268 = arith.mulf %261, %261 : vector<1x16x128xf32>
      %cst_99 = arith.constant dense<0.000000e+00> : vector<1x16xf32>
      %269 = vector.multi_reduction <add>, %268, %cst_99 [2] : vector<1x16x128xf32> to vector<1x16xf32>
      %270 = vector.shape_cast %269 : vector<1x16xf32> to vector<1x16x1xf32>
      %cst_100 = arith.constant 1.280000e+02 : f32
      %271 = vector.broadcast %cst_100 : f32 to vector<1x16x1xf32>
      %272 = arith.divf %270, %271 : vector<1x16x1xf32>
      %273 = arith.mulf %267, %267 : vector<1x16x1xf32>
      %274 = arith.subf %272, %273 : vector<1x16x1xf32>
      %cst_101 = arith.constant 0.000000e+00 : f32
      %275 = vector.broadcast %cst_101 : f32 to vector<1x16x1xf32>
      %276 = arith.maximumf %274, %275 : vector<1x16x1xf32>
      %277 = vector.broadcast %267 : vector<1x16x1xf32> to vector<1x16x128xf32>
      %278 = arith.subf %261, %277 : vector<1x16x128xf32>
      %cst_102 = arith.constant 9.99999974E-6 : f32
      %279 = vector.broadcast %cst_102 : f32 to vector<1x16x1xf32>
      %280 = arith.addf %276, %279 : vector<1x16x1xf32>
      %281 = math.rsqrt %280 : vector<1x16x1xf32>
      %282 = vector.broadcast %281 : vector<1x16x1xf32> to vector<1x16x128xf32>
      %283 = arith.mulf %278, %282 : vector<1x16x128xf32>
      %284 = vector.shape_cast %262 : vector<1x128xf32> to vector<1x1x128xf32>
      %285 = vector.broadcast %284 : vector<1x1x128xf32> to vector<1x16x128xf32>
      %286 = arith.mulf %283, %285 : vector<1x16x128xf32>
      %287 = vector.shape_cast %263 : vector<1x128xf32> to vector<1x1x128xf32>
      %288 = vector.broadcast %287 : vector<1x1x128xf32> to vector<1x16x128xf32>
      %289 = arith.addf %286, %288 : vector<1x16x128xf32>
      %290 = vector.shape_cast %289 : vector<1x16x128xf32> to vector<16x128xf32>
      %291 = arith.truncf %290 : vector<16x128xf32> to vector<16x128xbf16>
      %c0_103 = arith.constant 0 : index
      %c0_104 = arith.constant 0 : index
      %292 = vector.load %arg10[%c0_103, %c0_104] : memref<128x128xbf16, #tpu.memory_space<vmem>>, vector<128x128xbf16>
      %cst_105 = arith.constant dense<0.000000e+00> : vector<16x128xf32>
      %293 = tpu.matmul %291, %292, %cst_105 {dimension_numbers = #tpu.dot_dimension_numbers<[1], [0], [0], [1], [0, 0, 1, 1], [], []>} : vector<16x128xbf16>, vector<128x128xbf16>, vector<16x128xf32> -> vector<16x128xf32>
      %c0_106 = arith.constant 0 : index
      %c0_107 = arith.constant 0 : index
      %294 = vector.load %arg11[%c0_106, %c0_107] : memref<1x128xf32, #tpu.memory_space<vmem>>, vector<1x128xf32>
      %295 = vector.broadcast %294 : vector<1x128xf32> to vector<16x128xf32>
      %296 = arith.addf %293, %295 : vector<16x128xf32>
      %297 = vector.shape_cast %296 : vector<16x128xf32> to vector<1x16x128xf32>
      %c0_108 = arith.constant 0 : index
      %c0_109 = arith.constant 0 : index
      %c0_110 = arith.constant 0 : index
      %298 = vector.load %arg12[%c0_108, %c0_109, %c0_110] : memref<1x16x128xf32, #tpu.memory_space<vmem>>, vector<1x16x128xf32>
      tpu.vector_store %arg12[%c0_108, %c0_109, %c0_110], %297 {strides = array<i32>} : memref<1x16x128xf32, #tpu.memory_space<vmem>>, vector<1x16x128xf32>,
    } else {
    }
    return
  }
  func.func @transform_0(%arg0: i32, %arg1: i32) -> (i32, i32, i32) {
    %c0_i32 = arith.constant 0 : i32
    %c0_i32_0 = arith.constant 0 : i32
    %c0_i32_1 = arith.constant 0 : i32
    return %arg0, %c0_i32, %c0_i32_0 : i32, i32, i32
  }
  func.func @transform_1(%arg0: i32, %arg1: i32) -> (i32, i32, i32, i32) {
    %c0_i32 = arith.constant 0 : i32
    %c0_i32_0 = arith.constant 0 : i32
    %c0_i32_1 = arith.constant 0 : i32
    return %arg1, %arg0, %c0_i32, %c0_i32_0 : i32, i32, i32, i32
  }
  func.func @transform_2(%arg0: i32, %arg1: i32) -> (i32, i32, i32) {
    %c0_i32 = arith.constant 0 : i32
    %c0_i32_0 = arith.constant 0 : i32
    %c0_i32_1 = arith.constant 0 : i32
    return %arg1, %c0_i32, %c0_i32_0 : i32, i32, i32
  }
  func.func @transform_3(%arg0: i32, %arg1: i32) -> (i32, i32, i32) {
    %c0_i32 = arith.constant 0 : i32
    %c0_i32_0 = arith.constant 0 : i32
    %c0_i32_1 = arith.constant 0 : i32
    return %arg1, %c0_i32, %c0_i32_0 : i32, i32, i32
  }
  func.func @transform_4(%arg0: i32, %arg1: i32) -> (i32, i32, i32) {
    %c0_i32 = arith.constant 0 : i32
    %c0_i32_0 = arith.constant 0 : i32
    %c0_i32_1 = arith.constant 0 : i32
    return %arg1, %c0_i32, %c0_i32_0 : i32, i32, i32
  }
  func.func @transform_5(%arg0: i32, %arg1: i32) -> (i32, i32, i32) {
    %c0_i32 = arith.constant 0 : i32
    %c0_i32_0 = arith.constant 0 : i32
    %c0_i32_1 = arith.constant 0 : i32
    return %arg1, %c0_i32, %c0_i32_0 : i32, i32, i32
  }
  func.func @transform_6(%arg0: i32, %arg1: i32) -> (i32, i32, i32) {
    %c0_i32 = arith.constant 0 : i32
    %c0_i32_0 = arith.constant 0 : i32
    %c0_i32_1 = arith.constant 0 : i32
    return %arg1, %c0_i32, %c0_i32_0 : i32, i32, i32
  }
  func.func @transform_7(%arg0: i32, %arg1: i32) -> (i32, i32) {
    %c0_i32 = arith.constant 0 : i32
    %c0_i32_0 = arith.constant 0 : i32
    %c0_i32_1 = arith.constant 0 : i32
    return %c0_i32, %c0_i32_0 : i32, i32
  }
  func.func @transform_8(%arg0: i32, %arg1: i32) -> (i32, i32) {
    %c0_i32 = arith.constant 0 : i32
    %c0_i32_0 = arith.constant 0 : i32
    %c0_i32_1 = arith.constant 0 : i32
    return %c0_i32, %c0_i32_0 : i32, i32
  }
  func.func @transform_9(%arg0: i32, %arg1: i32) -> (i32, i32) {
    %c0_i32 = arith.constant 0 : i32
    %c0_i32_0 = arith.constant 0 : i32
    %c0_i32_1 = arith.constant 0 : i32
    return %c0_i32, %c0_i32_0 : i32, i32
  }
  func.func @transform_10(%arg0: i32, %arg1: i32) -> (i32, i32, i32) {
    %c0_i32 = arith.constant 0 : i32
    %c0_i32_0 = arith.constant 0 : i32
    %c0_i32_1 = arith.constant 0 : i32
    return %arg0, %c0_i32, %c0_i32_0 : i32, i32, i32
  }
}

</mosaic_0001>

<llo_original>
// kernel: dit_forward.2
$region0: #{dit_forward.2}
  #allocation0 [shape = 'u32[]', space=smem, size = 0x4, offset = 0x4, fixed_abs, tag = 'smem constant byte address 0x4 - core index']
  #allocation1 [shape = 'u32[72,128]{1,0:T(1,128)}', space=vmem, size = 0x9000, scoped, tag = 'internal scratch']
  %s0 = inlined_call_operand.vmem [shape: bf16[32,128], index: 0, kind: input, shape index: {}]
  %s1 = inlined_call_operand.hbm [shape: bf16[128,128], index: 1, kind: input, shape index: {}]
  %s2 = inlined_call_operand.hbm [shape: f32[1,128], index: 2, kind: input, shape index: {}]
  %s3 = inlined_call_operand.hbm [shape: f32[16,128], index: 3, kind: input, shape index: {}]
  %s4 = inlined_call_operand.vmem [shape: f32[2,16,128], index: 4, kind: output, shape index: {}]
  %s5 = sld [smem:[#allocation0]]
  $region38: #{dit_forward.2} parent=0
    _
  %s7 = ssub.s32 1, %s5
  %s8 = scalar_select 0, %s7, %s5
  $region1: #{dit_forward.2} parent=0
    #allocation2 [shape = 'u8[32768]{0}', space=vmem, size = 0x8000, scoped, tag = 'input window, operand 1, single buffered']
    #allocation3 [shape = 's32[1]{0}', space=sflag, size = 0x4, scoped, tag = 'scoped memory for dit_forward.2']
    #allocation4 [shape = 'u8[512]{0}', space=vmem, size = 0x400, scoped, tag = 'input window, operand 2, single buffered']
    #allocation5 [shape = 's32[1]{0}', space=sflag, size = 0x4, scoped, tag = 'scoped memory for dit_forward.2']
    #allocation6 [shape = 'u8[8192]{0}', space=vmem, size = 0x2000, scoped, tag = 'input window, operand 3, single buffered']
    %9 = vsyncpa [#allocation3], 0
    %10 = vsyncpa [#allocation5], 0
    // Predicated region
    $region2: #{dit_forward.2} parent=1 // pred_check
      _
    $region3: #{dit_forward.2} parent=1 // pred_check_branch
      %12 = sbr.rel (0) target = $region5
    $region4: #{dit_forward.2} parent=1 // pred_region
      _
    $region5: #{dit_forward.2} parent=1 // pred_fallthru
      _
    // Predicated region
    $region6: #{dit_forward.2} parent=1 // pred_check
      _
    $region7: #{dit_forward.2} parent=1 // pred_check_branch
      %14 = sbr.rel (0) target = $region9
    $region8: #{dit_forward.2} parent=1 // pred_region
      %16 = vsyncadd [#allocation3], 0
      %s17 = sshll.u32 %s1, 4
      %s18 = int_to_ptr.hbm [resolvable:$true] %s17
      %s19 = sshll.u32 [#allocation2], 4
      %s20 = int_to_ptr.vmem [resolvable:$true] %s19
      %25 = dma.hbm_to_vmem [thread:$0]  %s18, 1024, %s20, [#allocation3], 64, 64, 4
    $region9: #{dit_forward.2} parent=1 // pred_fallthru
      _
    // Predicated region
    $region10: #{dit_forward.2} parent=1 // pred_check
      _
    $region11: #{dit_forward.2} parent=1 // pred_check_branch
      %27 = sbr.rel (0) target = $region13
    $region12: #{dit_forward.2} parent=1 // pred_region
      %29 = vsyncadd [#allocation5], 0
      %s31 = sshll.u32 %s2, 4
      %s32 = int_to_ptr.hbm [resolvable:$true] %s31
      %s33 = sshll.u32 [#allocation4], 4
      %s34 = int_to_ptr.vmem [resolvable:$true] %s33
      %36 = dma.hbm_to_vmem [thread:$0]  %s32, 16, %s34, [#allocation5]
    $region13: #{dit_forward.2} parent=1 // pred_fallthru
      _
    // Predicated region
    $region14: #{dit_forward.2} parent=1 // pred_check
      _
    $region15: #{dit_forward.2} parent=1 // pred_check_branch
      %38 = sbr.rel (0) target = $region17
    $region16: #{dit_forward.2} parent=1 // pred_region
      %40 = vsyncadd [#allocation5], 0
      %s41 = sshll.u32 %s3, 4
      %s42 = int_to_ptr.hbm [resolvable:$true] %s41
      %s43 = sshll.u32 [#allocation6], 4
      %s44 = int_to_ptr.vmem [resolvable:$true] %s43
      %49 = dma.hbm_to_vmem [thread:$0]  %s42, 256, %s44, [#allocation5], 128, 128, 8
    $region17: #{dit_forward.2} parent=1 // pred_fallthru
      _
    // Predicated region
    $region18: #{dit_forward.2} parent=1 // pred_check
      _
    $region19: #{dit_forward.2} parent=1 // pred_check_branch
      %51 = sbr.rel (0) target = $region21
    $region20: #{dit_forward.2} parent=1 // pred_region
      %53 = dma.done [#allocation3], 1024
    $region21: #{dit_forward.2} parent=1 // pred_fallthru
      _
    // Predicated region
    $region22: #{dit_forward.2} parent=1 // pred_check
      _
    $region23: #{dit_forward.2} parent=1 // pred_check_branch
      %55 = sbr.rel (0) target = $region25
    $region24: #{dit_forward.2} parent=1 // pred_region
      %57 = dma.done [#allocation5], 16
    $region25: #{dit_forward.2} parent=1 // pred_fallthru
      _
    // Predicated region
    $region26: #{dit_forward.2} parent=1 // pred_check
      _
    $region27: #{dit_forward.2} parent=1 // pred_check_branch
      %59 = sbr.rel (0) target = $region29
    $region28: #{dit_forward.2} parent=1 // pred_region
      %61 = dma.done [#allocation5], 256
    $region29: #{dit_forward.2} parent=1 // pred_fallthru
      _
    %v62 = vld [vmem:[%s0] sm:$0xf]
    %v63 = vld [vmem:[%s0 + $0x4] sm:$0xf]
    %v64 = vld [vmem:[%s0 + $0x8] sm:$0xf]
    %v65 = vld [vmem:[%s0 + $0xc] sm:$0xf]
    %v66 = vld [vmem:[#allocation2] sm:$0xf]
    %v67 = vld [vmem:[#allocation2 + $0x4] sm:$0xf]
    %v68 = vld [vmem:[#allocation2 + $0x8] sm:$0xf]
    %v69 = vld [vmem:[#allocation2 + $0xc] sm:$0xf]
    %v70 = vld [vmem:[#allocation2 + $0x10] sm:$0xf]
    %v71 = vld [vmem:[#allocation2 + $0x14] sm:$0xf]
    %v72 = vld [vmem:[#allocation2 + $0x18] sm:$0xf]
    %v73 = vld [vmem:[#allocation2 + $0x1c] sm:$0xf]
    %v74 = vld [vmem:[#allocation2 + $0x20] sm:$0xf]
    %v75 = vld [vmem:[#allocation2 + $0x24] sm:$0xf]
    %v76 = vld [vmem:[#allocation2 + $0x28] sm:$0xf]
    %v77 = vld [vmem:[#allocation2 + $0x2c] sm:$0xf]
    %v78 = vld [vmem:[#allocation2 + $0x30] sm:$0xf]
    %v79 = vld [vmem:[#allocation2 + $0x34] sm:$0xf]
    %v80 = vld [vmem:[#allocation2 + $0x38] sm:$0xf]
    %v81 = vld [vmem:[#allocation2 + $0x3c] sm:$0xf]
    %v86 = vunpack.c.l.b16 %v62
    %v87 = vunpack.c.l.b16 %v63
    %v88 = vunpack.c.l.b16 %v64
    %v89 = vunpack.c.l.b16 %v65
    %v90 = vpack.c.b16 %v87, %v86
    %v91 = vpack.c.b16 %v89, %v88
    %v110 = vunpack.c.l.b16 %v66
    %v111 = vunpack.c.l.b16 %v67
    %v112 = vunpack.c.l.b16 %v68
    %v113 = vunpack.c.l.b16 %v69
    %v114 = vunpack.c.l.b16 %v70
    %v115 = vunpack.c.l.b16 %v71
    %v116 = vunpack.c.l.b16 %v72
    %v117 = vunpack.c.l.b16 %v73
    %v118 = vunpack.c.l.b16 %v74
    %v119 = vunpack.c.l.b16 %v75
    %v120 = vunpack.c.l.b16 %v76
    %v121 = vunpack.c.l.b16 %v77
    %v122 = vunpack.c.l.b16 %v78
    %v123 = vunpack.c.l.b16 %v79
    %v124 = vunpack.c.l.b16 %v80
    %v125 = vunpack.c.l.b16 %v81
    %v126 = vpack.c.b16 %v111, %v110
    %v127 = vpack.c.b16 %v113, %v112
    %v128 = vpack.c.b16 %v115, %v114
    %v129 = vpack.c.b16 %v117, %v116
    %v130 = vpack.c.b16 %v119, %v118
    %v131 = vpack.c.b16 %v121, %v120
    %v132 = vpack.c.b16 %v123, %v122
    %v133 = vpack.c.b16 %v125, %v124
    %142 = vmatpush.bf16.msra.mxu0 %v133
    %143 = vmatpush.bf16.msra.mxu0 %v132
    %144 = vmatpush.bf16.msra.mxu0 %v131
    %145 = vmatpush.bf16.msra.mxu0 %v130
    %146 = vmatpush.bf16.msra.mxu0 %v129
    %147 = vmatpush.bf16.msra.mxu0 %v128
    %148 = vmatpush.bf16.msra.mxu0 %v127
    %149 = vmatpush.bf16.msra.mxu0 %v126
    %150 = vmatmul.bf16.gmra.mxu0 %v90
    %v151 = vpop.f32.mrf.mxu0
    %v152 = vadd.f32 0.0, %v151
    %v153 = vpop.f32.mrf.mxu0
    %v154 = vadd.f32 0.0, %v153
    %155 = vmatmul.bf16.gmra.mxu0 %v91
    %v156 = vpop.f32.mrf.mxu0
    %v157 = vadd.f32 0.0, %v156
    %v158 = vpop.f32.mrf.mxu0
    %v159 = vadd.f32 0.0, %v158
    %160 = vdwg.mxu0
    %v161 = vld [vmem:[#allocation4] sm:$0x1]
    %v163 = vperm.slane %v161, 0
    %v165 = vadd.f32 %v152, %v163
    %v166 = vadd.f32 %v154, %v163
    %v167 = vadd.f32 %v157, %v163
    %v168 = vadd.f32 %v159, %v163
    %v169 = vld [vmem:[#allocation6] sm:$0xff]
    %v170 = vld [vmem:[#allocation6 + $0x8] sm:$0xff]
    %v171 = vadd.f32 %v165, %v169
    %v172 = vadd.f32 %v166, %v170
    %v173 = vadd.f32 %v167, %v169
    %v174 = vadd.f32 %v168, %v170
    %175 = vst [vmem:[%s4] sm:$0xff] %v171
    %176 = vst [vmem:[%s4 + $0x8] sm:$0xff] %v172
    %177 = vst [vmem:[%s4 + $0x10] sm:$0xff] %v173
    %178 = vst [vmem:[%s4 + $0x18] sm:$0xff] %v174
    // Predicated region
    $region30: #{dit_forward.2} parent=1 // pred_check
      _
    $region31: #{dit_forward.2} parent=1 // pred_check_branch
      %180 = sbr.rel (0) target = $region33
    $region32: #{dit_forward.2} parent=1 // pred_region
      _
    $region33: #{dit_forward.2} parent=1 // pred_fallthru
      _
    // Predicated region
    $region34: #{dit_forward.2} parent=1 // pred_check
      _
    $region35: #{dit_forward.2} parent=1 // pred_check_branch
      %182 = sbr.rel (0) target = $region37
    $region36: #{dit_forward.2} parent=1 // pred_region
      _
    $region37: #{dit_forward.2} parent=1 // pred_fallthru
      _
    %183 = vsyncpa [#allocation3], 1
    %184 = vsyncpa [#allocation5], 1

// kernel: dit_forward.3
$region0: #{dit_forward.3}
  #allocation0 [shape = 'u32[]', space=smem, size = 0x4, offset = 0x4, fixed_abs, tag = 'smem constant byte address 0x4 - core index']
  #allocation1 [shape = 'u32[72,128]{1,0:T(1,128)}', space=vmem, size = 0x9000, scoped, tag = 'internal scratch']
  #allocation2 [shape = 'f32[1,16,128]{2,1,0:T(8,128)}', space=vmem, size = 0x2000, scoped, tag = 'scratch operand']
  %s0 = inlined_call_operand.vmem [shape: f32[2,16,128], index: 0, kind: input, shape index: {}]
  %s1 = inlined_call_operand.vmem [shape: f32[2,2,6,128], index: 1, kind: input, shape index: {}]
  %s2 = inlined_call_operand.hbm [shape: f32[2,1,2816], index: 2, kind: input, shape index: {}]
  %s3 = inlined_call_operand.vmem [shape: bf16[2,128,1536], index: 3, kind: input, shape index: {}]
  %s4 = inlined_call_operand.vmem [shape: bf16[2,512,128], index: 4, kind: input, shape index: {}]
  %s5 = inlined_call_operand.vmem [shape: bf16[2,128,512], index: 5, kind: input, shape index: {}]
  %s6 = inlined_call_operand.vmem [shape: bf16[2,512,128], index: 6, kind: input, shape index: {}]
  %s7 = inlined_call_operand.hbm [shape: f32[2,128], index: 7, kind: input, shape index: {}]
  %s8 = inlined_call_operand.vmem [shape: bf16[128,128], index: 8, kind: input, shape index: {}]
  %s9 = inlined_call_operand.hbm [shape: f32[1,128], index: 9, kind: input, shape index: {}]
  %s10 = inlined_call_operand.vmem [shape: f32[2,16,128], index: 10, kind: output, shape index: {}]
  %s11 = sld [smem:[#allocation0]]
  $region93: #{dit_forward.3} parent=0
    _
  %s13 = ssub.s32 1, %s11
  %s14 = scalar_select 0, %s13, %s11
  $region1: #{dit_forward.3} parent=0
    #allocation3 [shape = 'u8[22528]{0}', space=vmem, size = 0x5800, scoped, tag = 'input window, operand 2']
    #allocation4 [shape = 's32[2]{0}', space=sflag, size = 0x8, scoped, tag = 'scoped memory for dit_forward.3']
    #allocation5 [shape = 'u8[1024]{0}', space=vmem, size = 0x400, scoped, tag = 'input window, operand 7, single buffered']
    #allocation6 [shape = 's32[1]{0}', space=sflag, size = 0x4, scoped, tag = 'scoped memory for dit_forward.3']
    #allocation7 [shape = 'u8[512]{0}', space=vmem, size = 0x400, scoped, tag = 'input window, operand 9, single buffered']
    %15 = vsyncpa [#allocation4], 0
    %s16 = scalar_lea.sflag [#allocation4], 1
    %17 = vsyncpa %s16, 0
    %18 = vsyncpa [#allocation6], 0
    loop: start=0, step=1, limit=6
    $region2: #{dit_forward.3} parent=1 // loop_pre_header
      _
    $region3: #{dit_forward.3} parent=1 // loop_header
      %s20 = sphi 0, %s24
      %p21 = scmp.ge.s32.totalorder %s20, 6
      %s27 = sphi 0, %s39
      %s28 = sphi 0, %s35
      %s29 = sphi 0, %s27
      %s30 = sphi 0, %s28
      %s31 = sphi 0, %s29
      %s32 = sphi 0, %s30
      %s42 = sphi 0, %s44
      %s45 = sphi 0, %s42
      %s46 = sphi 0, %s45
      %s62 = sphi 0, %s46
      %s70 = sphi 0, %s72
      %s73 = sphi 0, %s70
      %s74 = sphi 0, %s73
      %s90 = sphi 0, %s74
      %s96 = sphi 0, %s98
      %s99 = sphi 0, %s96
      %s100 = sphi 0, %s99
      %s116 = sphi 0, %s100
      %s122 = sphi 0, %s124
      %s125 = sphi 0, %s122
      %s126 = sphi 0, %s125
      %s142 = sphi 0, %s126
      %s148 = sphi 0, %s150
      %s151 = sphi 0, %s148
      %s152 = sphi 0, %s151
      %s168 = sphi 0, %s152
      %s174 = sphi 0, %s176
      %s177 = sphi 0, %s174
      %s178 = sphi 0, %s177
      %s194 = sphi 0, %s178
      %s200 = sphi 0, %s202
      %s203 = sphi 0, %s200
      %s204 = sphi 0, %s203
      %s220 = sphi 0, %s204
      %s224 = sphi 0, %s224
      %s226 = sphi 0, %s224
      %s227 = sphi 0, %s226
      %s241 = sphi 0, %s227
      %s245 = sphi 0, %s245
      %s247 = sphi 0, %s245
      %s248 = sphi 0, %s247
      %s262 = sphi 0, %s248
      %s266 = sphi 0, %s266
      %s268 = sphi 0, %s266
      %s269 = sphi 0, %s268
      %s283 = sphi 0, %s269
      %s289 = sphi 0, %s291
      %s292 = sphi 0, %s289
      %s293 = sphi 0, %s292
      %s309 = sphi 0, %s293
    $region4: #{dit_forward.3} parent=1 // loop_header_branch
      %23 = sbr.rel (%p21) target = $region8
    $region5: #{dit_forward.3} parent=1 // loop_body
      %s25 = ssub.s32 %s20, 1
      %s26 = ssub.s32 %s20, 2
      %s33 = sadd.s32 1, %s28
      %p34 = scmp.ge.s32.totalorder %s33, 2
      %s35 = scalar_select %p34, 0, %s33
      %s36 = sadd.s32 1, %s27
      %s37 = scalar_select %p34, %s36, %s27
      %p38 = scmp.ge.s32.totalorder %s37, 2
      %s39 = scalar_select %p38, 0, %s37
      %s40 = ssub.s32 %s27, %s39
      %p41 = scmp.eq.s32.totalorder %s40, 0
      %s43 = sadd.s32 %s42, 1
      %s44 = scalar_select %p41, %s42, %s43
      %p47 = pneg %p41
      %p48 = scmp.eq.s32.totalorder %s20, 3
      %p49 = por %p47, %p48
      %p50 = scmp.ne.s32.totalorder %s42, %s45
      %p51 = scmp.eq.s32.totalorder %s20, 0
      %p52 = por %p50, %p51
      %p53 = scmp.ne.s32.totalorder %s42, %s45
      %p54 = scmp.eq.s32.totalorder %s25, 3
      %p55 = por %p53, %p54
      %p56 = scmp.ne.s32.totalorder %s45, %s46
      %p57 = scmp.eq.s32.totalorder %s25, 0
      %p58 = por %p56, %p57
      %p59 = scmp.ne.s32.totalorder %s45, %s46
      %p60 = scmp.eq.s32.totalorder %s26, 3
      %p61 = por %p59, %p60
      %p63 = scmp.ne.s32.totalorder %s46, %s62
      %p64 = scmp.eq.s32.totalorder %s26, 0
      %p65 = por %p63, %p64
      %s66 = ssub.s32 %s28, %s35
      %s67 = ssub.s32 %s27, %s39
      %s68 = sor.u32 %s66, %s67
      %p69 = scmp.eq.s32.totalorder %s68, 0
      %s71 = sadd.s32 %s70, 1
      %s72 = scalar_select %p69, %s70, %s71
      %p75 = pneg %p69
      %p76 = scmp.eq.s32.totalorder %s20, 3
      %p77 = por %p75, %p76
      %p78 = scmp.ne.s32.totalorder %s70, %s73
      %p79 = scmp.eq.s32.totalorder %s20, 0
      %p80 = por %p78, %p79
      %p81 = scmp.ne.s32.totalorder %s70, %s73
      %p82 = scmp.eq.s32.totalorder %s25, 3
      %p83 = por %p81, %p82
      %p84 = scmp.ne.s32.totalorder %s73, %s74
      %p85 = scmp.eq.s32.totalorder %s25, 0
      %p86 = por %p84, %p85
      %p87 = scmp.ne.s32.totalorder %s73, %s74
      %p88 = scmp.eq.s32.totalorder %s26, 3
      %p89 = por %p87, %p88
      %p91 = scmp.ne.s32.totalorder %s74, %s90
      %p92 = scmp.eq.s32.totalorder %s26, 0
      %p93 = por %p91, %p92
      %s94 = ssub.s32 %s28, %s35
      %p95 = scmp.eq.s32.totalorder %s94, 0
      %s97 = sadd.s32 %s96, 1
      %s98 = scalar_select %p95, %s96, %s97
      %p101 = pneg %p95
      %p102 = scmp.eq.s32.totalorder %s20, 3
      %p103 = por %p101, %p102
      %p104 = scmp.ne.s32.totalorder %s96, %s99
      %p105 = scmp.eq.s32.totalorder %s20, 0
      %p106 = por %p104, %p105
      %p107 = scmp.ne.s32.totalorder %s96, %s99
      %p108 = scmp.eq.s32.totalorder %s25, 3
      %p109 = por %p107, %p108
      %p110 = scmp.ne.s32.totalorder %s99, %s100
      %p111 = scmp.eq.s32.totalorder %s25, 0
      %p112 = por %p110, %p111
      %p113 = scmp.ne.s32.totalorder %s99, %s100
      %p114 = scmp.eq.s32.totalorder %s26, 3
      %p115 = por %p113, %p114
      %p117 = scmp.ne.s32.totalorder %s100, %s116
      %p118 = scmp.eq.s32.totalorder %s26, 0
      %p119 = por %p117, %p118
      %s120 = ssub.s32 %s28, %s35
      %p121 = scmp.eq.s32.totalorder %s120, 0
      %s123 = sadd.s32 %s122, 1
      %s124 = scalar_select %p121, %s122, %s123
      %p127 = pneg %p121
      %p128 = scmp.eq.s32.totalorder %s20, 3
      %p129 = por %p127, %p128
      %p130 = scmp.ne.s32.totalorder %s122, %s125
      %p131 = scmp.eq.s32.totalorder %s20, 0
      %p132 = por %p130, %p131
      %p133 = scmp.ne.s32.totalorder %s122, %s125
      %p134 = scmp.eq.s32.totalorder %s25, 3
      %p135 = por %p133, %p134
      %p136 = scmp.ne.s32.totalorder %s125, %s126
      %p137 = scmp.eq.s32.totalorder %s25, 0
      %p138 = por %p136, %p137
      %p139 = scmp.ne.s32.totalorder %s125, %s126
      %p140 = scmp.eq.s32.totalorder %s26, 3
      %p141 = por %p139, %p140
      %p143 = scmp.ne.s32.totalorder %s126, %s142
      %p144 = scmp.eq.s32.totalorder %s26, 0
      %p145 = por %p143, %p144
      %s146 = ssub.s32 %s28, %s35
      %p147 = scmp.eq.s32.totalorder %s146, 0
      %s149 = sadd.s32 %s148, 1
      %s150 = scalar_select %p147, %s148, %s149
      %p153 = pneg %p147
      %p154 = scmp.eq.s32.totalorder %s20, 3
      %p155 = por %p153, %p154
      %p156 = scmp.ne.s32.totalorder %s148, %s151
      %p157 = scmp.eq.s32.totalorder %s20, 0
      %p158 = por %p156, %p157
      %p159 = scmp.ne.s32.totalorder %s148, %s151
      %p160 = scmp.eq.s32.totalorder %s25, 3
      %p161 = por %p159, %p160
      %p162 = scmp.ne.s32.totalorder %s151, %s152
      %p163 = scmp.eq.s32.totalorder %s25, 0
      %p164 = por %p162, %p163
      %p165 = scmp.ne.s32.totalorder %s151, %s152
      %p166 = scmp.eq.s32.totalorder %s26, 3
      %p167 = por %p165, %p166
      %p169 = scmp.ne.s32.totalorder %s152, %s168
      %p170 = scmp.eq.s32.totalorder %s26, 0
      %p171 = por %p169, %p170
      %s172 = ssub.s32 %s28, %s35
      %p173 = scmp.eq.s32.totalorder %s172, 0
      %s175 = sadd.s32 %s174, 1
      %s176 = scalar_select %p173, %s174, %s175
      %p179 = pneg %p173
      %p180 = scmp.eq.s32.totalorder %s20, 3
      %p181 = por %p179, %p180
      %p182 = scmp.ne.s32.totalorder %s174, %s177
      %p183 = scmp.eq.s32.totalorder %s20, 0
      %p184 = por %p182, %p183
      %p185 = scmp.ne.s32.totalorder %s174, %s177
      %p186 = scmp.eq.s32.totalorder %s25, 3
      %p187 = por %p185, %p186
      %p188 = scmp.ne.s32.totalorder %s177, %s178
      %p189 = scmp.eq.s32.totalorder %s25, 0
      %p190 = por %p188, %p189
      %p191 = scmp.ne.s32.totalorder %s177, %s178
      %p192 = scmp.eq.s32.totalorder %s26, 3
      %p193 = por %p191, %p192
      %p195 = scmp.ne.s32.totalorder %s178, %s194
      %p196 = scmp.eq.s32.totalorder %s26, 0
      %p197 = por %p195, %p196
      %s198 = ssub.s32 %s28, %s35
      %p199 = scmp.eq.s32.totalorder %s198, 0
      %s201 = sadd.s32 %s200, 1
      %s202 = scalar_select %p199, %s200, %s201
      %p205 = pneg %p199
      %p206 = scmp.eq.s32.totalorder %s20, 3
      %p207 = por %p205, %p206
      %p208 = scmp.ne.s32.totalorder %s200, %s203
      %p209 = scmp.eq.s32.totalorder %s20, 0
      %p210 = por %p208, %p209
      %p211 = scmp.ne.s32.totalorder %s200, %s203
      %p212 = scmp.eq.s32.totalorder %s25, 3
      %p213 = por %p211, %p212
      %p214 = scmp.ne.s32.totalorder %s203, %s204
      %p215 = scmp.eq.s32.totalorder %s25, 0
      %p216 = por %p214, %p215
      %p217 = scmp.ne.s32.totalorder %s203, %s204
      %p218 = scmp.eq.s32.totalorder %s26, 3
      %p219 = por %p217, %p218
      %p221 = scmp.ne.s32.totalorder %s204, %s220
      %p222 = scmp.eq.s32.totalorder %s26, 0
      %p223 = por %p221, %p222
      %s225 = sadd.s32 %s224, 1
      %p228 = scmp.eq.s32.totalorder %s20, 3
      %p229 = scmp.ne.s32.totalorder %s224, %s226
      %p230 = scmp.eq.s32.totalorder %s20, 0
      %p231 = por %p229, %p230
      %p232 = scmp.ne.s32.totalorder %s224, %s226
      %p233 = scmp.eq.s32.totalorder %s25, 3
      %p234 = por %p232, %p233
      %p235 = scmp.ne.s32.totalorder %s226, %s227
      %p236 = scmp.eq.s32.totalorder %s25, 0
      %p237 = por %p235, %p236
      %p238 = scmp.ne.s32.totalorder %s226, %s227
      %p239 = scmp.eq.s32.totalorder %s26, 3
      %p240 = por %p238, %p239
      %p242 = scmp.ne.s32.totalorder %s227, %s241
      %p243 = scmp.eq.s32.totalorder %s26, 0
      %p244 = por %p242, %p243
      %s246 = sadd.s32 %s245, 1
      %p249 = scmp.eq.s32.totalorder %s20, 3
      %p250 = scmp.ne.s32.totalorder %s245, %s247
      %p251 = scmp.eq.s32.totalorder %s20, 0
      %p252 = por %p250, %p251
      %p253 = scmp.ne.s32.totalorder %s245, %s247
      %p254 = scmp.eq.s32.totalorder %s25, 3
      %p255 = por %p253, %p254
      %p256 = scmp.ne.s32.totalorder %s247, %s248
      %p257 = scmp.eq.s32.totalorder %s25, 0
      %p258 = por %p256, %p257
      %p259 = scmp.ne.s32.totalorder %s247, %s248
      %p260 = scmp.eq.s32.totalorder %s26, 3
      %p261 = por %p259, %p260
      %p263 = scmp.ne.s32.totalorder %s248, %s262
      %p264 = scmp.eq.s32.totalorder %s26, 0
      %p265 = por %p263, %p264
      %s267 = sadd.s32 %s266, 1
      %p270 = scmp.eq.s32.totalorder %s20, 3
      %p271 = scmp.ne.s32.totalorder %s266, %s268
      %p272 = scmp.eq.s32.totalorder %s20, 0
      %p273 = por %p271, %p272
      %p274 = scmp.ne.s32.totalorder %s266, %s268
      %p275 = scmp.eq.s32.totalorder %s25, 3
      %p276 = por %p274, %p275
      %p277 = scmp.ne.s32.totalorder %s268, %s269
      %p278 = scmp.eq.s32.totalorder %s25, 0
      %p279 = por %p277, %p278
      %p280 = scmp.ne.s32.totalorder %s268, %s269
      %p281 = scmp.eq.s32.totalorder %s26, 3
      %p282 = por %p280, %p281
      %p284 = scmp.ne.s32.totalorder %s269, %s283
      %p285 = scmp.eq.s32.totalorder %s26, 0
      %p286 = por %p284, %p285
      %s287 = ssub.s32 %s27, %s39
      %p288 = scmp.eq.s32.totalorder %s287, 0
      %s290 = sadd.s32 %s289, 1
      %s291 = scalar_select %p288, %s289, %s290
      %p294 = pneg %p288
      %p295 = scmp.eq.s32.totalorder %s20, 3
      %p296 = por %p294, %p295
      %p297 = scmp.ne.s32.totalorder %s289, %s292
      %p298 = scmp.eq.s32.totalorder %s20, 0
      %p299 = por %p297, %p298
      %p300 = scmp.ne.s32.totalorder %s289, %s292
      %p301 = scmp.eq.s32.totalorder %s25, 3
      %p302 = por %p300, %p301
      %p303 = scmp.ne.s32.totalorder %s292, %s293
      %p304 = scmp.eq.s32.totalorder %s25, 0
      %p305 = por %p303, %p304
      %p306 = scmp.ne.s32.totalorder %s292, %s293
      %p307 = scmp.eq.s32.totalorder %s26, 3
      %p308 = por %p306, %p307
      %p310 = scmp.ne.s32.totalorder %s293, %s309
      %p311 = scmp.eq.s32.totalorder %s26, 0
      %p312 = por %p310, %p311
      %p313 = scmp.le.s32.totalorder 1, %s20
      %p314 = scmp.lt.s32.totalorder %s20, 5
      %p315 = pnand %p313, %p314
      %p316 = pneg %p315
      // Predicated region
      $region9: #{dit_forward.3} parent=5 // pred_check
        _
      $region10: #{dit_forward.3} parent=5 // pred_check_branch
        %318 = sbr.rel (%p315) target = $region12
      $region11: #{dit_forward.3} parent=5 // pred_region
        %s319 = ssub.s32 %s20, 1
        // Predicated region
        $region13: #{dit_forward.3} parent=11 // pred_check
          %p320 = pneg %p237
        $region14: #{dit_forward.3} parent=11 // pred_check_branch
          %322 = sbr.rel (%p320) target = $region16
        $region15: #{dit_forward.3} parent=11 // pred_region
          %324 = vsyncadd [#allocation6], 0
          %s326 = sshll.u32 %s7, 4
          %s327 = int_to_ptr.hbm [resolvable:$true] %s326
          %s328 = sshll.u32 [#allocation5], 4
          %s329 = int_to_ptr.vmem [resolvable:$true] %s328
          %331 = dma.hbm_to_vmem [thread:$0]  %s327, 32, %s329, [#allocation6]
        $region16: #{dit_forward.3} parent=11 // pred_fallthru
          _
        // Predicated region
        $region17: #{dit_forward.3} parent=11 // pred_check
          %p332 = pneg %p258
        $region18: #{dit_forward.3} parent=11 // pred_check_branch
          %334 = sbr.rel (%p332) target = $region20
        $region19: #{dit_forward.3} parent=11 // pred_region
          _
        $region20: #{dit_forward.3} parent=11 // pred_fallthru
          _
        // Predicated region
        $region21: #{dit_forward.3} parent=11 // pred_check
          %p335 = pneg %p279
        $region22: #{dit_forward.3} parent=11 // pred_check_branch
          %337 = sbr.rel (%p335) target = $region24
        $region23: #{dit_forward.3} parent=11 // pred_region
          %339 = vsyncadd [#allocation6], 0
          %s341 = sshll.u32 %s9, 4
          %s342 = int_to_ptr.hbm [resolvable:$true] %s341
          %s343 = sshll.u32 [#allocation7], 4
          %s344 = int_to_ptr.vmem [resolvable:$true] %s343
          %346 = dma.hbm_to_vmem [thread:$0]  %s342, 16, %s344, [#allocation6]
        $region24: #{dit_forward.3} parent=11 // pred_fallthru
          _
      $region12: #{dit_forward.3} parent=5 // pred_fallthru
        _
      %p347 = scmp.lt.s32.totalorder %s20, 4
      // Predicated region
      $region25: #{dit_forward.3} parent=5 // pred_check
        %p348 = pneg %p347
      $region26: #{dit_forward.3} parent=5 // pred_check_branch
        %350 = sbr.rel (%p348) target = $region28
      $region27: #{dit_forward.3} parent=5 // pred_region
        // Predicated region
        $region29: #{dit_forward.3} parent=27 // pred_check
          %p351 = pneg %p52
        $region30: #{dit_forward.3} parent=27 // pred_check_branch
          %353 = sbr.rel (%p351) target = $region32
        $region31: #{dit_forward.3} parent=27 // pred_region
          %p354 = scmp.lt.s32.totalorder %s27, 1
          %s355 = scalar_select %p354, %s27, 1
          %s356 = smul.addr %s355, 2
          %s357 = smul.addr %s356, 8
          %s358 = scalar_lea.vmem %s0, %s357
        $region32: #{dit_forward.3} parent=27 // pred_fallthru
          _
        // Predicated region
        $region33: #{dit_forward.3} parent=27 // pred_check
          %p359 = pneg %p80
        $region34: #{dit_forward.3} parent=27 // pred_check_branch
          %361 = sbr.rel (%p359) target = $region36
        $region35: #{dit_forward.3} parent=27 // pred_region
          %p362 = scmp.lt.s32.totalorder %s28, 1
          %s363 = scalar_select %p362, %s28, 1
          %p364 = scmp.lt.s32.totalorder %s27, 1
          %s365 = scalar_select %p364, %s27, 1
          %s366 = smul.addr %s363, 2
          %s367 = sadd.s32 %s365, %s366
          %s368 = smul.addr %s367, 8
          %s369 = scalar_lea.vmem %s1, %s368
        $region36: #{dit_forward.3} parent=27 // pred_fallthru
          _
        // Predicated region
        $region37: #{dit_forward.3} parent=27 // pred_check
          %p370 = pneg %p106
        $region38: #{dit_forward.3} parent=27 // pred_check_branch
          %372 = sbr.rel (%p370) target = $region40
        $region39: #{dit_forward.3} parent=27 // pred_region
          %s373 = sand.u32 %s96, 1
          %s374 = scalar_lea.sflag [#allocation4], %s373
          %s375 = sand.u32 %s96, 1
          %s376 = smul.addr %s375, 22
          %s377 = scalar_lea.vmem [#allocation3], %s376
          %379 = vsyncadd %s374, 0
          %s380 = smul.addr %s28, 22
          %s381 = scalar_lea.hbm %s2, %s380
          %s383 = sshll.u32 %s381, 4
          %s384 = int_to_ptr.hbm [resolvable:$true] %s383
          %s385 = sshll.u32 %s377, 4
          %s386 = int_to_ptr.vmem [resolvable:$true] %s385
          %388 = dma.hbm_to_vmem [thread:$0]  %s384, 352, %s386, %s374
        $region40: #{dit_forward.3} parent=27 // pred_fallthru
          _
        // Predicated region
        $region41: #{dit_forward.3} parent=27 // pred_check
          %p389 = pneg %p132
        $region42: #{dit_forward.3} parent=27 // pred_check_branch
          %391 = sbr.rel (%p389) target = $region44
        $region43: #{dit_forward.3} parent=27 // pred_region
          %p392 = scmp.lt.s32.totalorder %s28, 1
          %s393 = scalar_select %p392, %s28, 1
          %s394 = smul.addr %s393, 192
          %s395 = smul.addr %s394, 4
          %s396 = scalar_lea.vmem %s3, %s395
        $region44: #{dit_forward.3} parent=27 // pred_fallthru
          _
        // Predicated region
        $region45: #{dit_forward.3} parent=27 // pred_check
          %p397 = pneg %p158
        $region46: #{dit_forward.3} parent=27 // pred_check_branch
          %399 = sbr.rel (%p397) target = $region48
        $region47: #{dit_forward.3} parent=27 // pred_region
          %p400 = scmp.lt.s32.totalorder %s28, 1
          %s401 = scalar_select %p400, %s28, 1
          %s402 = smul.addr %s401, 64
          %s403 = smul.addr %s402, 4
          %s404 = scalar_lea.vmem %s4, %s403
        $region48: #{dit_forward.3} parent=27 // pred_fallthru
          _
        // Predicated region
        $region49: #{dit_forward.3} parent=27 // pred_check
          %p405 = pneg %p184
        $region50: #{dit_forward.3} parent=27 // pred_check_branch
          %407 = sbr.rel (%p405) target = $region52
        $region51: #{dit_forward.3} parent=27 // pred_region
          %p408 = scmp.lt.s32.totalorder %s28, 1
          %s409 = scalar_select %p408, %s28, 1
          %s410 = smul.addr %s409, 64
          %s411 = smul.addr %s410, 4
          %s412 = scalar_lea.vmem %s5, %s411
        $region52: #{dit_forward.3} parent=27 // pred_fallthru
          _
        // Predicated region
        $region53: #{dit_forward.3} parent=27 // pred_check
          %p413 = pneg %p210
        $region54: #{dit_forward.3} parent=27 // pred_check_branch
          %415 = sbr.rel (%p413) target = $region56
        $region55: #{dit_forward.3} parent=27 // pred_region
          %p416 = scmp.lt.s32.totalorder %s28, 1
          %s417 = scalar_select %p416, %s28, 1
          %s418 = smul.addr %s417, 64
          %s419 = smul.addr %s418, 4
          %s420 = scalar_lea.vmem %s6, %s419
        $region56: #{dit_forward.3} parent=27 // pred_fallthru
          _
      $region28: #{dit_forward.3} parent=5 // pred_fallthru
        _
      %p421 = scmp.le.s32.totalorder 1, %s20
      %p422 = scmp.lt.s32.totalorder %s20, 5
      %p423 = pnand %p421, %p422
      %p424 = pneg %p423
      // Predicated region
      $region57: #{dit_forward.3} parent=5 // pred_check
        _
      $region58: #{dit_forward.3} parent=5 // pred_check_branch
        %426 = sbr.rel (%p423) target = $region60
      $region59: #{dit_forward.3} parent=5 // pred_region
        %s427 = ssub.s32 %s20, 1
        %s428 = sand.u32 %s99, 1
        %s429 = scalar_lea.sflag [#allocation4], %s428
        %s430 = sand.u32 %s99, 1
        %s431 = smul.addr %s430, 22
        %s432 = scalar_lea.vmem [#allocation3], %s431
        // Predicated region
        $region61: #{dit_forward.3} parent=59 // pred_check
          %p433 = pneg %p112
        $region62: #{dit_forward.3} parent=59 // pred_check_branch
          %435 = sbr.rel (%p433) target = $region64
        $region63: #{dit_forward.3} parent=59 // pred_region
          %437 = dma.done %s429, 352
        $region64: #{dit_forward.3} parent=59 // pred_fallthru
          _
        // Predicated region
        $region65: #{dit_forward.3} parent=59 // pred_check
          %p438 = pneg %p237
        $region66: #{dit_forward.3} parent=59 // pred_check_branch
          %440 = sbr.rel (%p438) target = $region68
        $region67: #{dit_forward.3} parent=59 // pred_region
          %442 = dma.done [#allocation6], 32
        $region68: #{dit_forward.3} parent=59 // pred_fallthru
          _
        // Predicated region
        $region69: #{dit_forward.3} parent=59 // pred_check
          %p443 = pneg %p279
        $region70: #{dit_forward.3} parent=59 // pred_check_branch
          %445 = sbr.rel (%p443) target = $region72
        $region71: #{dit_forward.3} parent=59 // pred_region
          %447 = dma.done [#allocation6], 16
        $region72: #{dit_forward.3} parent=59 // pred_fallthru
          _
        %p448 = scmp.lt.s32.totalorder %s29, 1
        %s449 = scalar_select %p448, %s29, 1
        %s450 = smul.addr %s449, 2
        %s451 = smul.addr %s450, 8
        %s452 = scalar_lea.vmem %s0, %s451
        %p453 = pneg %p58
        %p454 = pneg %p55
        %p455 = scmp.lt.s32.totalorder %s30, 1
        %s456 = scalar_select %p455, %s30, 1
        %p457 = scmp.lt.s32.totalorder %s29, 1
        %s458 = scalar_select %p457, %s29, 1
        %s459 = smul.addr %s456, 2
        %s460 = sadd.s32 %s458, %s459
        %s461 = smul.addr %s460, 8
        %s462 = scalar_lea.vmem %s1, %s461
        %p463 = pneg %p86
        %p464 = pneg %p83
        %s465 = sand.u32 %s99, 1
        %s466 = scalar_lea.sflag [#allocation4], %s465
        %s467 = sand.u32 %s99, 1
        %s468 = smul.addr %s467, 22
        %s469 = scalar_lea.vmem [#allocation3], %s468
        %p470 = pneg %p112
        %p471 = pneg %p109
        %p472 = scmp.lt.s32.totalorder %s30, 1
        %s473 = scalar_select %p472, %s30, 1
        %s474 = smul.addr %s473, 192
        %s475 = smul.addr %s474, 4
        %s476 = scalar_lea.vmem %s3, %s475
        %p477 = pneg %p138
        %p478 = pneg %p135
        %p479 = scmp.lt.s32.totalorder %s30, 1
        %s480 = scalar_select %p479, %s30, 1
        %s481 = smul.addr %s480, 64
        %s482 = smul.addr %s481, 4
        %s483 = scalar_lea.vmem %s4, %s482
        %p484 = pneg %p164
        %p485 = pneg %p161
        %p486 = scmp.lt.s32.totalorder %s30, 1
        %s487 = scalar_select %p486, %s30, 1
        %s488 = smul.addr %s487, 64
        %s489 = smul.addr %s488, 4
        %s490 = scalar_lea.vmem %s5, %s489
        %p491 = pneg %p190
        %p492 = pneg %p187
        %p493 = scmp.lt.s32.totalorder %s30, 1
        %s494 = scalar_select %p493, %s30, 1
        %s495 = smul.addr %s494, 64
        %s496 = smul.addr %s495, 4
        %s497 = scalar_lea.vmem %s6, %s496
        %p498 = pneg %p216
        %p499 = pneg %p213
        %p500 = pneg %p237
        %p501 = pneg %p234
        %p502 = pneg %p258
        %p503 = pneg %p255
        %p504 = pneg %p279
        %p505 = pneg %p276
        %p506 = pneg %p305
        %p507 = pneg %p302
        %p508 = scmp.lt.s32.totalorder %s29, 1
        %s509 = scalar_select %p508, %s29, 1
        %s510 = smul.addr %s509, 2
        %s511 = smul.addr %s510, 8
        %s512 = scalar_lea.vmem %s10, %s511
        %p513 = scmp.lt.s32.totalorder %s29, 1
        %s514 = scalar_select %p513, %s29, 1
        %s515 = smul.addr %s514, 2
        %s516 = smul.addr %s515, 8
        %s517 = scalar_lea.vmem %s0, %s516
        %p518 = scmp.lt.s32.totalorder %s30, 1
        %s519 = scalar_select %p518, %s30, 1
        %p520 = scmp.lt.s32.totalorder %s29, 1
        %s521 = scalar_select %p520, %s29, 1
        %s522 = smul.addr %s519, 2
        %s523 = sadd.s32 %s521, %s522
        %s524 = smul.addr %s523, 8
        %s525 = scalar_lea.vmem %s1, %s524
        %p526 = scmp.lt.s32.totalorder %s30, 1
        %s527 = scalar_select %p526, %s30, 1
        %s528 = smul.addr %s527, 192
        %s529 = smul.addr %s528, 4
        %s530 = scalar_lea.vmem %s3, %s529
        %p531 = scmp.lt.s32.totalorder %s30, 1
        %s532 = scalar_select %p531, %s30, 1
        %s533 = smul.addr %s532, 64
        %s534 = smul.addr %s533, 4
        %s535 = scalar_lea.vmem %s4, %s534
        %p536 = scmp.lt.s32.totalorder %s30, 1
        %s537 = scalar_select %p536, %s30, 1
        %s538 = smul.addr %s537, 64
        %s539 = smul.addr %s538, 4
        %s540 = scalar_lea.vmem %s5, %s539
        %p541 = scmp.lt.s32.totalorder %s30, 1
        %s542 = scalar_select %p541, %s30, 1
        %s543 = smul.addr %s542, 64
        %s544 = smul.addr %s543, 4
        %s545 = scalar_lea.vmem %s6, %s544
        %p546 = scmp.lt.s32.totalorder %s29, 1
        %s547 = scalar_select %p546, %s29, 1
        %s548 = smul.addr %s547, 2
        %s549 = smul.addr %s548, 8
        %s550 = scalar_lea.vmem %s10, %s549
        %p552 = scmp.eq.s32.totalorder %s30, 0
        // Predicated region
        $region73: #{dit_forward.3} parent=59 // pred_check
          %p553 = pneg %p552
        $region74: #{dit_forward.3} parent=59 // pred_check_branch
          %555 = sbr.rel (%p553) target = $region76
        $region75: #{dit_forward.3} parent=59 // pred_region
          %v556 = vld [vmem:[%s517] sm:$0xff]
          %v557 = vld [vmem:[%s517 + $0x8] sm:$0xff]
          %558 = vst [vmem:[#allocation2] sm:$0xff] %v556
          %559 = vst [vmem:[#allocation2 + $0x8] sm:$0xff] %v557
        $region76: #{dit_forward.3} parent=59 // pred_fallthru
          _
        %v560 = vld [vmem:[#allocation2] sm:$0xff]
        %v561 = vld [vmem:[#allocation2 + $0x8] sm:$0xff]
        %v562 = vld [vmem:[%s525] sm:$0x3f]
        %v563 = vld [vmem:[%s432] sm:$0x1]
        %v564 = vld [vmem:[%s432 + $0x1] sm:$0x1]
        %565 = vadd.xlane.f32.xlu0 %v560
        %v566 = vpop.xlane.xlu0 %565
        %567 = vadd.xlane.f32.xlu0 %v561
        %v568 = vpop.xlane.xlu0 %567
        %v569 = vrcp.pop 128.0
        %v570 = vmul.f32 128.0, %v569
        %v571 = vsub.f32 1.0, %v570
        %v572 = vmul.f32 %v569, %v571
        %v573 = vadd.f32 %v569, %v572
        %vm574 = vweird.f32 %v569
        %v575 = vsel %vm574, %v569, %v573
        %v576 = vmul.f32 %v566, %v575
        %v577 = vmul.f32 %v568, %v575
        %v578 = vmul.f32 %v560, %v560
        %v579 = vmul.f32 %v561, %v561
        %580 = vadd.xlane.f32.xlu0 %v578
        %v581 = vpop.xlane.xlu0 %580
        %582 = vadd.xlane.f32.xlu0 %v579
        %v583 = vpop.xlane.xlu0 %582
        %v584 = vmul.f32 %v581, %v575
        %v585 = vmul.f32 %v583, %v575
        %v586 = vmul.f32 %v576, %v576
        %v587 = vmul.f32 %v577, %v577
        %v588 = vsub.f32 %v584, %v586
        %v589 = vsub.f32 %v585, %v587
        %v590 = vmax.f32 %v588, 0.0
        %v591 = vmax.f32 %v589, 0.0
        %v592 = vsub.f32 %v560, %v576
        %v593 = vsub.f32 %v561, %v577
        %v594 = vadd.f32 %v590, 1e-05
        %v595 = vadd.f32 %v591, 1e-05
        %v596 = vrsqrt.pop %v594
        %v597 = vmul.f32 %v596, %v594
        %v598 = vmul.f32 %v597, %v596
        %v599 = vmul.f32 0.5, %v598
        %v600 = vsub.f32 1.5, %v599
        %v601 = vmul.f32 %v596, %v600
        %vm602 = vweird.f32 %v594
        %vm603 = vweird.f32 %v596
        %vm604 = vmor %vm602, %vm603
        %v605 = vsel %vm604, %v596, %v601
        %v606 = vrsqrt.pop %v595
        %v607 = vmul.f32 %v606, %v595
        %v608 = vmul.f32 %v607, %v606
        %v609 = vmul.f32 0.5, %v608
        %v610 = vsub.f32 1.5, %v609
        %v611 = vmul.f32 %v606, %v610
        %vm612 = vweird.f32 %v595
        %vm613 = vweird.f32 %v606
        %vm614 = vmor %vm612, %vm613
        %v615 = vsel %vm614, %v606, %v611
        %v616 = vmul.f32 %v592, %v605
        %v617 = vmul.f32 %v593, %v615
        %v619 = vperm.slane %v563, 0
        %v621 = vmul.f32 %v616, %v619
        %v622 = vmul.f32 %v617, %v619
        %v624 = vperm.slane %v564, 0
        %v626 = vadd.f32 %v621, %v624
        %v627 = vadd.f32 %v622, %v624
        %v628 = vadd.f32 %v562, 1.0
        %v629 = vperm.slane %v628, 0
        %v630 = vmul.f32 %v626, %v629
        %v631 = vmul.f32 %v627, %v629
        %v632 = vperm.slane %v562, 1
        %v633 = vadd.f32 %v630, %v632
        %v634 = vadd.f32 %v631, %v632
        %v635 = vpack.c.bf16 %v634, %v633
        %v636 = vld [vmem:[%s530] sm:$0xff]
        %v637 = vld [vmem:[%s530 + $0x8] sm:$0xff]
        %v638 = vld [vmem:[%s530 + $0x10] sm:$0xff]
        %v639 = vld [vmem:[%s530 + $0x18] sm:$0xff]
        %v640 = vld [vmem:[%s530 + $0x20] sm:$0xff]
        %v641 = vld [vmem:[%s530 + $0x28] sm:$0xff]
        %v642 = vld [vmem:[%s530 + $0x30] sm:$0xff]
        %v643 = vld [vmem:[%s530 + $0x38] sm:$0xff]
        %v644 = vld [vmem:[%s530 + $0x40] sm:$0xff]
        %v645 = vld [vmem:[%s530 + $0x48] sm:$0xff]
        %v646 = vld [vmem:[%s530 + $0x50] sm:$0xff]
        %v647 = vld [vmem:[%s530 + $0x58] sm:$0xff]
        %v648 = vld [vmem:[%s530 + $0x60] sm:$0xff]
        %v649 = vld [vmem:[%s530 + $0x68] sm:$0xff]
        %v650 = vld [vmem:[%s530 + $0x70] sm:$0xff]
        %v651 = vld [vmem:[%s530 + $0x78] sm:$0xff]
        %v652 = vld [vmem:[%s530 + $0x80] sm:$0xff]
        %v653 = vld [vmem:[%s530 + $0x88] sm:$0xff]
        %v654 = vld [vmem:[%s530 + $0x90] sm:$0xff]
        %v655 = vld [vmem:[%s530 + $0x98] sm:$0xff]
        %v656 = vld [vmem:[%s530 + $0xa0] sm:$0xff]
        %v657 = vld [vmem:[%s530 + $0xa8] sm:$0xff]
        %v658 = vld [vmem:[%s530 + $0xb0] sm:$0xff]
        %v659 = vld [vmem:[%s530 + $0xb8] sm:$0xff]
        %v660 = vld [vmem:[%s530 + $0xc0] sm:$0xff]
        %v661 = vld [vmem:[%s530 + $0xc8] sm:$0xff]
        %v662 = vld [vmem:[%s530 + $0xd0] sm:$0xff]
        %v663 = vld [vmem:[%s530 + $0xd8] sm:$0xff]
        %v664 = vld [vmem:[%s530 + $0xe0] sm:$0xff]
        %v665 = vld [vmem:[%s530 + $0xe8] sm:$0xff]
        %v666 = vld [vmem:[%s530 + $0xf0] sm:$0xff]
        %v667 = vld [vmem:[%s530 + $0xf8] sm:$0xff]
        %v668 = vld [vmem:[%s530 + $0x100] sm:$0xff]
        %v669 = vld [vmem:[%s530 + $0x108] sm:$0xff]
        %v670 = vld [vmem:[%s530 + $0x110] sm:$0xff]
        %v671 = vld [vmem:[%s530 + $0x118] sm:$0xff]
        %v672 = vld [vmem:[%s530 + $0x120] sm:$0xff]
        %v673 = vld [vmem:[%s530 + $0x128] sm:$0xff]
        %v674 = vld [vmem:[%s530 + $0x130] sm:$0xff]
        %v675 = vld [vmem:[%s530 + $0x138] sm:$0xff]
        %v676 = vld [vmem:[%s530 + $0x140] sm:$0xff]
        %v677 = vld [vmem:[%s530 + $0x148] sm:$0xff]
        %v678 = vld [vmem:[%s530 + $0x150] sm:$0xff]
        %v679 = vld [vmem:[%s530 + $0x158] sm:$0xff]
        %v680 = vld [vmem:[%s530 + $0x160] sm:$0xff]
        %v681 = vld [vmem:[%s530 + $0x168] sm:$0xff]
        %v682 = vld [vmem:[%s530 + $0x170] sm:$0xff]
        %v683 = vld [vmem:[%s530 + $0x178] sm:$0xff]
        %v684 = vld [vmem:[%s530 + $0x180] sm:$0xff]
        %v685 = vld [vmem:[%s530 + $0x188] sm:$0xff]
        %v686 = vld [vmem:[%s530 + $0x190] sm:$0xff]
        %v687 = vld [vmem:[%s530 + $0x198] sm:$0xff]
        %v688 = vld [vmem:[%s530 + $0x1a0] sm:$0xff]
        %v689 = vld [vmem:[%s530 + $0x1a8] sm:$0xff]
        %v690 = vld [vmem:[%s530 + $0x1b0] sm:$0xff]
        %v691 = vld [vmem:[%s530 + $0x1b8] sm:$0xff]
        %v692 = vld [vmem:[%s530 + $0x1c0] sm:$0xff]
        %v693 = vld [vmem:[%s530 + $0x1c8] sm:$0xff]
        %v694 = vld [vmem:[%s530 + $0x1d0] sm:$0xff]
        %v695 = vld [vmem:[%s530 + $0x1d8] sm:$0xff]
        %v696 = vld [vmem:[%s530 + $0x1e0] sm:$0xff]
        %v697 = vld [vmem:[%s530 + $0x1e8] sm:$0xff]
        %v698 = vld [vmem:[%s530 + $0x1f0] sm:$0xff]
        %v699 = vld [vmem:[%s530 + $0x1f8] sm:$0xff]
        %v700 = vld [vmem:[%s530 + $0x200] sm:$0xff]
        %v701 = vld [vmem:[%s530 + $0x208] sm:$0xff]
        %v702 = vld [vmem:[%s530 + $0x210] sm:$0xff]
        %v703 = vld [vmem:[%s530 + $0x218] sm:$0xff]
        %v704 = vld [vmem:[%s530 + $0x220] sm:$0xff]
        %v705 = vld [vmem:[%s530 + $0x228] sm:$0xff]
        %v706 = vld [vmem:[%s530 + $0x230] sm:$0xff]
        %v707 = vld [vmem:[%s530 + $0x238] sm:$0xff]
        %v708 = vld [vmem:[%s530 + $0x240] sm:$0xff]
        %v709 = vld [vmem:[%s530 + $0x248] sm:$0xff]
        %v710 = vld [vmem:[%s530 + $0x250] sm:$0xff]
        %v711 = vld [vmem:[%s530 + $0x258] sm:$0xff]
        %v712 = vld [vmem:[%s530 + $0x260] sm:$0xff]
        %v713 = vld [vmem:[%s530 + $0x268] sm:$0xff]
        %v714 = vld [vmem:[%s530 + $0x270] sm:$0xff]
        %v715 = vld [vmem:[%s530 + $0x278] sm:$0xff]
        %v716 = vld [vmem:[%s530 + $0x280] sm:$0xff]
        %v717 = vld [vmem:[%s530 + $0x288] sm:$0xff]
        %v718 = vld [vmem:[%s530 + $0x290] sm:$0xff]
        %v719 = vld [vmem:[%s530 + $0x298] sm:$0xff]
        %v720 = vld [vmem:[%s530 + $0x2a0] sm:$0xff]
        %v721 = vld [vmem:[%s530 + $0x2a8] sm:$0xff]
        %v722 = vld [vmem:[%s530 + $0x2b0] sm:$0xff]
        %v723 = vld [vmem:[%s530 + $0x2b8] sm:$0xff]
        %v724 = vld [vmem:[%s530 + $0x2c0] sm:$0xff]
        %v725 = vld [vmem:[%s530 + $0x2c8] sm:$0xff]
        %v726 = vld [vmem:[%s530 + $0x2d0] sm:$0xff]
        %v727 = vld [vmem:[%s530 + $0x2d8] sm:$0xff]
        %v728 = vld [vmem:[%s530 + $0x2e0] sm:$0xff]
        %v729 = vld [vmem:[%s530 + $0x2e8] sm:$0xff]
        %v730 = vld [vmem:[%s530 + $0x2f0] sm:$0xff]
        %v731 = vld [vmem:[%s530 + $0x2f8] sm:$0xff]
        %v732 = vld [vmem:[%s432 + $0x6] sm:$0xff]
        %v733 = vld [vmem:[%s432 + $0xe] sm:$0xf]
        %v736 = vperm.slane %v732, 0
        %v737 = vperm.slane %v732, 1
        %v738 = vperm.slane %v732, 2
        %v739 = vperm.slane %v732, 3
        %v740 = vperm.slane %v732, 4
        %v741 = vperm.slane %v732, 5
        %v742 = vperm.slane %v732, 6
        %v743 = vperm.slane %v732, 7
        %v744 = vperm.slane %v733, 0
        %v745 = vperm.slane %v733, 1
        %v746 = vperm.slane %v733, 2
        %v747 = vperm.slane %v733, 3
        %v856 = vunpack.c.l.b16 %v636
        %v857 = vunpack.c.h.b16 %v636
        %v858 = vunpack.c.l.b16 %v637
        %v859 = vunpack.c.h.b16 %v637
        %v860 = vunpack.c.l.b16 %v638
        %v861 = vunpack.c.h.b16 %v638
        %v862 = vunpack.c.l.b16 %v639
        %v863 = vunpack.c.h.b16 %v639
        %v864 = vunpack.c.l.b16 %v640
        %v865 = vunpack.c.h.b16 %v640
        %v866 = vunpack.c.l.b16 %v641
        %v867 = vunpack.c.h.b16 %v641
        %v868 = vunpack.c.l.b16 %v642
        %v869 = vunpack.c.h.b16 %v642
        %v870 = vunpack.c.l.b16 %v643
        %v871 = vunpack.c.h.b16 %v643
        %v872 = vunpack.c.l.b16 %v644
        %v873 = vunpack.c.h.b16 %v644
        %v874 = vunpack.c.l.b16 %v645
        %v875 = vunpack.c.h.b16 %v645
        %v876 = vunpack.c.l.b16 %v646
        %v877 = vunpack.c.h.b16 %v646
        %v878 = vunpack.c.l.b16 %v647
        %v879 = vunpack.c.h.b16 %v647
        %v880 = vunpack.c.l.b16 %v648
        %v881 = vunpack.c.h.b16 %v648
        %v882 = vunpack.c.l.b16 %v649
        %v883 = vunpack.c.h.b16 %v649
        %v884 = vunpack.c.l.b16 %v650
        %v885 = vunpack.c.h.b16 %v650
        %v886 = vunpack.c.l.b16 %v651
        %v887 = vunpack.c.h.b16 %v651
        %v888 = vunpack.c.l.b16 %v652
        %v889 = vunpack.c.h.b16 %v652
        %v890 = vunpack.c.l.b16 %v653
        %v891 = vunpack.c.h.b16 %v653
        %v892 = vunpack.c.l.b16 %v654
        %v893 = vunpack.c.h.b16 %v654
        %v894 = vunpack.c.l.b16 %v655
        %v895 = vunpack.c.h.b16 %v655
        %v896 = vunpack.c.l.b16 %v656
        %v897 = vunpack.c.h.b16 %v656
        %v898 = vunpack.c.l.b16 %v657
        %v899 = vunpack.c.h.b16 %v657
        %v900 = vunpack.c.l.b16 %v658
        %v901 = vunpack.c.h.b16 %v658
        %v902 = vunpack.c.l.b16 %v659
        %v903 = vunpack.c.h.b16 %v659
        %v904 = vunpack.c.l.b16 %v660
        %v905 = vunpack.c.h.b16 %v660
        %v906 = vunpack.c.l.b16 %v661
        %v907 = vunpack.c.h.b16 %v661
        %v908 = vunpack.c.l.b16 %v662
        %v909 = vunpack.c.h.b16 %v662
        %v910 = vunpack.c.l.b16 %v663
        %v911 = vunpack.c.h.b16 %v663
        %v912 = vunpack.c.l.b16 %v664
        %v913 = vunpack.c.h.b16 %v664
        %v914 = vunpack.c.l.b16 %v665
        %v915 = vunpack.c.h.b16 %v665
        %v916 = vunpack.c.l.b16 %v666
        %v917 = vunpack.c.h.b16 %v666
        %v918 = vunpack.c.l.b16 %v667
        %v919 = vunpack.c.h.b16 %v667
        %v920 = vunpack.c.l.b16 %v668
        %v921 = vunpack.c.h.b16 %v668
        %v922 = vunpack.c.l.b16 %v669
        %v923 = vunpack.c.h.b16 %v669
        %v924 = vunpack.c.l.b16 %v670
        %v925 = vunpack.c.h.b16 %v670
        %v926 = vunpack.c.l.b16 %v671
        %v927 = vunpack.c.h.b16 %v671
        %v928 = vunpack.c.l.b16 %v672
        %v929 = vunpack.c.h.b16 %v672
        %v930 = vunpack.c.l.b16 %v673
        %v931 = vunpack.c.h.b16 %v673
        %v932 = vunpack.c.l.b16 %v674
        %v933 = vunpack.c.h.b16 %v674
        %v934 = vunpack.c.l.b16 %v675
        %v935 = vunpack.c.h.b16 %v675
        %v936 = vunpack.c.l.b16 %v676
        %v937 = vunpack.c.h.b16 %v676
        %v938 = vunpack.c.l.b16 %v677
        %v939 = vunpack.c.h.b16 %v677
        %v940 = vunpack.c.l.b16 %v678
        %v941 = vunpack.c.h.b16 %v678
        %v942 = vunpack.c.l.b16 %v679
        %v943 = vunpack.c.h.b16 %v679
        %v944 = vunpack.c.l.b16 %v680
        %v945 = vunpack.c.h.b16 %v680
        %v946 = vunpack.c.l.b16 %v681
        %v947 = vunpack.c.h.b16 %v681
        %v948 = vunpack.c.l.b16 %v682
        %v949 = vunpack.c.h.b16 %v682
        %v950 = vunpack.c.l.b16 %v683
        %v951 = vunpack.c.h.b16 %v683
        %v952 = vunpack.c.l.b16 %v684
        %v953 = vunpack.c.h.b16 %v684
        %v954 = vunpack.c.l.b16 %v685
        %v955 = vunpack.c.h.b16 %v685
        %v956 = vunpack.c.l.b16 %v686
        %v957 = vunpack.c.h.b16 %v686
        %v958 = vunpack.c.l.b16 %v687
        %v959 = vunpack.c.h.b16 %v687
        %v960 = vunpack.c.l.b16 %v688
        %v961 = vunpack.c.h.b16 %v688
        %v962 = vunpack.c.l.b16 %v689
        %v963 = vunpack.c.h.b16 %v689
        %v964 = vunpack.c.l.b16 %v690
        %v965 = vunpack.c.h.b16 %v690
        %v966 = vunpack.c.l.b16 %v691
        %v967 = vunpack.c.h.b16 %v691
        %v968 = vunpack.c.l.b16 %v692
        %v969 = vunpack.c.h.b16 %v692
        %v970 = vunpack.c.l.b16 %v693
        %v971 = vunpack.c.h.b16 %v693
        %v972 = vunpack.c.l.b16 %v694
        %v973 = vunpack.c.h.b16 %v694
        %v974 = vunpack.c.l.b16 %v695
        %v975 = vunpack.c.h.b16 %v695
        %v976 = vunpack.c.l.b16 %v696
        %v977 = vunpack.c.h.b16 %v696
        %v978 = vunpack.c.l.b16 %v697
        %v979 = vunpack.c.h.b16 %v697
        %v980 = vunpack.c.l.b16 %v698
        %v981 = vunpack.c.h.b16 %v698
        %v982 = vunpack.c.l.b16 %v699
        %v983 = vunpack.c.h.b16 %v699
        %v984 = vunpack.c.l.b16 %v700
        %v985 = vunpack.c.h.b16 %v700
        %v986 = vunpack.c.l.b16 %v701
        %v987 = vunpack.c.h.b16 %v701
        %v988 = vunpack.c.l.b16 %v702
        %v989 = vunpack.c.h.b16 %v702
        %v990 = vunpack.c.l.b16 %v703
        %v991 = vunpack.c.h.b16 %v703
        %v992 = vunpack.c.l.b16 %v704
        %v993 = vunpack.c.h.b16 %v704
        %v994 = vunpack.c.l.b16 %v705
        %v995 = vunpack.c.h.b16 %v705
        %v996 = vunpack.c.l.b16 %v706
        %v997 = vunpack.c.h.b16 %v706
        %v998 = vunpack.c.l.b16 %v707
        %v999 = vunpack.c.h.b16 %v707
        %v1000 = vunpack.c.l.b16 %v708
        %v1001 = vunpack.c.h.b16 %v708
        %v1002 = vunpack.c.l.b16 %v709
        %v1003 = vunpack.c.h.b16 %v709
        %v1004 = vunpack.c.l.b16 %v710
        %v1005 = vunpack.c.h.b16 %v710
        %v1006 = vunpack.c.l.b16 %v711
        %v1007 = vunpack.c.h.b16 %v711
        %v1008 = vunpack.c.l.b16 %v712
        %v1009 = vunpack.c.h.b16 %v712
        %v1010 = vunpack.c.l.b16 %v713
        %v1011 = vunpack.c.h.b16 %v713
        %v1012 = vunpack.c.l.b16 %v714
        %v1013 = vunpack.c.h.b16 %v714
        %v1014 = vunpack.c.l.b16 %v715
        %v1015 = vunpack.c.h.b16 %v715
        %v1016 = vunpack.c.l.b16 %v716
        %v1017 = vunpack.c.h.b16 %v716
        %v1018 = vunpack.c.l.b16 %v717
        %v1019 = vunpack.c.h.b16 %v717
        %v1020 = vunpack.c.l.b16 %v718
        %v1021 = vunpack.c.h.b16 %v718
        %v1022 = vunpack.c.l.b16 %v719
        %v1023 = vunpack.c.h.b16 %v719
        %v1024 = vunpack.c.l.b16 %v720
        %v1025 = vunpack.c.h.b16 %v720
        %v1026 = vunpack.c.l.b16 %v721
        %v1027 = vunpack.c.h.b16 %v721
        %v1028 = vunpack.c.l.b16 %v722
        %v1029 = vunpack.c.h.b16 %v722
        %v1030 = vunpack.c.l.b16 %v723
        %v1031 = vunpack.c.h.b16 %v723
        %v1032 = vunpack.c.l.b16 %v724
        %v1033 = vunpack.c.h.b16 %v724
        %v1034 = vunpack.c.l.b16 %v725
        %v1035 = vunpack.c.h.b16 %v725
        %v1036 = vunpack.c.l.b16 %v726
        %v1037 = vunpack.c.h.b16 %v726
        %v1038 = vunpack.c.l.b16 %v727
        %v1039 = vunpack.c.h.b16 %v727
        %v1040 = vunpack.c.l.b16 %v728
        %v1041 = vunpack.c.h.b16 %v728
        %v1042 = vunpack.c.l.b16 %v729
        %v1043 = vunpack.c.h.b16 %v729
        %v1044 = vunpack.c.l.b16 %v730
        %v1045 = vunpack.c.h.b16 %v730
        %v1046 = vunpack.c.l.b16 %v731
        %v1047 = vunpack.c.h.b16 %v731
        %v1048 = vpack.c.b16 %v868, %v856
        %v1049 = vpack.c.b16 %v869, %v857
        %v1050 = vpack.c.b16 %v870, %v858
        %v1051 = vpack.c.b16 %v871, %v859
        %v1052 = vpack.c.b16 %v872, %v860
        %v1053 = vpack.c.b16 %v873, %v861
        %v1054 = vpack.c.b16 %v874, %v862
        %v1055 = vpack.c.b16 %v875, %v863
        %v1056 = vpack.c.b16 %v876, %v864
        %v1057 = vpack.c.b16 %v877, %v865
        %v1058 = vpack.c.b16 %v878, %v866
        %v1059 = vpack.c.b16 %v879, %v867
        %v1060 = vpack.c.b16 %v892, %v880
        %v1061 = vpack.c.b16 %v893, %v881
        %v1062 = vpack.c.b16 %v894, %v882
        %v1063 = vpack.c.b16 %v895, %v883
        %v1064 = vpack.c.b16 %v896, %v884
        %v1065 = vpack.c.b16 %v897, %v885
        %v1066 = vpack.c.b16 %v898, %v886
        %v1067 = vpack.c.b16 %v899, %v887
        %v1068 = vpack.c.b16 %v900, %v888
        %v1069 = vpack.c.b16 %v901, %v889
        %v1070 = vpack.c.b16 %v902, %v890
        %v1071 = vpack.c.b16 %v903, %v891
        %v1072 = vpack.c.b16 %v916, %v904
        %v1073 = vpack.c.b16 %v917, %v905
        %v1074 = vpack.c.b16 %v918, %v906
        %v1075 = vpack.c.b16 %v919, %v907
        %v1076 = vpack.c.b16 %v920, %v908
        %v1077 = vpack.c.b16 %v921, %v909
        %v1078 = vpack.c.b16 %v922, %v910
        %v1079 = vpack.c.b16 %v923, %v911
        %v1080 = vpack.c.b16 %v924, %v912
        %v1081 = vpack.c.b16 %v925, %v913
        %v1082 = vpack.c.b16 %v926, %v914
        %v1083 = vpack.c.b16 %v927, %v915
        %v1084 = vpack.c.b16 %v940, %v928
        %v1085 = vpack.c.b16 %v941, %v929
        %v1086 = vpack.c.b16 %v942, %v930
        %v1087 = vpack.c.b16 %v943, %v931
        %v1088 = vpack.c.b16 %v944, %v932
        %v1089 = vpack.c.b16 %v945, %v933
        %v1090 = vpack.c.b16 %v946, %v934
        %v1091 = vpack.c.b16 %v947, %v935
        %v1092 = vpack.c.b16 %v948, %v936
        %v1093 = vpack.c.b16 %v949, %v937
        %v1094 = vpack.c.b16 %v950, %v938
        %v1095 = vpack.c.b16 %v951, %v939
        %v1096 = vpack.c.b16 %v964, %v952
        %v1097 = vpack.c.b16 %v965, %v953
        %v1098 = vpack.c.b16 %v966, %v954
        %v1099 = vpack.c.b16 %v967, %v955
        %v1100 = vpack.c.b16 %v968, %v956
        %v1101 = vpack.c.b16 %v969, %v957
        %v1102 = vpack.c.b16 %v970, %v958
        %v1103 = vpack.c.b16 %v971, %v959
        %v1104 = vpack.c.b16 %v972, %v960
        %v1105 = vpack.c.b16 %v973, %v961
        %v1106 = vpack.c.b16 %v974, %v962
        %v1107 = vpack.c.b16 %v975, %v963
        %v1108 = vpack.c.b16 %v988, %v976
        %v1109 = vpack.c.b16 %v989, %v977
        %v1110 = vpack.c.b16 %v990, %v978
        %v1111 = vpack.c.b16 %v991, %v979
        %v1112 = vpack.c.b16 %v992, %v980
        %v1113 = vpack.c.b16 %v993, %v981
        %v1114 = vpack.c.b16 %v994, %v982
        %v1115 = vpack.c.b16 %v995, %v983
        %v1116 = vpack.c.b16 %v996, %v984
        %v1117 = vpack.c.b16 %v997, %v985
        %v1118 = vpack.c.b16 %v998, %v986
        %v1119 = vpack.c.b16 %v999, %v987
        %v1120 = vpack.c.b16 %v1012, %v1000
        %v1121 = vpack.c.b16 %v1013, %v1001
        %v1122 = vpack.c.b16 %v1014, %v1002
        %v1123 = vpack.c.b16 %v1015, %v1003
        %v1124 = vpack.c.b16 %v1016, %v1004
        %v1125 = vpack.c.b16 %v1017, %v1005
        %v1126 = vpack.c.b16 %v1018, %v1006
        %v1127 = vpack.c.b16 %v1019, %v1007
        %v1128 = vpack.c.b16 %v1020, %v1008
        %v1129 = vpack.c.b16 %v1021, %v1009
        %v1130 = vpack.c.b16 %v1022, %v1010
        %v1131 = vpack.c.b16 %v1023, %v1011
        %v1132 = vpack.c.b16 %v1036, %v1024
        %v1133 = vpack.c.b16 %v1037, %v1025
        %v1134 = vpack.c.b16 %v1038, %v1026
        %v1135 = vpack.c.b16 %v1039, %v1027
        %v1136 = vpack.c.b16 %v1040, %v1028
        %v1137 = vpack.c.b16 %v1041, %v1029
        %v1138 = vpack.c.b16 %v1042, %v1030
        %v1139 = vpack.c.b16 %v1043, %v1031
        %v1140 = vpack.c.b16 %v1044, %v1032
        %v1141 = vpack.c.b16 %v1045, %v1033
        %v1142 = vpack.c.b16 %v1046, %v1034
        %v1143 = vpack.c.b16 %v1047, %v1035
        %1240 = vmatpush.bf16.msra.mxu0 %v1132
        %1241 = vmatpush.bf16.msra.mxu0 %v1120
        %1242 = vmatpush.bf16.msra.mxu0 %v1108
        %1243 = vmatpush.bf16.msra.mxu0 %v1096
        %1244 = vmatpush.bf16.msra.mxu0 %v1084
        %1245 = vmatpush.bf16.msra.mxu0 %v1072
        %1246 = vmatpush.bf16.msra.mxu0 %v1060
        %1247 = vmatpush.bf16.msra.mxu0 %v1048
        %1248 = vmatmul.bf16.gmra.mxu0 %v635
        %v1249 = vpop.f32.mrf.mxu0
        %v1250 = vadd.f32 %v736, %v1249
        %v1251 = vpop.f32.mrf.mxu0
        %v1252 = vadd.f32 %v736, %v1251
        %1253 = vdwg.mxu0
        %1254 = vmatpush.bf16.msra.mxu0 %v1133
        %1255 = vmatpush.bf16.msra.mxu0 %v1121
        %1256 = vmatpush.bf16.msra.mxu0 %v1109
        %1257 = vmatpush.bf16.msra.mxu0 %v1097
        %1258 = vmatpush.bf16.msra.mxu0 %v1085
        %1259 = vmatpush.bf16.msra.mxu0 %v1073
        %1260 = vmatpush.bf16.msra.mxu0 %v1061
        %1261 = vmatpush.bf16.msra.mxu0 %v1049
        %1262 = vmatmul.bf16.gmra.mxu0 %v635
        %v1263 = vpop.f32.mrf.mxu0
        %v1264 = vadd.f32 %v737, %v1263
        %v1265 = vpop.f32.mrf.mxu0
        %v1266 = vadd.f32 %v737, %v1265
        %1267 = vdwg.mxu0
        %1268 = vmatpush.bf16.msra.mxu0 %v1134
        %1269 = vmatpush.bf16.msra.mxu0 %v1122
        %1270 = vmatpush.bf16.msra.mxu0 %v1110
        %1271 = vmatpush.bf16.msra.mxu0 %v1098
        %1272 = vmatpush.bf16.msra.mxu0 %v1086
        %1273 = vmatpush.bf16.msra.mxu0 %v1074
        %1274 = vmatpush.bf16.msra.mxu0 %v1062
        %1275 = vmatpush.bf16.msra.mxu0 %v1050
        %1276 = vmatmul.bf16.gmra.mxu0 %v635
        %v1277 = vpop.f32.mrf.mxu0
        %v1278 = vadd.f32 %v738, %v1277
        %v1279 = vpop.f32.mrf.mxu0
        %v1280 = vadd.f32 %v738, %v1279
        %1281 = vdwg.mxu0
        %1282 = vmatpush.bf16.msra.mxu0 %v1135
        %1283 = vmatpush.bf16.msra.mxu0 %v1123
        %1284 = vmatpush.bf16.msra.mxu0 %v1111
        %1285 = vmatpush.bf16.msra.mxu0 %v1099
        %1286 = vmatpush.bf16.msra.mxu0 %v1087
        %1287 = vmatpush.bf16.msra.mxu0 %v1075
        %1288 = vmatpush.bf16.msra.mxu0 %v1063
        %1289 = vmatpush.bf16.msra.mxu0 %v1051
        %1290 = vmatmul.bf16.gmra.mxu0 %v635
        %v1291 = vpop.f32.mrf.mxu0
        %v1292 = vadd.f32 %v739, %v1291
        %v1293 = vpop.f32.mrf.mxu0
        %v1294 = vadd.f32 %v739, %v1293
        %1295 = vdwg.mxu0
        %1296 = vmatpush.bf16.msra.mxu0 %v1136
        %1297 = vmatpush.bf16.msra.mxu0 %v1124
        %1298 = vmatpush.bf16.msra.mxu0 %v1112
        %1299 = vmatpush.bf16.msra.mxu0 %v1100
        %1300 = vmatpush.bf16.msra.mxu0 %v1088
        %1301 = vmatpush.bf16.msra.mxu0 %v1076
        %1302 = vmatpush.bf16.msra.mxu0 %v1064
        %1303 = vmatpush.bf16.msra.mxu0 %v1052
        %1304 = vmatmul.bf16.gmra.mxu0 %v635
        %v1305 = vpop.f32.mrf.mxu0
        %v1306 = vadd.f32 %v740, %v1305
        %v1307 = vpop.f32.mrf.mxu0
        %v1308 = vadd.f32 %v740, %v1307
        %1309 = vdwg.mxu0
        %1310 = vmatpush.bf16.msra.mxu0 %v1137
        %1311 = vmatpush.bf16.msra.mxu0 %v1125
        %1312 = vmatpush.bf16.msra.mxu0 %v1113
        %1313 = vmatpush.bf16.msra.mxu0 %v1101
        %1314 = vmatpush.bf16.msra.mxu0 %v1089
        %1315 = vmatpush.bf16.msra.mxu0 %v1077
        %1316 = vmatpush.bf16.msra.mxu0 %v1065
        %1317 = vmatpush.bf16.msra.mxu0 %v1053
        %1318 = vmatmul.bf16.gmra.mxu0 %v635
        %v1319 = vpop.f32.mrf.mxu0
        %v1320 = vadd.f32 %v741, %v1319
        %v1321 = vpop.f32.mrf.mxu0
        %v1322 = vadd.f32 %v741, %v1321
        %1323 = vdwg.mxu0
        %1324 = vmatpush.bf16.msra.mxu0 %v1138
        %1325 = vmatpush.bf16.msra.mxu0 %v1126
        %1326 = vmatpush.bf16.msra.mxu0 %v1114
        %1327 = vmatpush.bf16.msra.mxu0 %v1102
        %1328 = vmatpush.bf16.msra.mxu0 %v1090
        %1329 = vmatpush.bf16.msra.mxu0 %v1078
        %1330 = vmatpush.bf16.msra.mxu0 %v1066
        %1331 = vmatpush.bf16.msra.mxu0 %v1054
        %1332 = vmatmul.bf16.gmra.mxu0 %v635
        %v1333 = vpop.f32.mrf.mxu0
        %v1334 = vadd.f32 %v742, %v1333
        %v1335 = vpop.f32.mrf.mxu0
        %v1336 = vadd.f32 %v742, %v1335
        %1337 = vdwg.mxu0
        %1338 = vmatpush.bf16.msra.mxu0 %v1139
        %1339 = vmatpush.bf16.msra.mxu0 %v1127
        %1340 = vmatpush.bf16.msra.mxu0 %v1115
        %1341 = vmatpush.bf16.msra.mxu0 %v1103
        %1342 = vmatpush.bf16.msra.mxu0 %v1091
        %1343 = vmatpush.bf16.msra.mxu0 %v1079
        %1344 = vmatpush.bf16.msra.mxu0 %v1067
        %1345 = vmatpush.bf16.msra.mxu0 %v1055
        %1346 = vmatmul.bf16.gmra.mxu0 %v635
        %v1347 = vpop.f32.mrf.mxu0
        %v1348 = vadd.f32 %v743, %v1347
        %v1349 = vpop.f32.mrf.mxu0
        %v1350 = vadd.f32 %v743, %v1349
        %1351 = vdwg.mxu0
        %1352 = vmatpush.bf16.msra.mxu0 %v1140
        %1353 = vmatpush.bf16.msra.mxu0 %v1128
        %1354 = vmatpush.bf16.msra.mxu0 %v1116
        %1355 = vmatpush.bf16.msra.mxu0 %v1104
        %1356 = vmatpush.bf16.msra.mxu0 %v1092
        %1357 = vmatpush.bf16.msra.mxu0 %v1080
        %1358 = vmatpush.bf16.msra.mxu0 %v1068
        %1359 = vmatpush.bf16.msra.mxu0 %v1056
        %1360 = vmatmul.bf16.gmra.mxu0 %v635
        %v1361 = vpop.f32.mrf.mxu0
        %v1362 = vadd.f32 %v744, %v1361
        %v1363 = vpop.f32.mrf.mxu0
        %v1364 = vadd.f32 %v744, %v1363
        %1365 = vdwg.mxu0
        %1366 = vmatpush.bf16.msra.mxu0 %v1141
        %1367 = vmatpush.bf16.msra.mxu0 %v1129
        %1368 = vmatpush.bf16.msra.mxu0 %v1117
        %1369 = vmatpush.bf16.msra.mxu0 %v1105
        %1370 = vmatpush.bf16.msra.mxu0 %v1093
        %1371 = vmatpush.bf16.msra.mxu0 %v1081
        %1372 = vmatpush.bf16.msra.mxu0 %v1069
        %1373 = vmatpush.bf16.msra.mxu0 %v1057
        %1374 = vmatmul.bf16.gmra.mxu0 %v635
        %v1375 = vpop.f32.mrf.mxu0
        %v1376 = vadd.f32 %v745, %v1375
        %v1377 = vpop.f32.mrf.mxu0
        %v1378 = vadd.f32 %v745, %v1377
        %1379 = vdwg.mxu0
        %1380 = vmatpush.bf16.msra.mxu0 %v1142
        %1381 = vmatpush.bf16.msra.mxu0 %v1130
        %1382 = vmatpush.bf16.msra.mxu0 %v1118
        %1383 = vmatpush.bf16.msra.mxu0 %v1106
        %1384 = vmatpush.bf16.msra.mxu0 %v1094
        %1385 = vmatpush.bf16.msra.mxu0 %v1082
        %1386 = vmatpush.bf16.msra.mxu0 %v1070
        %1387 = vmatpush.bf16.msra.mxu0 %v1058
        %1388 = vmatmul.bf16.gmra.mxu0 %v635
        %v1389 = vpop.f32.mrf.mxu0
        %v1390 = vadd.f32 %v746, %v1389
        %v1391 = vpop.f32.mrf.mxu0
        %v1392 = vadd.f32 %v746, %v1391
        %1393 = vdwg.mxu0
        %1394 = vmatpush.bf16.msra.mxu0 %v1143
        %1395 = vmatpush.bf16.msra.mxu0 %v1131
        %1396 = vmatpush.bf16.msra.mxu0 %v1119
        %1397 = vmatpush.bf16.msra.mxu0 %v1107
        %1398 = vmatpush.bf16.msra.mxu0 %v1095
        %1399 = vmatpush.bf16.msra.mxu0 %v1083
        %1400 = vmatpush.bf16.msra.mxu0 %v1071
        %1401 = vmatpush.bf16.msra.mxu0 %v1059
        %1402 = vmatmul.bf16.gmra.mxu0 %v635
        %v1403 = vpop.f32.mrf.mxu0
        %v1404 = vadd.f32 %v747, %v1403
        %v1405 = vpop.f32.mrf.mxu0
        %v1406 = vadd.f32 %v747, %v1405
        %1407 = vdwg.mxu0
        %v1408 = vpack.c.bf16 %v1250, %v1250
        %v1409 = vpack.c.bf16 %v1252, %v1252
        %v1410 = vpack.c.bf16 %v1306, %v1306
        %v1411 = vpack.c.bf16 %v1308, %v1308
        %v1412 = vpack.c.bf16 %v1362, %v1362
        %v1413 = vpack.c.bf16 %v1364, %v1364
        %v1416 = vunpack.c.l.b16 %v1408
        %v1417 = vunpack.c.l.b16 %v1409
        %v1418 = vpack.c.b16 %v1417, %v1416
        %v1422 = vunpack.c.l.b16 %v1410
        %v1423 = vunpack.c.l.b16 %v1411
        %v1424 = vpack.c.b16 %v1423, %v1422
        %1426 = vmatpush.bf16.xpose.msra.mxu0 0
        %1427 = vmatpush.bf16.xpose.msra.mxu0 0
        %1428 = vmatpush.bf16.xpose.msra.mxu0 0
        %1429 = vmatpush.bf16.xpose.msra.mxu0 0
        %1430 = vmatpush.bf16.xpose.msra.mxu0 0
        %1431 = vmatpush.bf16.xpose.msra.mxu0 0
        %1432 = vmatpush.bf16.xpose.msra.mxu0 0
        %1433 = vmatpush.bf16.xpose.msra.mxu0 %v1424
        %1434 = vmatmul.bf16.gmra.mxu0 %v1418
        %v1435 = vpop.f32.mrf.mxu0
        %v1436 = vadd.f32 0.0, %v1435
        %v1437 = vpop.f32.mrf.mxu0
        %v1438 = vadd.f32 0.0, %v1437
        %1439 = vdwg.mxu0
        %v1440 = vmul.f32 %v1436, 0.25
        %v1441 = vmul.f32 %v1438, 0.25
        %vm1442 = vcmask 130048
        %v1443 = vsel %vm1442, %v1440, -inf
        %1444 = vmax.xlane.f32.xlu0 %v1443
        %v1445 = vpop.xlane.xlu0 %1444
        %v1446 = vsel %vm1442, %v1441, -inf
        %1447 = vmax.xlane.f32.xlu0 %v1446
        %v1448 = vpop.xlane.xlu0 %1447
        %v1449 = vsub.f32 %v1440, %v1445
        %v1450 = vsub.f32 %v1441, %v1448
        %v1451 = vmul.f32 %v1449, 1.442695
        %v1452 = vpow.pop %v1451
        %v1453 = vmul.f32 %v1450, 1.442695
        %v1454 = vpow.pop %v1453
        %v1455 = vsel %vm1442, %v1452, 0.0
        %1456 = vadd.xlane.f32.xlu0 %v1455
        %v1457 = vpop.xlane.xlu0 %1456
        %v1458 = vsel %vm1442, %v1454, 0.0
        %1459 = vadd.xlane.f32.xlu0 %v1458
        %v1460 = vpop.xlane.xlu0 %1459
        %v1461 = vrcp.pop %v1457
        %v1462 = vrcp.pop %v1460
        %v1463 = vmul.f32 %v1452, %v1461
        %v1464 = vmul.f32 %v1454, %v1462
        %v1465 = vpack.c.bf16 %v1463, %v1463
        %v1466 = vpack.c.bf16 %v1464, %v1464
        %v1469 = vunpack.c.l.b16 %v1465
        %v1470 = vunpack.c.l.b16 %v1466
        %v1471 = vpack.c.b16 %v1470, %v1469
        %v1474 = vunpack.c.l.b16 %v1412
        %v1475 = vunpack.c.l.b16 %v1413
        %v1476 = vpack.c.b16 %v1475, %v1474
        %v1479 = vsel %vm1442, %v1471, 0
        %1481 = vmatpush.bf16.msra.mxu0 0
        %1482 = vmatpush.bf16.msra.mxu0 0
        %1483 = vmatpush.bf16.msra.mxu0 0
        %1484 = vmatpush.bf16.msra.mxu0 0
        %1485 = vmatpush.bf16.msra.mxu0 0
        %1486 = vmatpush.bf16.msra.mxu0 0
        %1487 = vmatpush.bf16.msra.mxu0 0
        %1488 = vmatpush.bf16.msra.mxu0 %v1476
        %1489 = vmatmul.bf16.gmra.mxu0 %v1479
        %v1490 = vpop.f32.mrf.mxu0
        %v1491 = vadd.f32 0.0, %v1490
        %v1492 = vpop.f32.mrf.mxu0
        %v1493 = vadd.f32 0.0, %v1492
        %1494 = vdwg.mxu0
        %v1495 = vpack.c.bf16 %v1493, %v1491
        %v1496 = vld [vmem:[%s535] sm:$0xf]
        %v1497 = vld [vmem:[%s535 + $0x4] sm:$0xf]
        %v1498 = vld [vmem:[%s535 + $0x8] sm:$0xf]
        %v1499 = vld [vmem:[%s535 + $0xc] sm:$0xf]
        %v1500 = vld [vmem:[%s535 + $0x10] sm:$0xf]
        %v1501 = vld [vmem:[%s535 + $0x14] sm:$0xf]
        %v1502 = vld [vmem:[%s535 + $0x18] sm:$0xf]
        %v1503 = vld [vmem:[%s535 + $0x1c] sm:$0xf]
        %v1504 = vld [vmem:[%s535 + $0x20] sm:$0xf]
        %v1505 = vld [vmem:[%s535 + $0x24] sm:$0xf]
        %v1506 = vld [vmem:[%s535 + $0x28] sm:$0xf]
        %v1507 = vld [vmem:[%s535 + $0x2c] sm:$0xf]
        %v1508 = vld [vmem:[%s535 + $0x30] sm:$0xf]
        %v1509 = vld [vmem:[%s535 + $0x34] sm:$0xf]
        %v1510 = vld [vmem:[%s535 + $0x38] sm:$0xf]
        %v1511 = vld [vmem:[%s535 + $0x3c] sm:$0xf]
        %v1512 = vpack.c.bf16 %v1264, %v1264
        %v1513 = vpack.c.bf16 %v1266, %v1266
        %v1514 = vpack.c.bf16 %v1320, %v1320
        %v1515 = vpack.c.bf16 %v1322, %v1322
        %v1516 = vpack.c.bf16 %v1376, %v1376
        %v1517 = vpack.c.bf16 %v1378, %v1378
        %v1520 = vunpack.c.l.b16 %v1512
        %v1521 = vunpack.c.l.b16 %v1513
        %v1522 = vpack.c.b16 %v1521, %v1520
        %v1526 = vunpack.c.l.b16 %v1514
        %v1527 = vunpack.c.l.b16 %v1515
        %v1528 = vpack.c.b16 %v1527, %v1526
        %1530 = vmatpush.bf16.xpose.msra.mxu0 0
        %1531 = vmatpush.bf16.xpose.msra.mxu0 0
        %1532 = vmatpush.bf16.xpose.msra.mxu0 0
        %1533 = vmatpush.bf16.xpose.msra.mxu0 0
        %1534 = vmatpush.bf16.xpose.msra.mxu0 0
        %1535 = vmatpush.bf16.xpose.msra.mxu0 0
        %1536 = vmatpush.bf16.xpose.msra.mxu0 0
        %1537 = vmatpush.bf16.xpose.msra.mxu0 %v1528
        %1538 = vmatmul.bf16.gmra.mxu0 %v1522
        %v1539 = vpop.f32.mrf.mxu0
        %v1540 = vadd.f32 0.0, %v1539
        %v1541 = vpop.f32.mrf.mxu0
        %v1542 = vadd.f32 0.0, %v1541
        %1543 = vdwg.mxu0
        %v1544 = vmul.f32 %v1540, 0.25
        %v1545 = vmul.f32 %v1542, 0.25
        %v1546 = vsel %vm1442, %v1544, -inf
        %1547 = vmax.xlane.f32.xlu0 %v1546
        %v1548 = vpop.xlane.xlu0 %1547
        %v1549 = vsel %vm1442, %v1545, -inf
        %1550 = vmax.xlane.f32.xlu0 %v1549
        %v1551 = vpop.xlane.xlu0 %1550
        %v1552 = vsub.f32 %v1544, %v1548
        %v1553 = vsub.f32 %v1545, %v1551
        %v1554 = vmul.f32 %v1552, 1.442695
        %v1555 = vpow.pop %v1554
        %v1556 = vmul.f32 %v1553, 1.442695
        %v1557 = vpow.pop %v1556
        %v1558 = vsel %vm1442, %v1555, 0.0
        %1559 = vadd.xlane.f32.xlu0 %v1558
        %v1560 = vpop.xlane.xlu0 %1559
        %v1561 = vsel %vm1442, %v1557, 0.0
        %1562 = vadd.xlane.f32.xlu0 %v1561
        %v1563 = vpop.xlane.xlu0 %1562
        %v1564 = vrcp.pop %v1560
        %v1565 = vrcp.pop %v1563
        %v1566 = vmul.f32 %v1555, %v1564
        %v1567 = vmul.f32 %v1557, %v1565
        %v1568 = vpack.c.bf16 %v1566, %v1566
        %v1569 = vpack.c.bf16 %v1567, %v1567
        %v1572 = vunpack.c.l.b16 %v1568
        %v1573 = vunpack.c.l.b16 %v1569
        %v1574 = vpack.c.b16 %v1573, %v1572
        %v1577 = vunpack.c.l.b16 %v1516
        %v1578 = vunpack.c.l.b16 %v1517
        %v1579 = vpack.c.b16 %v1578, %v1577
        %v1582 = vsel %vm1442, %v1574, 0
        %1584 = vmatpush.bf16.msra.mxu0 0
        %1585 = vmatpush.bf16.msra.mxu0 0
        %1586 = vmatpush.bf16.msra.mxu0 0
        %1587 = vmatpush.bf16.msra.mxu0 0
        %1588 = vmatpush.bf16.msra.mxu0 0
        %1589 = vmatpush.bf16.msra.mxu0 0
        %1590 = vmatpush.bf16.msra.mxu0 0
        %1591 = vmatpush.bf16.msra.mxu0 %v1579
        %1592 = vmatmul.bf16.gmra.mxu0 %v1582
        %v1593 = vpop.f32.mrf.mxu0
        %v1594 = vadd.f32 0.0, %v1593
        %v1595 = vpop.f32.mrf.mxu0
        %v1596 = vadd.f32 0.0, %v1595
        %1597 = vdwg.mxu0
        %v1598 = vpack.c.bf16 %v1596, %v1594
        %v1599 = vld [vmem:[%s535 + $0x40] sm:$0xf]
        %v1600 = vld [vmem:[%s535 + $0x44] sm:$0xf]
        %v1601 = vld [vmem:[%s535 + $0x48] sm:$0xf]
        %v1602 = vld [vmem:[%s535 + $0x4c] sm:$0xf]
        %v1603 = vld [vmem:[%s535 + $0x50] sm:$0xf]
        %v1604 = vld [vmem:[%s535 + $0x54] sm:$0xf]
        %v1605 = vld [vmem:[%s535 + $0x58] sm:$0xf]
        %v1606 = vld [vmem:[%s535 + $0x5c] sm:$0xf]
        %v1607 = vld [vmem:[%s535 + $0x60] sm:$0xf]
        %v1608 = vld [vmem:[%s535 + $0x64] sm:$0xf]
        %v1609 = vld [vmem:[%s535 + $0x68] sm:$0xf]
        %v1610 = vld [vmem:[%s535 + $0x6c] sm:$0xf]
        %v1611 = vld [vmem:[%s535 + $0x70] sm:$0xf]
        %v1612 = vld [vmem:[%s535 + $0x74] sm:$0xf]
        %v1613 = vld [vmem:[%s535 + $0x78] sm:$0xf]
        %v1614 = vld [vmem:[%s535 + $0x7c] sm:$0xf]
        %v1631 = vunpack.c.l.b16 %v1599
        %v1632 = vunpack.c.l.b16 %v1600
        %v1633 = vunpack.c.l.b16 %v1601
        %v1634 = vunpack.c.l.b16 %v1602
        %v1635 = vunpack.c.l.b16 %v1603
        %v1636 = vunpack.c.l.b16 %v1604
        %v1637 = vunpack.c.l.b16 %v1605
        %v1638 = vunpack.c.l.b16 %v1606
        %v1639 = vunpack.c.l.b16 %v1607
        %v1640 = vunpack.c.l.b16 %v1608
        %v1641 = vunpack.c.l.b16 %v1609
        %v1642 = vunpack.c.l.b16 %v1610
        %v1643 = vunpack.c.l.b16 %v1611
        %v1644 = vunpack.c.l.b16 %v1612
        %v1645 = vunpack.c.l.b16 %v1613
        %v1646 = vunpack.c.l.b16 %v1614
        %v1647 = vpack.c.b16 %v1632, %v1631
        %v1648 = vpack.c.b16 %v1634, %v1633
        %v1649 = vpack.c.b16 %v1636, %v1635
        %v1650 = vpack.c.b16 %v1638, %v1637
        %v1651 = vpack.c.b16 %v1640, %v1639
        %v1652 = vpack.c.b16 %v1642, %v1641
        %v1653 = vpack.c.b16 %v1644, %v1643
        %v1654 = vpack.c.b16 %v1646, %v1645
        %1663 = vmatpush.bf16.msra.mxu0 %v1654
        %1664 = vmatpush.bf16.msra.mxu0 %v1653
        %1665 = vmatpush.bf16.msra.mxu0 %v1652
        %1666 = vmatpush.bf16.msra.mxu0 %v1651
        %1667 = vmatpush.bf16.msra.mxu0 %v1650
        %1668 = vmatpush.bf16.msra.mxu0 %v1649
        %1669 = vmatpush.bf16.msra.mxu0 %v1648
        %1670 = vmatpush.bf16.msra.mxu0 %v1647
        %1671 = vmatmul.bf16.gmra.mxu0 %v1598
        %v1672 = vpop.f32.mrf.mxu0
        %v1673 = vadd.f32 0.0, %v1672
        %v1674 = vpop.f32.mrf.mxu0
        %v1675 = vadd.f32 0.0, %v1674
        %1676 = vdwg.mxu0
        %v1693 = vunpack.c.l.b16 %v1496
        %v1694 = vunpack.c.l.b16 %v1497
        %v1695 = vunpack.c.l.b16 %v1498
        %v1696 = vunpack.c.l.b16 %v1499
        %v1697 = vunpack.c.l.b16 %v1500
        %v1698 = vunpack.c.l.b16 %v1501
        %v1699 = vunpack.c.l.b16 %v1502
        %v1700 = vunpack.c.l.b16 %v1503
        %v1701 = vunpack.c.l.b16 %v1504
        %v1702 = vunpack.c.l.b16 %v1505
        %v1703 = vunpack.c.l.b16 %v1506
        %v1704 = vunpack.c.l.b16 %v1507
        %v1705 = vunpack.c.l.b16 %v1508
        %v1706 = vunpack.c.l.b16 %v1509
        %v1707 = vunpack.c.l.b16 %v1510
        %v1708 = vunpack.c.l.b16 %v1511
        %v1709 = vpack.c.b16 %v1694, %v1693
        %v1710 = vpack.c.b16 %v1696, %v1695
        %v1711 = vpack.c.b16 %v1698, %v1697
        %v1712 = vpack.c.b16 %v1700, %v1699
        %v1713 = vpack.c.b16 %v1702, %v1701
        %v1714 = vpack.c.b16 %v1704, %v1703
        %v1715 = vpack.c.b16 %v1706, %v1705
        %v1716 = vpack.c.b16 %v1708, %v1707
        %1725 = vmatpush.bf16.msra.mxu0 %v1716
        %1726 = vmatpush.bf16.msra.mxu0 %v1715
        %1727 = vmatpush.bf16.msra.mxu0 %v1714
        %1728 = vmatpush.bf16.msra.mxu0 %v1713
        %1729 = vmatpush.bf16.msra.mxu0 %v1712
        %1730 = vmatpush.bf16.msra.mxu0 %v1711
        %1731 = vmatpush.bf16.msra.mxu0 %v1710
        %1732 = vmatpush.bf16.msra.mxu0 %v1709
        %1733 = vmatmul.bf16.gmra.mxu0 %v1495
        %v1734 = vpop.f32.mrf.mxu0
        %v1735 = vadd.f32 %v1673, %v1734
        %v1736 = vpop.f32.mrf.mxu0
        %v1737 = vadd.f32 %v1675, %v1736
        %1738 = vdwg.mxu0
        %v1739 = vpack.c.bf16 %v1278, %v1278
        %v1740 = vpack.c.bf16 %v1280, %v1280
        %v1741 = vpack.c.bf16 %v1334, %v1334
        %v1742 = vpack.c.bf16 %v1336, %v1336
        %v1743 = vpack.c.bf16 %v1390, %v1390
        %v1744 = vpack.c.bf16 %v1392, %v1392
        %v1747 = vunpack.c.l.b16 %v1739
        %v1748 = vunpack.c.l.b16 %v1740
        %v1749 = vpack.c.b16 %v1748, %v1747
        %v1753 = vunpack.c.l.b16 %v1741
        %v1754 = vunpack.c.l.b16 %v1742
        %v1755 = vpack.c.b16 %v1754, %v1753
        %1757 = vmatpush.bf16.xpose.msra.mxu0 0
        %1758 = vmatpush.bf16.xpose.msra.mxu0 0
        %1759 = vmatpush.bf16.xpose.msra.mxu0 0
        %1760 = vmatpush.bf16.xpose.msra.mxu0 0
        %1761 = vmatpush.bf16.xpose.msra.mxu0 0
        %1762 = vmatpush.bf16.xpose.msra.mxu0 0
        %1763 = vmatpush.bf16.xpose.msra.mxu0 0
        %1764 = vmatpush.bf16.xpose.msra.mxu0 %v1755
        %1765 = vmatmul.bf16.gmra.mxu0 %v1749
        %v1766 = vpop.f32.mrf.mxu0
        %v1767 = vadd.f32 0.0, %v1766
        %v1768 = vpop.f32.mrf.mxu0
        %v1769 = vadd.f32 0.0, %v1768
        %1770 = vdwg.mxu0
        %v1771 = vmul.f32 %v1767, 0.25
        %v1772 = vmul.f32 %v1769, 0.25
        %v1773 = vsel %vm1442, %v1771, -inf
        %1774 = vmax.xlane.f32.xlu0 %v1773
        %v1775 = vpop.xlane.xlu0 %1774
        %v1776 = vsel %vm1442, %v1772, -inf
        %1777 = vmax.xlane.f32.xlu0 %v1776
        %v1778 = vpop.xlane.xlu0 %1777
        %v1779 = vsub.f32 %v1771, %v1775
        %v1780 = vsub.f32 %v1772, %v1778
        %v1781 = vmul.f32 %v1779, 1.442695
        %v1782 = vpow.pop %v1781
        %v1783 = vmul.f32 %v1780, 1.442695
        %v1784 = vpow.pop %v1783
        %v1785 = vsel %vm1442, %v1782, 0.0
        %1786 = vadd.xlane.f32.xlu0 %v1785
        %v1787 = vpop.xlane.xlu0 %1786
        %v1788 = vsel %vm1442, %v1784, 0.0
        %1789 = vadd.xlane.f32.xlu0 %v1788
        %v1790 = vpop.xlane.xlu0 %1789
        %v1791 = vrcp.pop %v1787
        %v1792 = vrcp.pop %v1790
        %v1793 = vmul.f32 %v1782, %v1791
        %v1794 = vmul.f32 %v1784, %v1792
        %v1795 = vpack.c.bf16 %v1793, %v1793
        %v1796 = vpack.c.bf16 %v1794, %v1794
        %v1799 = vunpack.c.l.b16 %v1795
        %v1800 = vunpack.c.l.b16 %v1796
        %v1801 = vpack.c.b16 %v1800, %v1799
        %v1804 = vunpack.c.l.b16 %v1743
        %v1805 = vunpack.c.l.b16 %v1744
        %v1806 = vpack.c.b16 %v1805, %v1804
        %v1809 = vsel %vm1442, %v1801, 0
        %1811 = vmatpush.bf16.msra.mxu0 0
        %1812 = vmatpush.bf16.msra.mxu0 0
        %1813 = vmatpush.bf16.msra.mxu0 0
        %1814 = vmatpush.bf16.msra.mxu0 0
        %1815 = vmatpush.bf16.msra.mxu0 0
        %1816 = vmatpush.bf16.msra.mxu0 0
        %1817 = vmatpush.bf16.msra.mxu0 0
        %1818 = vmatpush.bf16.msra.mxu0 %v1806
        %1819 = vmatmul.bf16.gmra.mxu0 %v1809
        %v1820 = vpop.f32.mrf.mxu0
        %v1821 = vadd.f32 0.0, %v1820
        %v1822 = vpop.f32.mrf.mxu0
        %v1823 = vadd.f32 0.0, %v1822
        %1824 = vdwg.mxu0
        %v1825 = vpack.c.bf16 %v1823, %v1821
        %v1826 = vld [vmem:[%s535 + $0x80] sm:$0xf]
        %v1827 = vld [vmem:[%s535 + $0x84] sm:$0xf]
        %v1828 = vld [vmem:[%s535 + $0x88] sm:$0xf]
        %v1829 = vld [vmem:[%s535 + $0x8c] sm:$0xf]
        %v1830 = vld [vmem:[%s535 + $0x90] sm:$0xf]
        %v1831 = vld [vmem:[%s535 + $0x94] sm:$0xf]
        %v1832 = vld [vmem:[%s535 + $0x98] sm:$0xf]
        %v1833 = vld [vmem:[%s535 + $0x9c] sm:$0xf]
        %v1834 = vld [vmem:[%s535 + $0xa0] sm:$0xf]
        %v1835 = vld [vmem:[%s535 + $0xa4] sm:$0xf]
        %v1836 = vld [vmem:[%s535 + $0xa8] sm:$0xf]
        %v1837 = vld [vmem:[%s535 + $0xac] sm:$0xf]
        %v1838 = vld [vmem:[%s535 + $0xb0] sm:$0xf]
        %v1839 = vld [vmem:[%s535 + $0xb4] sm:$0xf]
        %v1840 = vld [vmem:[%s535 + $0xb8] sm:$0xf]
        %v1841 = vld [vmem:[%s535 + $0xbc] sm:$0xf]
        %v1858 = vunpack.c.l.b16 %v1826
        %v1859 = vunpack.c.l.b16 %v1827
        %v1860 = vunpack.c.l.b16 %v1828
        %v1861 = vunpack.c.l.b16 %v1829
        %v1862 = vunpack.c.l.b16 %v1830
        %v1863 = vunpack.c.l.b16 %v1831
        %v1864 = vunpack.c.l.b16 %v1832
        %v1865 = vunpack.c.l.b16 %v1833
        %v1866 = vunpack.c.l.b16 %v1834
        %v1867 = vunpack.c.l.b16 %v1835
        %v1868 = vunpack.c.l.b16 %v1836
        %v1869 = vunpack.c.l.b16 %v1837
        %v1870 = vunpack.c.l.b16 %v1838
        %v1871 = vunpack.c.l.b16 %v1839
        %v1872 = vunpack.c.l.b16 %v1840
        %v1873 = vunpack.c.l.b16 %v1841
        %v1874 = vpack.c.b16 %v1859, %v1858
        %v1875 = vpack.c.b16 %v1861, %v1860
        %v1876 = vpack.c.b16 %v1863, %v1862
        %v1877 = vpack.c.b16 %v1865, %v1864
        %v1878 = vpack.c.b16 %v1867, %v1866
        %v1879 = vpack.c.b16 %v1869, %v1868
        %v1880 = vpack.c.b16 %v1871, %v1870
        %v1881 = vpack.c.b16 %v1873, %v1872
        %1890 = vmatpush.bf16.msra.mxu0 %v1881
        %1891 = vmatpush.bf16.msra.mxu0 %v1880
        %1892 = vmatpush.bf16.msra.mxu0 %v1879
        %1893 = vmatpush.bf16.msra.mxu0 %v1878
        %1894 = vmatpush.bf16.msra.mxu0 %v1877
        %1895 = vmatpush.bf16.msra.mxu0 %v1876
        %1896 = vmatpush.bf16.msra.mxu0 %v1875
        %1897 = vmatpush.bf16.msra.mxu0 %v1874
        %1898 = vmatmul.bf16.gmra.mxu0 %v1825
        %v1899 = vpop.f32.mrf.mxu0
        %v1900 = vadd.f32 0.0, %v1899
        %v1901 = vpop.f32.mrf.mxu0
        %v1902 = vadd.f32 0.0, %v1901
        %1903 = vdwg.mxu0
        %v1904 = vadd.f32 %v1735, %v1900
        %v1905 = vadd.f32 %v1737, %v1902
        %v1906 = vpack.c.bf16 %v1292, %v1292
        %v1907 = vpack.c.bf16 %v1294, %v1294
        %v1908 = vpack.c.bf16 %v1348, %v1348
        %v1909 = vpack.c.bf16 %v1350, %v1350
        %v1910 = vpack.c.bf16 %v1404, %v1404
        %v1911 = vpack.c.bf16 %v1406, %v1406
        %v1914 = vunpack.c.l.b16 %v1906
        %v1915 = vunpack.c.l.b16 %v1907
        %v1916 = vpack.c.b16 %v1915, %v1914
        %v1920 = vunpack.c.l.b16 %v1908
        %v1921 = vunpack.c.l.b16 %v1909
        %v1922 = vpack.c.b16 %v1921, %v1920
        %1924 = vmatpush.bf16.xpose.msra.mxu0 0
        %1925 = vmatpush.bf16.xpose.msra.mxu0 0
        %1926 = vmatpush.bf16.xpose.msra.mxu0 0
        %1927 = vmatpush.bf16.xpose.msra.mxu0 0
        %1928 = vmatpush.bf16.xpose.msra.mxu0 0
        %1929 = vmatpush.bf16.xpose.msra.mxu0 0
        %1930 = vmatpush.bf16.xpose.msra.mxu0 0
        %1931 = vmatpush.bf16.xpose.msra.mxu0 %v1922
        %1932 = vmatmul.bf16.gmra.mxu0 %v1916
        %v1933 = vpop.f32.mrf.mxu0
        %v1934 = vadd.f32 0.0, %v1933
        %v1935 = vpop.f32.mrf.mxu0
        %v1936 = vadd.f32 0.0, %v1935
        %1937 = vdwg.mxu0
        %v1938 = vmul.f32 %v1934, 0.25
        %v1939 = vmul.f32 %v1936, 0.25
        %v1940 = vsel %vm1442, %v1938, -inf
        %1941 = vmax.xlane.f32.xlu0 %v1940
        %v1942 = vpop.xlane.xlu0 %1941
        %v1943 = vsel %vm1442, %v1939, -inf
        %1944 = vmax.xlane.f32.xlu0 %v1943
        %v1945 = vpop.xlane.xlu0 %1944
        %v1946 = vsub.f32 %v1938, %v1942
        %v1947 = vsub.f32 %v1939, %v1945
        %v1948 = vmul.f32 %v1946, 1.442695
        %v1949 = vpow.pop %v1948
        %v1950 = vmul.f32 %v1947, 1.442695
        %v1951 = vpow.pop %v1950
        %v1952 = vsel %vm1442, %v1949, 0.0
        %1953 = vadd.xlane.f32.xlu0 %v1952
        %v1954 = vpop.xlane.xlu0 %1953
        %v1955 = vsel %vm1442, %v1951, 0.0
        %1956 = vadd.xlane.f32.xlu0 %v1955
        %v1957 = vpop.xlane.xlu0 %1956
        %v1958 = vrcp.pop %v1954
        %v1959 = vrcp.pop %v1957
        %v1960 = vmul.f32 %v1949, %v1958
        %v1961 = vmul.f32 %v1951, %v1959
        %v1962 = vpack.c.bf16 %v1960, %v1960
        %v1963 = vpack.c.bf16 %v1961, %v1961
        %v1966 = vunpack.c.l.b16 %v1962
        %v1967 = vunpack.c.l.b16 %v1963
        %v1968 = vpack.c.b16 %v1967, %v1966
        %v1971 = vunpack.c.l.b16 %v1910
        %v1972 = vunpack.c.l.b16 %v1911
        %v1973 = vpack.c.b16 %v1972, %v1971
        %v1976 = vsel %vm1442, %v1968, 0
        %1978 = vmatpush.bf16.msra.mxu0 0
        %1979 = vmatpush.bf16.msra.mxu0 0
        %1980 = vmatpush.bf16.msra.mxu0 0
        %1981 = vmatpush.bf16.msra.mxu0 0
        %1982 = vmatpush.bf16.msra.mxu0 0
        %1983 = vmatpush.bf16.msra.mxu0 0
        %1984 = vmatpush.bf16.msra.mxu0 0
        %1985 = vmatpush.bf16.msra.mxu0 %v1973
        %1986 = vmatmul.bf16.gmra.mxu0 %v1976
        %v1987 = vpop.f32.mrf.mxu0
        %v1988 = vadd.f32 0.0, %v1987
        %v1989 = vpop.f32.mrf.mxu0
        %v1990 = vadd.f32 0.0, %v1989
        %1991 = vdwg.mxu0
        %v1992 = vpack.c.bf16 %v1990, %v1988
        %v1993 = vld [vmem:[%s535 + $0xc0] sm:$0xf]
        %v1994 = vld [vmem:[%s535 + $0xc4] sm:$0xf]
        %v1995 = vld [vmem:[%s535 + $0xc8] sm:$0xf]
        %v1996 = vld [vmem:[%s535 + $0xcc] sm:$0xf]
        %v1997 = vld [vmem:[%s535 + $0xd0] sm:$0xf]
        %v1998 = vld [vmem:[%s535 + $0xd4] sm:$0xf]
        %v1999 = vld [vmem:[%s535 + $0xd8] sm:$0xf]
        %v2000 = vld [vmem:[%s535 + $0xdc] sm:$0xf]
        %v2001 = vld [vmem:[%s535 + $0xe0] sm:$0xf]
        %v2002 = vld [vmem:[%s535 + $0xe4] sm:$0xf]
        %v2003 = vld [vmem:[%s535 + $0xe8] sm:$0xf]
        %v2004 = vld [vmem:[%s535 + $0xec] sm:$0xf]
        %v2005 = vld [vmem:[%s535 + $0xf0] sm:$0xf]
        %v2006 = vld [vmem:[%s535 + $0xf4] sm:$0xf]
        %v2007 = vld [vmem:[%s535 + $0xf8] sm:$0xf]
        %v2008 = vld [vmem:[%s535 + $0xfc] sm:$0xf]
        %v2025 = vunpack.c.l.b16 %v1993
        %v2026 = vunpack.c.l.b16 %v1994
        %v2027 = vunpack.c.l.b16 %v1995
        %v2028 = vunpack.c.l.b16 %v1996
        %v2029 = vunpack.c.l.b16 %v1997
        %v2030 = vunpack.c.l.b16 %v1998
        %v2031 = vunpack.c.l.b16 %v1999
        %v2032 = vunpack.c.l.b16 %v2000
        %v2033 = vunpack.c.l.b16 %v2001
        %v2034 = vunpack.c.l.b16 %v2002
        %v2035 = vunpack.c.l.b16 %v2003
        %v2036 = vunpack.c.l.b16 %v2004
        %v2037 = vunpack.c.l.b16 %v2005
        %v2038 = vunpack.c.l.b16 %v2006
        %v2039 = vunpack.c.l.b16 %v2007
        %v2040 = vunpack.c.l.b16 %v2008
        %v2041 = vpack.c.b16 %v2026, %v2025
        %v2042 = vpack.c.b16 %v2028, %v2027
        %v2043 = vpack.c.b16 %v2030, %v2029
        %v2044 = vpack.c.b16 %v2032, %v2031
        %v2045 = vpack.c.b16 %v2034, %v2033
        %v2046 = vpack.c.b16 %v2036, %v2035
        %v2047 = vpack.c.b16 %v2038, %v2037
        %v2048 = vpack.c.b16 %v2040, %v2039
        %2057 = vmatpush.bf16.msra.mxu0 %v2048
        %2058 = vmatpush.bf16.msra.mxu0 %v2047
        %2059 = vmatpush.bf16.msra.mxu0 %v2046
        %2060 = vmatpush.bf16.msra.mxu0 %v2045
        %2061 = vmatpush.bf16.msra.mxu0 %v2044
        %2062 = vmatpush.bf16.msra.mxu0 %v2043
        %2063 = vmatpush.bf16.msra.mxu0 %v2042
        %2064 = vmatpush.bf16.msra.mxu0 %v2041
        %2065 = vmatmul.bf16.gmra.mxu0 %v1992
        %v2066 = vpop.f32.mrf.mxu0
        %v2067 = vadd.f32 0.0, %v2066
        %v2068 = vpop.f32.mrf.mxu0
        %v2069 = vadd.f32 0.0, %v2068
        %2070 = vdwg.mxu0
        %v2071 = vadd.f32 %v1904, %v2067
        %v2072 = vadd.f32 %v1905, %v2069
        %v2073 = vld [vmem:[%s432 + $0x4] sm:$0x1]
        %v2075 = vperm.slane %v2073, 0
        %v2077 = vadd.f32 %v2071, %v2075
        %v2078 = vadd.f32 %v2072, %v2075
        %v2079 = vperm.slane %v562, 2
        %v2080 = vmul.f32 %v2077, %v2079
        %v2081 = vmul.f32 %v2078, %v2079
        %v2082 = vadd.f32 %v560, %v2080
        %v2083 = vadd.f32 %v561, %v2081
        %v2084 = vld [vmem:[%s432 + $0x2] sm:$0x1]
        %v2085 = vld [vmem:[%s432 + $0x3] sm:$0x1]
        %2086 = vadd.xlane.f32.xlu0 %v2082
        %v2087 = vpop.xlane.xlu0 %2086
        %2088 = vadd.xlane.f32.xlu0 %v2083
        %v2089 = vpop.xlane.xlu0 %2088
        %v2090 = vmul.f32 %v2087, %v575
        %v2091 = vmul.f32 %v2089, %v575
        %v2092 = vmul.f32 %v2082, %v2082
        %v2093 = vmul.f32 %v2083, %v2083
        %2094 = vadd.xlane.f32.xlu0 %v2092
        %v2095 = vpop.xlane.xlu0 %2094
        %2096 = vadd.xlane.f32.xlu0 %v2093
        %v2097 = vpop.xlane.xlu0 %2096
        %v2098 = vmul.f32 %v2095, %v575
        %v2099 = vmul.f32 %v2097, %v575
        %v2100 = vmul.f32 %v2090, %v2090
        %v2101 = vmul.f32 %v2091, %v2091
        %v2102 = vsub.f32 %v2098, %v2100
        %v2103 = vsub.f32 %v2099, %v2101
        %v2104 = vmax.f32 %v2102, 0.0
        %v2105 = vmax.f32 %v2103, 0.0
        %v2106 = vsub.f32 %v2082, %v2090
        %v2107 = vsub.f32 %v2083, %v2091
        %v2108 = vadd.f32 %v2104, 1e-05
        %v2109 = vadd.f32 %v2105, 1e-05
        %v2110 = vrsqrt.pop %v2108
        %v2111 = vmul.f32 %v2110, %v2108
        %v2112 = vmul.f32 %v2111, %v2110
        %v2113 = vmul.f32 0.5, %v2112
        %v2114 = vsub.f32 1.5, %v2113
        %v2115 = vmul.f32 %v2110, %v2114
        %vm2116 = vweird.f32 %v2108
        %vm2117 = vweird.f32 %v2110
        %vm2118 = vmor %vm2116, %vm2117
        %v2119 = vsel %vm2118, %v2110, %v2115
        %v2120 = vrsqrt.pop %v2109
        %v2121 = vmul.f32 %v2120, %v2109
        %v2122 = vmul.f32 %v2121, %v2120
        %v2123 = vmul.f32 0.5, %v2122
        %v2124 = vsub.f32 1.5, %v2123
        %v2125 = vmul.f32 %v2120, %v2124
        %vm2126 = vweird.f32 %v2109
        %vm2127 = vweird.f32 %v2120
        %vm2128 = vmor %vm2126, %vm2127
        %v2129 = vsel %vm2128, %v2120, %v2125
        %v2130 = vmul.f32 %v2106, %v2119
        %v2131 = vmul.f32 %v2107, %v2129
        %v2133 = vperm.slane %v2084, 0
        %v2135 = vmul.f32 %v2130, %v2133
        %v2136 = vmul.f32 %v2131, %v2133
        %v2138 = vperm.slane %v2085, 0
        %v2140 = vadd.f32 %v2135, %v2138
        %v2141 = vadd.f32 %v2136, %v2138
        %v2142 = vperm.slane %v628, 3
        %v2143 = vmul.f32 %v2140, %v2142
        %v2144 = vmul.f32 %v2141, %v2142
        %v2145 = vperm.slane %v562, 4
        %v2146 = vadd.f32 %v2143, %v2145
        %v2147 = vadd.f32 %v2144, %v2145
        %v2148 = vpack.c.bf16 %v2147, %v2146
        %v2149 = vld [vmem:[%s540] sm:$0xff]
        %v2150 = vld [vmem:[%s540 + $0x8] sm:$0xff]
        %v2151 = vld [vmem:[%s540 + $0x10] sm:$0xff]
        %v2152 = vld [vmem:[%s540 + $0x18] sm:$0xff]
        %v2153 = vld [vmem:[%s540 + $0x20] sm:$0xff]
        %v2154 = vld [vmem:[%s540 + $0x28] sm:$0xff]
        %v2155 = vld [vmem:[%s540 + $0x30] sm:$0xff]
        %v2156 = vld [vmem:[%s540 + $0x38] sm:$0xff]
        %v2157 = vld [vmem:[%s540 + $0x40] sm:$0xff]
        %v2158 = vld [vmem:[%s540 + $0x48] sm:$0xff]
        %v2159 = vld [vmem:[%s540 + $0x50] sm:$0xff]
        %v2160 = vld [vmem:[%s540 + $0x58] sm:$0xff]
        %v2161 = vld [vmem:[%s540 + $0x60] sm:$0xff]
        %v2162 = vld [vmem:[%s540 + $0x68] sm:$0xff]
        %v2163 = vld [vmem:[%s540 + $0x70] sm:$0xff]
        %v2164 = vld [vmem:[%s540 + $0x78] sm:$0xff]
        %v2165 = vld [vmem:[%s540 + $0x80] sm:$0xff]
        %v2166 = vld [vmem:[%s540 + $0x88] sm:$0xff]
        %v2167 = vld [vmem:[%s540 + $0x90] sm:$0xff]
        %v2168 = vld [vmem:[%s540 + $0x98] sm:$0xff]
        %v2169 = vld [vmem:[%s540 + $0xa0] sm:$0xff]
        %v2170 = vld [vmem:[%s540 + $0xa8] sm:$0xff]
        %v2171 = vld [vmem:[%s540 + $0xb0] sm:$0xff]
        %v2172 = vld [vmem:[%s540 + $0xb8] sm:$0xff]
        %v2173 = vld [vmem:[%s540 + $0xc0] sm:$0xff]
        %v2174 = vld [vmem:[%s540 + $0xc8] sm:$0xff]
        %v2175 = vld [vmem:[%s540 + $0xd0] sm:$0xff]
        %v2176 = vld [vmem:[%s540 + $0xd8] sm:$0xff]
        %v2177 = vld [vmem:[%s540 + $0xe0] sm:$0xff]
        %v2178 = vld [vmem:[%s540 + $0xe8] sm:$0xff]
        %v2179 = vld [vmem:[%s540 + $0xf0] sm:$0xff]
        %v2180 = vld [vmem:[%s540 + $0xf8] sm:$0xff]
        %v2181 = vld [vmem:[%s432 + $0x12] sm:$0xf]
        %v2183 = vperm.slane %v2181, 0
        %v2184 = vperm.slane %v2181, 1
        %v2185 = vperm.slane %v2181, 2
        %v2186 = vperm.slane %v2181, 3
        %v2223 = vunpack.c.l.b16 %v2149
        %v2224 = vunpack.c.h.b16 %v2149
        %v2225 = vunpack.c.l.b16 %v2150
        %v2226 = vunpack.c.h.b16 %v2150
        %v2227 = vunpack.c.l.b16 %v2151
        %v2228 = vunpack.c.h.b16 %v2151
        %v2229 = vunpack.c.l.b16 %v2152
        %v2230 = vunpack.c.h.b16 %v2152
        %v2231 = vunpack.c.l.b16 %v2153
        %v2232 = vunpack.c.h.b16 %v2153
        %v2233 = vunpack.c.l.b16 %v2154
        %v2234 = vunpack.c.h.b16 %v2154
        %v2235 = vunpack.c.l.b16 %v2155
        %v2236 = vunpack.c.h.b16 %v2155
        %v2237 = vunpack.c.l.b16 %v2156
        %v2238 = vunpack.c.h.b16 %v2156
        %v2239 = vunpack.c.l.b16 %v2157
        %v2240 = vunpack.c.h.b16 %v2157
        %v2241 = vunpack.c.l.b16 %v2158
        %v2242 = vunpack.c.h.b16 %v2158
        %v2243 = vunpack.c.l.b16 %v2159
        %v2244 = vunpack.c.h.b16 %v2159
        %v2245 = vunpack.c.l.b16 %v2160
        %v2246 = vunpack.c.h.b16 %v2160
        %v2247 = vunpack.c.l.b16 %v2161
        %v2248 = vunpack.c.h.b16 %v2161
        %v2249 = vunpack.c.l.b16 %v2162
        %v2250 = vunpack.c.h.b16 %v2162
        %v2251 = vunpack.c.l.b16 %v2163
        %v2252 = vunpack.c.h.b16 %v2163
        %v2253 = vunpack.c.l.b16 %v2164
        %v2254 = vunpack.c.h.b16 %v2164
        %v2255 = vunpack.c.l.b16 %v2165
        %v2256 = vunpack.c.h.b16 %v2165
        %v2257 = vunpack.c.l.b16 %v2166
        %v2258 = vunpack.c.h.b16 %v2166
        %v2259 = vunpack.c.l.b16 %v2167
        %v2260 = vunpack.c.h.b16 %v2167
        %v2261 = vunpack.c.l.b16 %v2168
        %v2262 = vunpack.c.h.b16 %v2168
        %v2263 = vunpack.c.l.b16 %v2169
        %v2264 = vunpack.c.h.b16 %v2169
        %v2265 = vunpack.c.l.b16 %v2170
        %v2266 = vunpack.c.h.b16 %v2170
        %v2267 = vunpack.c.l.b16 %v2171
        %v2268 = vunpack.c.h.b16 %v2171
        %v2269 = vunpack.c.l.b16 %v2172
        %v2270 = vunpack.c.h.b16 %v2172
        %v2271 = vunpack.c.l.b16 %v2173
        %v2272 = vunpack.c.h.b16 %v2173
        %v2273 = vunpack.c.l.b16 %v2174
        %v2274 = vunpack.c.h.b16 %v2174
        %v2275 = vunpack.c.l.b16 %v2175
        %v2276 = vunpack.c.h.b16 %v2175
        %v2277 = vunpack.c.l.b16 %v2176
        %v2278 = vunpack.c.h.b16 %v2176
        %v2279 = vunpack.c.l.b16 %v2177
        %v2280 = vunpack.c.h.b16 %v2177
        %v2281 = vunpack.c.l.b16 %v2178
        %v2282 = vunpack.c.h.b16 %v2178
        %v2283 = vunpack.c.l.b16 %v2179
        %v2284 = vunpack.c.h.b16 %v2179
        %v2285 = vunpack.c.l.b16 %v2180
        %v2286 = vunpack.c.h.b16 %v2180
        %v2287 = vpack.c.b16 %v2227, %v2223
        %v2288 = vpack.c.b16 %v2228, %v2224
        %v2289 = vpack.c.b16 %v2229, %v2225
        %v2290 = vpack.c.b16 %v2230, %v2226
        %v2291 = vpack.c.b16 %v2235, %v2231
        %v2292 = vpack.c.b16 %v2236, %v2232
        %v2293 = vpack.c.b16 %v2237, %v2233
        %v2294 = vpack.c.b16 %v2238, %v2234
        %v2295 = vpack.c.b16 %v2243, %v2239
        %v2296 = vpack.c.b16 %v2244, %v2240
        %v2297 = vpack.c.b16 %v2245, %v2241
        %v2298 = vpack.c.b16 %v2246, %v2242
        %v2299 = vpack.c.b16 %v2251, %v2247
        %v2300 = vpack.c.b16 %v2252, %v2248
        %v2301 = vpack.c.b16 %v2253, %v2249
        %v2302 = vpack.c.b16 %v2254, %v2250
        %v2303 = vpack.c.b16 %v2259, %v2255
        %v2304 = vpack.c.b16 %v2260, %v2256
        %v2305 = vpack.c.b16 %v2261, %v2257
        %v2306 = vpack.c.b16 %v2262, %v2258
        %v2307 = vpack.c.b16 %v2267, %v2263
        %v2308 = vpack.c.b16 %v2268, %v2264
        %v2309 = vpack.c.b16 %v2269, %v2265
        %v2310 = vpack.c.b16 %v2270, %v2266
        %v2311 = vpack.c.b16 %v2275, %v2271
        %v2312 = vpack.c.b16 %v2276, %v2272
        %v2313 = vpack.c.b16 %v2277, %v2273
        %v2314 = vpack.c.b16 %v2278, %v2274
        %v2315 = vpack.c.b16 %v2283, %v2279
        %v2316 = vpack.c.b16 %v2284, %v2280
        %v2317 = vpack.c.b16 %v2285, %v2281
        %v2318 = vpack.c.b16 %v2286, %v2282
        %2351 = vmatpush.bf16.msra.mxu0 %v2315
        %2352 = vmatpush.bf16.msra.mxu0 %v2311
        %2353 = vmatpush.bf16.msra.mxu0 %v2307
        %2354 = vmatpush.bf16.msra.mxu0 %v2303
        %2355 = vmatpush.bf16.msra.mxu0 %v2299
        %2356 = vmatpush.bf16.msra.mxu0 %v2295
        %2357 = vmatpush.bf16.msra.mxu0 %v2291
        %2358 = vmatpush.bf16.msra.mxu0 %v2287
        %2359 = vmatmul.bf16.gmra.mxu0 %v2148
        %v2360 = vpop.f32.mrf.mxu0
        %v2361 = vadd.f32 %v2183, %v2360
        %v2362 = vpop.f32.mrf.mxu0
        %v2363 = vadd.f32 %v2183, %v2362
        %2364 = vdwg.mxu0
        %2365 = vmatpush.bf16.msra.mxu0 %v2316
        %2366 = vmatpush.bf16.msra.mxu0 %v2312
        %2367 = vmatpush.bf16.msra.mxu0 %v2308
        %2368 = vmatpush.bf16.msra.mxu0 %v2304
        %2369 = vmatpush.bf16.msra.mxu0 %v2300
        %2370 = vmatpush.bf16.msra.mxu0 %v2296
        %2371 = vmatpush.bf16.msra.mxu0 %v2292
        %2372 = vmatpush.bf16.msra.mxu0 %v2288
        %2373 = vmatmul.bf16.gmra.mxu0 %v2148
        %v2374 = vpop.f32.mrf.mxu0
        %v2375 = vadd.f32 %v2184, %v2374
        %v2376 = vpop.f32.mrf.mxu0
        %v2377 = vadd.f32 %v2184, %v2376
        %2378 = vdwg.mxu0
        %2379 = vmatpush.bf16.msra.mxu0 %v2317
        %2380 = vmatpush.bf16.msra.mxu0 %v2313
        %2381 = vmatpush.bf16.msra.mxu0 %v2309
        %2382 = vmatpush.bf16.msra.mxu0 %v2305
        %2383 = vmatpush.bf16.msra.mxu0 %v2301
        %2384 = vmatpush.bf16.msra.mxu0 %v2297
        %2385 = vmatpush.bf16.msra.mxu0 %v2293
        %2386 = vmatpush.bf16.msra.mxu0 %v2289
        %2387 = vmatmul.bf16.gmra.mxu0 %v2148
        %v2388 = vpop.f32.mrf.mxu0
        %v2389 = vadd.f32 %v2185, %v2388
        %v2390 = vpop.f32.mrf.mxu0
        %v2391 = vadd.f32 %v2185, %v2390
        %2392 = vdwg.mxu0
        %2393 = vmatpush.bf16.msra.mxu0 %v2318
        %2394 = vmatpush.bf16.msra.mxu0 %v2314
        %2395 = vmatpush.bf16.msra.mxu0 %v2310
        %2396 = vmatpush.bf16.msra.mxu0 %v2306
        %2397 = vmatpush.bf16.msra.mxu0 %v2302
        %2398 = vmatpush.bf16.msra.mxu0 %v2298
        %2399 = vmatpush.bf16.msra.mxu0 %v2294
        %2400 = vmatpush.bf16.msra.mxu0 %v2290
        %2401 = vmatmul.bf16.gmra.mxu0 %v2148
        %v2402 = vpop.f32.mrf.mxu0
        %v2403 = vadd.f32 %v2186, %v2402
        %v2404 = vpop.f32.mrf.mxu0
        %v2405 = vadd.f32 %v2186, %v2404
        %2406 = vdwg.mxu0
        %v2407 = vmax.f32 %v2361, 0.0
        %v2408 = vmax.f32 %v2375, 0.0
        %v2409 = vmax.f32 %v2389, 0.0
        %v2410 = vmax.f32 %v2403, 0.0
        %v2411 = vmax.f32 %v2363, 0.0
        %v2412 = vmax.f32 %v2377, 0.0
        %v2413 = vmax.f32 %v2391, 0.0
        %v2414 = vmax.f32 %v2405, 0.0
        %v2415 = vpack.c.bf16 %v2411, %v2407
        %v2416 = vpack.c.bf16 %v2412, %v2408
        %v2417 = vpack.c.bf16 %v2413, %v2409
        %v2418 = vpack.c.bf16 %v2414, %v2410
        %v2419 = vld [vmem:[%s545] sm:$0xf]
        %v2420 = vld [vmem:[%s545 + $0x4] sm:$0xf]
        %v2421 = vld [vmem:[%s545 + $0x8] sm:$0xf]
        %v2422 = vld [vmem:[%s545 + $0xc] sm:$0xf]
        %v2423 = vld [vmem:[%s545 + $0x10] sm:$0xf]
        %v2424 = vld [vmem:[%s545 + $0x14] sm:$0xf]
        %v2425 = vld [vmem:[%s545 + $0x18] sm:$0xf]
        %v2426 = vld [vmem:[%s545 + $0x1c] sm:$0xf]
        %v2427 = vld [vmem:[%s545 + $0x20] sm:$0xf]
        %v2428 = vld [vmem:[%s545 + $0x24] sm:$0xf]
        %v2429 = vld [vmem:[%s545 + $0x28] sm:$0xf]
        %v2430 = vld [vmem:[%s545 + $0x2c] sm:$0xf]
        %v2431 = vld [vmem:[%s545 + $0x30] sm:$0xf]
        %v2432 = vld [vmem:[%s545 + $0x34] sm:$0xf]
        %v2433 = vld [vmem:[%s545 + $0x38] sm:$0xf]
        %v2434 = vld [vmem:[%s545 + $0x3c] sm:$0xf]
        %v2435 = vld [vmem:[%s545 + $0x40] sm:$0xf]
        %v2436 = vld [vmem:[%s545 + $0x44] sm:$0xf]
        %v2437 = vld [vmem:[%s545 + $0x48] sm:$0xf]
        %v2438 = vld [vmem:[%s545 + $0x4c] sm:$0xf]
        %v2439 = vld [vmem:[%s545 + $0x50] sm:$0xf]
        %v2440 = vld [vmem:[%s545 + $0x54] sm:$0xf]
        %v2441 = vld [vmem:[%s545 + $0x58] sm:$0xf]
        %v2442 = vld [vmem:[%s545 + $0x5c] sm:$0xf]
        %v2443 = vld [vmem:[%s545 + $0x60] sm:$0xf]
        %v2444 = vld [vmem:[%s545 + $0x64] sm:$0xf]
        %v2445 = vld [vmem:[%s545 + $0x68] sm:$0xf]
        %v2446 = vld [vmem:[%s545 + $0x6c] sm:$0xf]
        %v2447 = vld [vmem:[%s545 + $0x70] sm:$0xf]
        %v2448 = vld [vmem:[%s545 + $0x74] sm:$0xf]
        %v2449 = vld [vmem:[%s545 + $0x78] sm:$0xf]
        %v2450 = vld [vmem:[%s545 + $0x7c] sm:$0xf]
        %v2451 = vld [vmem:[%s545 + $0x80] sm:$0xf]
        %v2452 = vld [vmem:[%s545 + $0x84] sm:$0xf]
        %v2453 = vld [vmem:[%s545 + $0x88] sm:$0xf]
        %v2454 = vld [vmem:[%s545 + $0x8c] sm:$0xf]
        %v2455 = vld [vmem:[%s545 + $0x90] sm:$0xf]
        %v2456 = vld [vmem:[%s545 + $0x94] sm:$0xf]
        %v2457 = vld [vmem:[%s545 + $0x98] sm:$0xf]
        %v2458 = vld [vmem:[%s545 + $0x9c] sm:$0xf]
        %v2459 = vld [vmem:[%s545 + $0xa0] sm:$0xf]
        %v2460 = vld [vmem:[%s545 + $0xa4] sm:$0xf]
        %v2461 = vld [vmem:[%s545 + $0xa8] sm:$0xf]
        %v2462 = vld [vmem:[%s545 + $0xac] sm:$0xf]
        %v2463 = vld [vmem:[%s545 + $0xb0] sm:$0xf]
        %v2464 = vld [vmem:[%s545 + $0xb4] sm:$0xf]
        %v2465 = vld [vmem:[%s545 + $0xb8] sm:$0xf]
        %v2466 = vld [vmem:[%s545 + $0xbc] sm:$0xf]
        %v2467 = vld [vmem:[%s545 + $0xc0] sm:$0xf]
        %v2468 = vld [vmem:[%s545 + $0xc4] sm:$0xf]
        %v2469 = vld [vmem:[%s545 + $0xc8] sm:$0xf]
        %v2470 = vld [vmem:[%s545 + $0xcc] sm:$0xf]
        %v2471 = vld [vmem:[%s545 + $0xd0] sm:$0xf]
        %v2472 = vld [vmem:[%s545 + $0xd4] sm:$0xf]
        %v2473 = vld [vmem:[%s545 + $0xd8] sm:$0xf]
        %v2474 = vld [vmem:[%s545 + $0xdc] sm:$0xf]
        %v2475 = vld [vmem:[%s545 + $0xe0] sm:$0xf]
        %v2476 = vld [vmem:[%s545 + $0xe4] sm:$0xf]
        %v2477 = vld [vmem:[%s545 + $0xe8] sm:$0xf]
        %v2478 = vld [vmem:[%s545 + $0xec] sm:$0xf]
        %v2479 = vld [vmem:[%s545 + $0xf0] sm:$0xf]
        %v2480 = vld [vmem:[%s545 + $0xf4] sm:$0xf]
        %v2481 = vld [vmem:[%s545 + $0xf8] sm:$0xf]
        %v2482 = vld [vmem:[%s545 + $0xfc] sm:$0xf]
        %v2483 = vld [vmem:[%s432 + $0x5] sm:$0x1]
        %v2485 = vperm.slane %v2483, 0
        %v2551 = vunpack.c.l.b16 %v2419
        %v2552 = vunpack.c.l.b16 %v2420
        %v2553 = vunpack.c.l.b16 %v2421
        %v2554 = vunpack.c.l.b16 %v2422
        %v2555 = vunpack.c.l.b16 %v2423
        %v2556 = vunpack.c.l.b16 %v2424
        %v2557 = vunpack.c.l.b16 %v2425
        %v2558 = vunpack.c.l.b16 %v2426
        %v2559 = vunpack.c.l.b16 %v2427
        %v2560 = vunpack.c.l.b16 %v2428
        %v2561 = vunpack.c.l.b16 %v2429
        %v2562 = vunpack.c.l.b16 %v2430
        %v2563 = vunpack.c.l.b16 %v2431
        %v2564 = vunpack.c.l.b16 %v2432
        %v2565 = vunpack.c.l.b16 %v2433
        %v2566 = vunpack.c.l.b16 %v2434
        %v2567 = vunpack.c.l.b16 %v2435
        %v2568 = vunpack.c.l.b16 %v2436
        %v2569 = vunpack.c.l.b16 %v2437
        %v2570 = vunpack.c.l.b16 %v2438
        %v2571 = vunpack.c.l.b16 %v2439
        %v2572 = vunpack.c.l.b16 %v2440
        %v2573 = vunpack.c.l.b16 %v2441
        %v2574 = vunpack.c.l.b16 %v2442
        %v2575 = vunpack.c.l.b16 %v2443
        %v2576 = vunpack.c.l.b16 %v2444
        %v2577 = vunpack.c.l.b16 %v2445
        %v2578 = vunpack.c.l.b16 %v2446
        %v2579 = vunpack.c.l.b16 %v2447
        %v2580 = vunpack.c.l.b16 %v2448
        %v2581 = vunpack.c.l.b16 %v2449
        %v2582 = vunpack.c.l.b16 %v2450
        %v2583 = vunpack.c.l.b16 %v2451
        %v2584 = vunpack.c.l.b16 %v2452
        %v2585 = vunpack.c.l.b16 %v2453
        %v2586 = vunpack.c.l.b16 %v2454
        %v2587 = vunpack.c.l.b16 %v2455
        %v2588 = vunpack.c.l.b16 %v2456
        %v2589 = vunpack.c.l.b16 %v2457
        %v2590 = vunpack.c.l.b16 %v2458
        %v2591 = vunpack.c.l.b16 %v2459
        %v2592 = vunpack.c.l.b16 %v2460
        %v2593 = vunpack.c.l.b16 %v2461
        %v2594 = vunpack.c.l.b16 %v2462
        %v2595 = vunpack.c.l.b16 %v2463
        %v2596 = vunpack.c.l.b16 %v2464
        %v2597 = vunpack.c.l.b16 %v2465
        %v2598 = vunpack.c.l.b16 %v2466
        %v2599 = vunpack.c.l.b16 %v2467
        %v2600 = vunpack.c.l.b16 %v2468
        %v2601 = vunpack.c.l.b16 %v2469
        %v2602 = vunpack.c.l.b16 %v2470
        %v2603 = vunpack.c.l.b16 %v2471
        %v2604 = vunpack.c.l.b16 %v2472
        %v2605 = vunpack.c.l.b16 %v2473
        %v2606 = vunpack.c.l.b16 %v2474
        %v2607 = vunpack.c.l.b16 %v2475
        %v2608 = vunpack.c.l.b16 %v2476
        %v2609 = vunpack.c.l.b16 %v2477
        %v2610 = vunpack.c.l.b16 %v2478
        %v2611 = vunpack.c.l.b16 %v2479
        %v2612 = vunpack.c.l.b16 %v2480
        %v2613 = vunpack.c.l.b16 %v2481
        %v2614 = vunpack.c.l.b16 %v2482
        %v2615 = vpack.c.b16 %v2552, %v2551
        %v2616 = vpack.c.b16 %v2554, %v2553
        %v2617 = vpack.c.b16 %v2556, %v2555
        %v2618 = vpack.c.b16 %v2558, %v2557
        %v2619 = vpack.c.b16 %v2560, %v2559
        %v2620 = vpack.c.b16 %v2562, %v2561
        %v2621 = vpack.c.b16 %v2564, %v2563
        %v2622 = vpack.c.b16 %v2566, %v2565
        %v2623 = vpack.c.b16 %v2568, %v2567
        %v2624 = vpack.c.b16 %v2570, %v2569
        %v2625 = vpack.c.b16 %v2572, %v2571
        %v2626 = vpack.c.b16 %v2574, %v2573
        %v2627 = vpack.c.b16 %v2576, %v2575
        %v2628 = vpack.c.b16 %v2578, %v2577
        %v2629 = vpack.c.b16 %v2580, %v2579
        %v2630 = vpack.c.b16 %v2582, %v2581
        %v2631 = vpack.c.b16 %v2584, %v2583
        %v2632 = vpack.c.b16 %v2586, %v2585
        %v2633 = vpack.c.b16 %v2588, %v2587
        %v2634 = vpack.c.b16 %v2590, %v2589
        %v2635 = vpack.c.b16 %v2592, %v2591
        %v2636 = vpack.c.b16 %v2594, %v2593
        %v2637 = vpack.c.b16 %v2596, %v2595
        %v2638 = vpack.c.b16 %v2598, %v2597
        %v2639 = vpack.c.b16 %v2600, %v2599
        %v2640 = vpack.c.b16 %v2602, %v2601
        %v2641 = vpack.c.b16 %v2604, %v2603
        %v2642 = vpack.c.b16 %v2606, %v2605
        %v2643 = vpack.c.b16 %v2608, %v2607
        %v2644 = vpack.c.b16 %v2610, %v2609
        %v2645 = vpack.c.b16 %v2612, %v2611
        %v2646 = vpack.c.b16 %v2614, %v2613
        %2679 = vmatpush.bf16.msra.mxu0 %v2622
        %2680 = vmatpush.bf16.msra.mxu0 %v2621
        %2681 = vmatpush.bf16.msra.mxu0 %v2620
        %2682 = vmatpush.bf16.msra.mxu0 %v2619
        %2683 = vmatpush.bf16.msra.mxu0 %v2618
        %2684 = vmatpush.bf16.msra.mxu0 %v2617
        %2685 = vmatpush.bf16.msra.mxu0 %v2616
        %2686 = vmatpush.bf16.msra.mxu0 %v2615
        %2687 = vmatmul.bf16.gmra.mxu0 %v2415
        %v2688 = vpop.f32.mrf.mxu0
        %v2689 = vadd.f32 %v2485, %v2688
        %v2690 = vpop.f32.mrf.mxu0
        %v2691 = vadd.f32 %v2485, %v2690
        %2692 = vdwg.mxu0
        %2693 = vmatpush.bf16.msra.mxu0 %v2630
        %2694 = vmatpush.bf16.msra.mxu0 %v2629
        %2695 = vmatpush.bf16.msra.mxu0 %v2628
        %2696 = vmatpush.bf16.msra.mxu0 %v2627
        %2697 = vmatpush.bf16.msra.mxu0 %v2626
        %2698 = vmatpush.bf16.msra.mxu0 %v2625
        %2699 = vmatpush.bf16.msra.mxu0 %v2624
        %2700 = vmatpush.bf16.msra.mxu0 %v2623
        %2701 = vmatmul.bf16.gmra.mxu0 %v2416
        %v2702 = vpop.f32.mrf.mxu0
        %v2703 = vadd.f32 %v2689, %v2702
        %v2704 = vpop.f32.mrf.mxu0
        %v2705 = vadd.f32 %v2691, %v2704
        %2706 = vdwg.mxu0
        %2707 = vmatpush.bf16.msra.mxu0 %v2638
        %2708 = vmatpush.bf16.msra.mxu0 %v2637
        %2709 = vmatpush.bf16.msra.mxu0 %v2636
        %2710 = vmatpush.bf16.msra.mxu0 %v2635
        %2711 = vmatpush.bf16.msra.mxu0 %v2634
        %2712 = vmatpush.bf16.msra.mxu0 %v2633
        %2713 = vmatpush.bf16.msra.mxu0 %v2632
        %2714 = vmatpush.bf16.msra.mxu0 %v2631
        %2715 = vmatmul.bf16.gmra.mxu0 %v2417
        %v2716 = vpop.f32.mrf.mxu0
        %v2717 = vadd.f32 %v2703, %v2716
        %v2718 = vpop.f32.mrf.mxu0
        %v2719 = vadd.f32 %v2705, %v2718
        %2720 = vdwg.mxu0
        %2721 = vmatpush.bf16.msra.mxu0 %v2646
        %2722 = vmatpush.bf16.msra.mxu0 %v2645
        %2723 = vmatpush.bf16.msra.mxu0 %v2644
        %2724 = vmatpush.bf16.msra.mxu0 %v2643
        %2725 = vmatpush.bf16.msra.mxu0 %v2642
        %2726 = vmatpush.bf16.msra.mxu0 %v2641
        %2727 = vmatpush.bf16.msra.mxu0 %v2640
        %2728 = vmatpush.bf16.msra.mxu0 %v2639
        %2729 = vmatmul.bf16.gmra.mxu0 %v2418
        %v2730 = vpop.f32.mrf.mxu0
        %v2731 = vadd.f32 %v2717, %v2730
        %v2732 = vpop.f32.mrf.mxu0
        %v2733 = vadd.f32 %v2719, %v2732
        %2734 = vdwg.mxu0
        %v2735 = vperm.slane %v562, 5
        %v2736 = vmul.f32 %v2731, %v2735
        %v2737 = vmul.f32 %v2733, %v2735
        %v2738 = vadd.f32 %v2082, %v2736
        %v2739 = vadd.f32 %v2083, %v2737
        %2740 = vst [vmem:[#allocation2] sm:$0xff] %v2738
        %2741 = vst [vmem:[#allocation2 + $0x8] sm:$0xff] %v2739
        %p2742 = scmp.eq.s32.totalorder %s30, 1
        // Predicated region
        $region77: #{dit_forward.3} parent=59 // pred_check
          %p2743 = pneg %p2742
        $region78: #{dit_forward.3} parent=59 // pred_check_branch
          %2745 = sbr.rel (%p2743) target = $region80
        $region79: #{dit_forward.3} parent=59 // pred_region
          %v2746 = vld [vmem:[#allocation2] sm:$0xff]
          %v2747 = vld [vmem:[#allocation2 + $0x8] sm:$0xff]
          %v2748 = vld [vmem:[#allocation5] sm:$0x1]
          %v2749 = vld [vmem:[#allocation5 + $0x1] sm:$0x1]
          %2750 = vadd.xlane.f32.xlu0 %v2746
          %v2751 = vpop.xlane.xlu0 %2750
          %2752 = vadd.xlane.f32.xlu0 %v2747
          %v2753 = vpop.xlane.xlu0 %2752
          %v2754 = vmul.f32 %v2751, %v575
          %v2755 = vmul.f32 %v2753, %v575
          %v2756 = vmul.f32 %v2746, %v2746
          %v2757 = vmul.f32 %v2747, %v2747
          %2758 = vadd.xlane.f32.xlu0 %v2756
          %v2759 = vpop.xlane.xlu0 %2758
          %2760 = vadd.xlane.f32.xlu0 %v2757
          %v2761 = vpop.xlane.xlu0 %2760
          %v2762 = vmul.f32 %v2759, %v575
          %v2763 = vmul.f32 %v2761, %v575
          %v2764 = vmul.f32 %v2754, %v2754
          %v2765 = vmul.f32 %v2755, %v2755
          %v2766 = vsub.f32 %v2762, %v2764
          %v2767 = vsub.f32 %v2763, %v2765
          %v2768 = vmax.f32 %v2766, 0.0
          %v2769 = vmax.f32 %v2767, 0.0
          %v2770 = vsub.f32 %v2746, %v2754
          %v2771 = vsub.f32 %v2747, %v2755
          %v2772 = vadd.f32 %v2768, 1e-05
          %v2773 = vadd.f32 %v2769, 1e-05
          %v2774 = vrsqrt.pop %v2772
          %v2775 = vmul.f32 %v2774, %v2772
          %v2776 = vmul.f32 %v2775, %v2774
          %v2777 = vmul.f32 0.5, %v2776
          %v2778 = vsub.f32 1.5, %v2777
          %v2779 = vmul.f32 %v2774, %v2778
          %vm2780 = vweird.f32 %v2772
          %vm2781 = vweird.f32 %v2774
          %vm2782 = vmor %vm2780, %vm2781
          %v2783 = vsel %vm2782, %v2774, %v2779
          %v2784 = vrsqrt.pop %v2773
          %v2785 = vmul.f32 %v2784, %v2773
          %v2786 = vmul.f32 %v2785, %v2784
          %v2787 = vmul.f32 0.5, %v2786
          %v2788 = vsub.f32 1.5, %v2787
          %v2789 = vmul.f32 %v2784, %v2788
          %vm2790 = vweird.f32 %v2773
          %vm2791 = vweird.f32 %v2784
          %vm2792 = vmor %vm2790, %vm2791
          %v2793 = vsel %vm2792, %v2784, %v2789
          %v2794 = vmul.f32 %v2770, %v2783
          %v2795 = vmul.f32 %v2771, %v2793
          %v2796 = vperm.slane %v2748, 0
          %v2797 = vmul.f32 %v2794, %v2796
          %v2798 = vmul.f32 %v2795, %v2796
          %v2799 = vperm.slane %v2749, 0
          %v2800 = vadd.f32 %v2797, %v2799
          %v2801 = vadd.f32 %v2798, %v2799
          %v2802 = vpack.c.bf16 %v2801, %v2800
          %v2803 = vld [vmem:[%s8] sm:$0xf]
          %v2804 = vld [vmem:[%s8 + $0x4] sm:$0xf]
          %v2805 = vld [vmem:[%s8 + $0x8] sm:$0xf]
          %v2806 = vld [vmem:[%s8 + $0xc] sm:$0xf]
          %v2807 = vld [vmem:[%s8 + $0x10] sm:$0xf]
          %v2808 = vld [vmem:[%s8 + $0x14] sm:$0xf]
          %v2809 = vld [vmem:[%s8 + $0x18] sm:$0xf]
          %v2810 = vld [vmem:[%s8 + $0x1c] sm:$0xf]
          %v2811 = vld [vmem:[%s8 + $0x20] sm:$0xf]
          %v2812 = vld [vmem:[%s8 + $0x24] sm:$0xf]
          %v2813 = vld [vmem:[%s8 + $0x28] sm:$0xf]
          %v2814 = vld [vmem:[%s8 + $0x2c] sm:$0xf]
          %v2815 = vld [vmem:[%s8 + $0x30] sm:$0xf]
          %v2816 = vld [vmem:[%s8 + $0x34] sm:$0xf]
          %v2817 = vld [vmem:[%s8 + $0x38] sm:$0xf]
          %v2818 = vld [vmem:[%s8 + $0x3c] sm:$0xf]
          %v2819 = vld [vmem:[#allocation7] sm:$0x1]
          %v2821 = vperm.slane %v2819, 0
          %v2839 = vunpack.c.l.b16 %v2803
          %v2840 = vunpack.c.l.b16 %v2804
          %v2841 = vunpack.c.l.b16 %v2805
          %v2842 = vunpack.c.l.b16 %v2806
          %v2843 = vunpack.c.l.b16 %v2807
          %v2844 = vunpack.c.l.b16 %v2808
          %v2845 = vunpack.c.l.b16 %v2809
          %v2846 = vunpack.c.l.b16 %v2810
          %v2847 = vunpack.c.l.b16 %v2811
          %v2848 = vunpack.c.l.b16 %v2812
          %v2849 = vunpack.c.l.b16 %v2813
          %v2850 = vunpack.c.l.b16 %v2814
          %v2851 = vunpack.c.l.b16 %v2815
          %v2852 = vunpack.c.l.b16 %v2816
          %v2853 = vunpack.c.l.b16 %v2817
          %v2854 = vunpack.c.l.b16 %v2818
          %v2855 = vpack.c.b16 %v2840, %v2839
          %v2856 = vpack.c.b16 %v2842, %v2841
          %v2857 = vpack.c.b16 %v2844, %v2843
          %v2858 = vpack.c.b16 %v2846, %v2845
          %v2859 = vpack.c.b16 %v2848, %v2847
          %v2860 = vpack.c.b16 %v2850, %v2849
          %v2861 = vpack.c.b16 %v2852, %v2851
          %v2862 = vpack.c.b16 %v2854, %v2853
          %2871 = vmatpush.bf16.msra.mxu0 %v2862
          %2872 = vmatpush.bf16.msra.mxu0 %v2861
          %2873 = vmatpush.bf16.msra.mxu0 %v2860
          %2874 = vmatpush.bf16.msra.mxu0 %v2859
          %2875 = vmatpush.bf16.msra.mxu0 %v2858
          %2876 = vmatpush.bf16.msra.mxu0 %v2857
          %2877 = vmatpush.bf16.msra.mxu0 %v2856
          %2878 = vmatpush.bf16.msra.mxu0 %v2855
          %2879 = vmatmul.bf16.gmra.mxu0 %v2802
          %v2880 = vpop.f32.mrf.mxu0
          %v2881 = vadd.f32 %v2821, %v2880
          %v2882 = vpop.f32.mrf.mxu0
          %v2883 = vadd.f32 %v2821, %v2882
          %2884 = vdwg.mxu0
          %2885 = vst [vmem:[%s550] sm:$0xff] %v2881
          %2886 = vst [vmem:[%s550 + $0x8] sm:$0xff] %v2883
        $region80: #{dit_forward.3} parent=59 // pred_fallthru
          _
        %p2887 = scmp.lt.s32.totalorder %s29, 1
        %s2888 = scalar_select %p2887, %s29, 1
        %s2889 = smul.addr %s2888, 2
        %s2890 = smul.addr %s2889, 8
        %s2891 = scalar_lea.vmem %s10, %s2890
        // Predicated region
        $region81: #{dit_forward.3} parent=59 // pred_check
          %p2892 = pneg %p302
        $region82: #{dit_forward.3} parent=59 // pred_check_branch
          %2894 = sbr.rel (%p2892) target = $region84
        $region83: #{dit_forward.3} parent=59 // pred_region
          _
        $region84: #{dit_forward.3} parent=59 // pred_fallthru
          _
      $region60: #{dit_forward.3} parent=5 // pred_fallthru
        _
      %p2895 = scmp.le.s32.totalorder 2, %s20
      // Predicated region
      $region85: #{dit_forward.3} parent=5 // pred_check
        %p2896 = pneg %p2895
      $region86: #{dit_forward.3} parent=5 // pred_check_branch
        %2898 = sbr.rel (%p2896) target = $region88
      $region87: #{dit_forward.3} parent=5 // pred_region
        %s2899 = ssub.s32 %s20, 2
        // Predicated region
        $region89: #{dit_forward.3} parent=87 // pred_check
          %p2900 = pneg %p308
        $region90: #{dit_forward.3} parent=87 // pred_check_branch
          %2902 = sbr.rel (%p2900) target = $region92
        $region91: #{dit_forward.3} parent=87 // pred_region
          %p2903 = scmp.lt.s32.totalorder %s31, 1
          %s2904 = scalar_select %p2903, %s31, 1
          %s2905 = smul.addr %s2904, 2
          %s2906 = smul.addr %s2905, 8
          %s2907 = scalar_lea.vmem %s10, %s2906
        $region92: #{dit_forward.3} parent=87 // pred_fallthru
          _
      $region88: #{dit_forward.3} parent=5 // pred_fallthru
        _
    $region6: #{dit_forward.3} parent=1 // loop_footer
      %s24 = sadd.s32 1, %s20
    $region7: #{dit_forward.3} parent=1 // loop_footer_branch
      %19 = sbr.rel target = $region3
    $region8: #{dit_forward.3} parent=1 // loop_exit
      _
    %2908 = vsyncpa [#allocation4], 1
    %s2909 = scalar_lea.sflag [#allocation4], 1
    %2910 = vsyncpa %s2909, 1
    %2911 = vsyncpa [#allocation6], 1

</llo_original>
